<compile_context>
chip_gen: v7x
topology: tpu7x:2x2x1
jax: 0.10.0
libtpu: 0.0.40
codegen_flags: <defaults>
</compile_context>

<pallas_src>
import math

import jax
import jax.numpy as jnp
from jax.experimental import pallas as pl
from jax.experimental.pallas import tpu as pltpu

# ---------------- configuration (small, consistent with the module) ----------
B = 2               # batch
N_VOCAB = 64        # n_vocab
ENCODER_DIM = 64    # encoder_dim
DIM = 32            # dim
DEPTH = 2           # depth (encoder mixer blocks AND decoder llama layers)
LENGTH = 8          # tokenized length
COMPRESSION = 4
N_HEADS = 4
HEAD_DIM = DIM // N_HEADS          # 8
MLP_DIM = 4 * DIM                  # decoder MLP intermediate
ENC_FF_DIM = 4 * ENCODER_DIM       # mixer FeedForward intermediate
T_DEC = LENGTH + 1                 # 'token' combination: 1 memory token + LENGTH tokens
BL = B * LENGTH                    # flattened encoder tokens
BT = B * T_DEC                     # flattened decoder tokens
OUT_ROWS = BT + 1                  # last row of the output slab carries the scalar loss


# ---------------- small in-kernel math helpers --------------------------------
def _layernorm(x, w, b, eps=1e-5):
    mu = jnp.mean(x, axis=-1, keepdims=True)
    var = jnp.mean((x - mu) ** 2, axis=-1, keepdims=True)
    return (x - mu) * jax.lax.rsqrt(var + eps) * w + b


def _rmsnorm(x, w, eps=1e-6):
    ms = jnp.mean(x * x, axis=-1, keepdims=True)
    return x * jax.lax.rsqrt(ms + eps) * w


def _gelu_tanh(x):
    # TODO(synk): PyTorch nn.GELU default is the exact erf form; tanh approximation used here.
    return 0.5 * x * (1.0 + jnp.tanh(0.7978845608028654 * (x + 0.044715 * x * x * x)))


# ---------------- the single fused forward kernel ------------------------------
def fused_forward_kernel(
        # activations / targets / precomputed constants
        x_enc_ref, dec_slab_ref, onehot_ref, rope_ref, bias_ref, hmask_ref,
        sel_last_ref, scatter_ref,
        # encoder MixerBlock stacks (DEPTH, ...)
        conv_w_ref, conv_b_ref, enc_vec_ref, ff_w1_ref, ff_b1_ref, ff_w2_ref,
        # compression autoencoder (padded to (E,E)) + decoder_proj
        ae_w_ref, ae_b_ref, proj_w_ref, proj_b_ref,
        # decoder Llama layer stacks
        dec_ln_ref, attn_w_ref, gu_w_ref, wd_ref,
        # lm head
        lm_head_ref,
        # single output slab: rows [0:BT] logits, row BT = loss
        out_ref):
    f32 = jnp.float32
    bf16 = jnp.bfloat16

    # ======================= encoder: MixerBlocks =============================
    # whole batch processed as one (B*L, E) tile; token mixing uses the
    # precomputed block-diagonal conv matrix kron(I_B, conv_w).
    x = x_enc_ref[...]                                            # (BL, E) f32
    for d in range(DEPTH):                                        # DEPTH == 2, static unroll
        ev = enc_vec_ref[d]                                       # (5, E): seq_w, seq_b, patch_w, patch_b, ff_b2
        res = x
        h = _layernorm(x, ev[0:1], ev[1:2])
        x = (jnp.dot(conv_w_ref[d], h.astype(bf16), preferred_element_type=f32)
             + conv_b_ref[d] + res)                               # token mixing
        res = x
        h = _layernorm(x, ev[2:3], ev[3:4])
        h = jnp.dot(h.astype(bf16), ff_w1_ref[d], preferred_element_type=f32) + ff_b1_ref[d]
        h = _gelu_tanh(h)
        x = (jnp.dot(h.astype(bf16), ff_w2_ref[d], preferred_element_type=f32)
             + ev[4:5] + res)                                     # channel mixing

    # memory token = last-token encoder embedding per batch element
    # (select matmul instead of in-kernel concat/slices)
    enc = jnp.dot(sel_last_ref[...], x, preferred_element_type=f32)          # (B, E)

    # compression autoencoder (zero-padded to a common (E,E) shape) + decoder_proj
    enc = jnp.dot(enc.astype(bf16), ae_w_ref[0], preferred_element_type=f32) + ae_b_ref[0]
    enc = jnp.dot(enc.astype(bf16), ae_w_ref[1], preferred_element_type=f32) + ae_b_ref[1]
    enc = jnp.dot(enc.astype(bf16), proj_w_ref[...], preferred_element_type=f32) + proj_b_ref[...]  # (B, DIM)

    # ======================= decoder: Llama layers ============================
    cos = rope_ref[0]                                             # (BT, DIM)
    sin = rope_ref[1]                                             # (BT, DIM)
    bias = bias_ref[...]                                          # (BT, BT) block-diag causal
    hmask = hmask_ref[...]                                        # (H, 1, DIM) per-head lane mask

    # decoder input slab: memory tokens placed via scatter matmul (no concat)
    xd = dec_slab_ref[...] + jnp.dot(scatter_ref[...], enc, preferred_element_type=f32)  # (BT, DIM)

    for d in range(DEPTH):
        aw = attn_w_ref[d]                                        # (6, DIM, DIM): wq*s, wqr*s, wk, wkr, wv, wo
        dl = dec_ln_ref[d]                                        # (2, DIM): ln1_w, ln2_w

        # ---- self attention (whole batch at once, heads via lane masks) ----
        res = xd
        hn = _rmsnorm(xd, dl[0:1]).astype(bf16)                   # (BT, DIM)
        q = jnp.dot(hn, aw[0], preferred_element_type=f32)        # scale folded into wq/wqr
        qr = jnp.dot(hn, aw[1], preferred_element_type=f32)
        k = jnp.dot(hn, aw[2], preferred_element_type=f32)
        kr = jnp.dot(hn, aw[3], preferred_element_type=f32)
        v = jnp.dot(hn, aw[4], preferred_element_type=f32)
        q = q * cos + qr * sin                                    # RoPE (rotate-half in wqr/wkr)
        k = k * cos + kr * sin

        qh = (q[None] * hmask).astype(bf16)                       # (H, BT, DIM), head-h lanes only
        kb = jnp.broadcast_to(k.astype(bf16)[None], (N_HEADS, BT, DIM))
        s = jnp.einsum('hqd,hkd->hqk', qh, kb,
                       preferred_element_type=f32) + bias         # (H, BT, BT) f32
        m = jnp.max(s, axis=-1, keepdims=True)
        p = jnp.exp(s - m)
        p = p * pl.reciprocal(jnp.sum(p, axis=-1, keepdims=True), approx=True)
        vh = (v[None] * hmask).astype(bf16)                       # (H, BT, DIM)
        o = jnp.einsum('hqk,hkd->hqd', p.astype(bf16), vh,
                       preferred_element_type=f32)                # per-head output in own lanes
        attn = jnp.dot(jnp.sum(o, axis=0).astype(bf16), aw[5],
                       preferred_element_type=f32)                # merged heads -> one (BT,32)@(32,32)
        xd = res + attn

        # ---- SwiGLU MLP (gate|up fused into one matmul) ----
        res = xd
        hn = _rmsnorm(xd, dl[1:2]).astype(bf16)
        gu = jnp.dot(hn, gu_w_ref[d], preferred_element_type=f32) # (BT, 2*MLP_DIM)
        g = gu[:, :MLP_DIM]
        u = gu[:, MLP_DIM:]
        xd = res + jnp.dot((g * jax.nn.sigmoid(g) * u).astype(bf16), wd_ref[d],
                           preferred_element_type=f32)

    # ================== lm head + cross entropy (fused, whole batch) ==========
    logits = jnp.dot(xd.astype(bf16), lm_head_ref[...], preferred_element_type=f32)   # (BT, V)
    out_ref[0:BT, :] = logits.astype(out_ref.dtype)

    # onehot already encodes the PyTorch shift (logits[...,1:-1] vs labels[...,1:])
    # with zero rows for ignored positions.
    mrow = jnp.max(logits, axis=-1, keepdims=True)
    lse = jnp.log(jnp.sum(jnp.exp(logits - mrow), axis=-1, keepdims=True)) + mrow
    oh = onehot_ref[...]
    label_logit = jnp.sum(logits * oh, axis=-1, keepdims=True)
    mask = jnp.sum(oh, axis=-1, keepdims=True)
    loss_rows = mask * lse - label_logit                          # 0 on ignored rows
    loss11 = jnp.sum(loss_rows, axis=0, keepdims=True) * (1.0 / float(B * (LENGTH - 1)))
    out_ref[BT:OUT_ROWS, :] = jnp.broadcast_to(loss11, (1, N_VOCAB))   # loss in spare row


# ---------------- parameters (deterministic, synthetic, stacked over DEPTH) ----
def init_params(key):
    keys = iter(jax.random.split(key, 64))

    def nrm(shape, scale=0.02):
        return (scale * jax.random.normal(next(keys), shape)).astype(jnp.float32)

    E, D_, C = ENCODER_DIM, DIM, COMPRESSION
    return {
        "wte": nrm((N_VOCAB, E)),
        "decoder_wte": nrm((N_VOCAB, D_)),
        # encoder MixerBlocks (stacked)
        "conv_w": nrm((DEPTH, LENGTH, LENGTH), 0.1),
        "conv_b": jnp.zeros((DEPTH, LENGTH, 1), jnp.float32),
        "seq_ln_w": jnp.ones((DEPTH, 1, E), jnp.float32),
        "seq_ln_b": jnp.zeros((DEPTH, 1, E), jnp.float32),
        "patch_ln_w": jnp.ones((DEPTH, 1, E), jnp.float32),
        "patch_ln_b": jnp.zeros((DEPTH, 1, E), jnp.float32),
        "ff_w1": nrm((DEPTH, E, ENC_FF_DIM)),
        "ff_b1": jnp.zeros((DEPTH, 1, ENC_FF_DIM), jnp.float32),
        "ff_w2": nrm((DEPTH, ENC_FF_DIM, E)),
        "ff_b2": jnp.zeros((DEPTH, 1, E), jnp.float32),
        # compression autoencoder + decoder_proj (encoder_dim != dim)
        "down_w": nrm((E, E // C)),
        "down_b": jnp.zeros((1, E // C), jnp.float32),
        "up_w": nrm((E // C, E)),
        "up_b": jnp.zeros((1, E), jnp.float32),
        "proj_w": nrm((E, D_)),
        "proj_b": jnp.zeros((1, D_), jnp.float32),
        # decoder Llama layers (stacked, full matrices)
        "ln1_w": jnp.ones((DEPTH, 1, D_), jnp.float32),
        "wq": nrm((DEPTH, D_, D_)),
        "wk": nrm((DEPTH, D_, D_)),
        "wv": nrm((DEPTH, D_, D_)),
        "wo": nrm((DEPTH, D_, D_)),
        "ln2_w": jnp.ones((DEPTH, 1, D_), jnp.float32),
        "wg": nrm((DEPTH, D_, MLP_DIM)),
        "wu": nrm((DEPTH, D_, MLP_DIM)),
        "wd": nrm((DEPTH, MLP_DIM, D_)),
        # lm_head (bias=False)
        "lm_head_w": nrm((D_, N_VOCAB)),
    }


def rope_tables(T, hd):
    inv_freq = 1.0 / (10000.0 ** (jnp.arange(0, hd, 2, dtype=jnp.float32) / hd))
    t = jnp.arange(T, dtype=jnp.float32)
    freqs = jnp.outer(t, inv_freq)                       # (T, hd/2)
    emb = jnp.concatenate([freqs, freqs], axis=-1)       # (T, hd)
    return jnp.cos(emb), jnp.sin(emb)


# ---------------- full forward (layout prep in JAX, everything hot in Pallas) --
def memory_transformer_forward(params, input_ids, labels):
    f32 = jnp.float32
    bf16 = jnp.bfloat16
    E = ENCODER_DIM

    # ---- embedding lookups (tiny gathers -> plain JAX glue) ----
    x_enc = params["wte"][input_ids].reshape(BL, E).astype(f32)             # (B*L, E)
    dec_emb = params["decoder_wte"][input_ids].astype(f32)                  # (B, L, DIM)
    # decoder token slab with zeroed memory-token rows (filled in-kernel via scatter matmul)
    dec_slab = jnp.concatenate([jnp.zeros((B, 1, DIM), f32), dec_emb],
                               axis=1).reshape(BT, DIM)

    # ---- CE targets as masked one-hot aligned with the (BT, V) logits slab ----
    # PyTorch shift: loss over decoder times 1..L-1 with label labels[:, t].
    t_idx = jnp.arange(T_DEC)
    valid = ((t_idx >= 1) & (t_idx <= LENGTH - 1)).astype(f32)              # (T_DEC,)
    lab_ext = jnp.concatenate([labels.astype(jnp.int32),
                               jnp.zeros((B, 1), jnp.int32)], axis=1)       # (B, T_DEC)
    onehot = (jax.nn.one_hot(lab_ext, N_VOCAB, dtype=f32)
              * valid[None, :, None]).reshape(BT, N_VOCAB)

    # ---- RoPE tiled to the (BT, DIM) slab, block-diag causal bias, head masks ----
    cos, sin = rope_tables(T_DEC, HEAD_DIM)                                 # (T_DEC, Hd)
    rope_cs = jnp.stack([jnp.tile(cos, (B, N_HEADS)),
                         jnp.tile(sin, (B, N_HEADS))], axis=0).astype(f32)  # (2, BT, DIM)

    t_ids = jnp.tile(jnp.arange(T_DEC), B)
    b_ids = jnp.repeat(jnp.arange(B), T_DEC)
    ok = (b_ids[:, None] == b_ids[None, :]) & (t_ids[None, :] <= t_ids[:, None])
    bias2d = jnp.where(ok, 0.0, -1e30).astype(f32)                          # (BT, BT)

    hmask = (jnp.arange(DIM)[None, :] // HEAD_DIM
             == jnp.arange(N_HEADS)[:, None]).astype(f32)[:, None, :]       # (H, 1, DIM)

    # ---- selection / scatter matrices (replace in-kernel concats) ----
    sel_last = jax.nn.one_hot(jnp.arange(B) * LENGTH + LENGTH - 1, BL, dtype=f32)   # (B, BL)
    scatter = jax.nn.one_hot(jnp.arange(B) * T_DEC, BT, dtype=f32).T                # (BT, B)

    # ---- encoder weights: block-diag conv, packed vector slab, bf16 matmul weights ----
    eye_b = jnp.eye(B, dtype=f32)
    conv_bd = (eye_b[None, :, None, :, None]
               * params["conv_w"][:, None, :, None, :]).reshape(DEPTH, BL, BL).astype(bf16)
    conv_b = jnp.tile(params["conv_b"], (1, B, 1)).astype(f32)              # (DEPTH, B*L, 1)
    enc_vec = jnp.concatenate([params["seq_ln_w"], params["seq_ln_b"],
                               params["patch_ln_w"], params["patch_ln_b"],
                               params["ff_b2"]], axis=1).astype(f32)        # (DEPTH, 5, E)
    ff_w1 = params["ff_w1"].astype(bf16)
    ff_b1 = params["ff_b1"].astype(f32)
    ff_w2 = params["ff_w2"].astype(bf16)

    # ---- autoencoder zero-padded to (E,E) so both stages share one stacked slab (exact) ----
    comp = E // COMPRESSION
    down_w_p = jnp.zeros((E, E), f32).at[:, :comp].set(params["down_w"])
    up_w_p = jnp.zeros((E, E), f32).at[:comp, :].set(params["up_w"])
    ae_w = jnp.stack([down_w_p, up_w_p], axis=0).astype(bf16)               # (2, E, E)
    down_b_p = jnp.zeros((1, E), f32).at[:, :comp].set(params["down_b"])
    ae_b = jnp.stack([down_b_p, params["up_b"].astype(f32)], axis=0)        # (2, 1, E)
    proj_w = params["proj_w"].astype(bf16)
    proj_b = params["proj_b"].astype(f32)

    # ---- decoder weights: softmax scale folded into wq, rotate-half folded into wqr/wkr ----
    scale = 1.0 / math.sqrt(HEAD_DIM)
    half = HEAD_DIM // 2

    def fold_rot(w):  # output columns are head-blocked; apply rotate_half on them
        w3 = w.reshape(w.shape[:-1] + (N_HEADS, HEAD_DIM))
        return jnp.concatenate([-w3[..., half:], w3[..., :half]], axis=-1).reshape(w.shape)

    wq_s = params["wq"] * scale
    attn_w = jnp.stack([wq_s, fold_rot(wq_s),
                        params["wk"], fold_rot(params["wk"]),
                        params["wv"], params["wo"]], axis=1).astype(bf16)   # (DEPTH, 6, D, D)
    dec_ln = jnp.concatenate([params["ln1_w"], params["ln2_w"]], axis=1).astype(f32)  # (DEPTH, 2, D)
    gu_w = jnp.concatenate([params["wg"], params["wu"]], axis=-1).astype(bf16)        # (DEPTH, D, 2*MLP)
    wd = params["wd"].astype(bf16)
    lm_head = params["lm_head_w"].astype(bf16)

    args = (x_enc, dec_slab, onehot, rope_cs, bias2d, hmask, sel_last, scatter,
            conv_bd, conv_b, enc_vec, ff_w1, ff_b1, ff_w2,
            ae_w, ae_b, proj_w, proj_b,
            dec_ln, attn_w, gu_w, wd, lm_head)

    def full_spec(a):
        nd = a.ndim
        return pl.BlockSpec(a.shape, lambda i, _nd=nd: (0,) * _nd)

    out = pl.pallas_call(
        fused_forward_kernel,
        out_shape=jax.ShapeDtypeStruct((OUT_ROWS, N_VOCAB), jnp.float32),
        grid=(1,),
        in_specs=[full_spec(a) for a in args],
        out_specs=pl.BlockSpec((OUT_ROWS, N_VOCAB), lambda i: (0, 0)),
        compiler_params=pltpu.CompilerParams(dimension_semantics=("arbitrary",)),
    )(*args)

    loss = out[BT, 0]
    logits = out[:BT, :].reshape(B, T_DEC, N_VOCAB)
    # PyTorch returns rearrange(logits, 'b t e -> b e t'); transpose deferred to JAX so
    # the kernel stores a single lane-dense 2-D slab.
    output = jnp.transpose(logits, (0, 2, 1))                                # (B, V, L+1)
    return loss, output


if __name__ == "__main__":
    key = jax.random.PRNGKey(0)
    pkey, dkey = jax.random.split(key)
    params = init_params(pkey)

    input_ids = jax.random.randint(dkey, (B, LENGTH), 0, N_VOCAB, dtype=jnp.int32)
    labels = input_ids                                   # standard LM labels

    fwd = jax.jit(memory_transformer_forward)
    loss, output = fwd(params, input_ids, labels)
    jax.block_until_ready((loss, output))

    assert output.shape == (B, N_VOCAB, LENGTH + 1), output.shape
    assert bool(jnp.isfinite(loss)), loss
    print("KERNEL_OK")
</pallas_src>

<mosaic_0001>
module attributes {stable_mosaic.version = 11 : i64} {
  func.func @fused_forward_kernel(%arg0: i32, %arg1: memref<16x64xf32, #tpu.memory_space<vmem>>, %arg2: memref<18x32xf32, #tpu.memory_space<vmem>>, %arg3: memref<18x64xf32, #tpu.memory_space<vmem>>, %arg4: memref<2x18x32xf32, #tpu.memory_space<vmem>>, %arg5: memref<18x18xf32, #tpu.memory_space<vmem>>, %arg6: memref<4x1x32xf32, #tpu.memory_space<vmem>>, %arg7: memref<2x16xf32, #tpu.memory_space<vmem>>, %arg8: memref<18x2xf32, #tpu.memory_space<vmem>>, %arg9: memref<2x16x16xbf16, #tpu.memory_space<vmem>>, %arg10: memref<2x16x1xf32, #tpu.memory_space<vmem>>, %arg11: memref<2x5x64xf32, #tpu.memory_space<vmem>>, %arg12: memref<2x64x256xbf16, #tpu.memory_space<vmem>>, %arg13: memref<2x1x256xf32, #tpu.memory_space<vmem>>, %arg14: memref<2x256x64xbf16, #tpu.memory_space<vmem>>, %arg15: memref<2x64x64xbf16, #tpu.memory_space<vmem>>, %arg16: memref<2x1x64xf32, #tpu.memory_space<vmem>>, %arg17: memref<64x32xbf16, #tpu.memory_space<vmem>>, %arg18: memref<1x32xf32, #tpu.memory_space<vmem>>, %arg19: memref<2x2x32xf32, #tpu.memory_space<vmem>>, %arg20: memref<2x6x32x32xbf16, #tpu.memory_space<vmem>>, %arg21: memref<2x32x256xbf16, #tpu.memory_space<vmem>>, %arg22: memref<2x128x32xbf16, #tpu.memory_space<vmem>>, %arg23: memref<32x64xbf16, #tpu.memory_space<vmem>>, %arg24: memref<19x64xf32, #tpu.memory_space<vmem>>) attributes {dimension_semantics = [#tpu.dimension_semantics<arbitrary>], iteration_bounds = array<i64: 1>, scalar_prefetch = 0 : i64, scratch_operands = 0 : i64, tpu.core_type = #tpu.core_type<tc>, window_params = [{pipeline_mode = #tpu.pipeline_mode<synchronous>, transform_indices = @transform_0, window_bounds = array<i64: 16, 64>}, {pipeline_mode = #tpu.pipeline_mode<synchronous>, transform_indices = @transform_1, window_bounds = array<i64: 18, 32>}, {pipeline_mode = #tpu.pipeline_mode<synchronous>, transform_indices = @transform_2, window_bounds = array<i64: 18, 64>}, {pipeline_mode = #tpu.pipeline_mode<synchronous>, transform_indices = @transform_3, window_bounds = array<i64: 2, 18, 32>}, {pipeline_mode = #tpu.pipeline_mode<synchronous>, transform_indices = @transform_4, window_bounds = array<i64: 18, 18>}, {pipeline_mode = #tpu.pipeline_mode<synchronous>, transform_indices = @transform_5, window_bounds = array<i64: 4, 1, 32>}, {pipeline_mode = #tpu.pipeline_mode<synchronous>, transform_indices = @transform_6, window_bounds = array<i64: 2, 16>}, {pipeline_mode = #tpu.pipeline_mode<synchronous>, transform_indices = @transform_7, window_bounds = array<i64: 18, 2>}, {pipeline_mode = #tpu.pipeline_mode<synchronous>, transform_indices = @transform_8, window_bounds = array<i64: 2, 16, 16>}, {pipeline_mode = #tpu.pipeline_mode<synchronous>, transform_indices = @transform_9, window_bounds = array<i64: 2, 16, 1>}, {pipeline_mode = #tpu.pipeline_mode<synchronous>, transform_indices = @transform_10, window_bounds = array<i64: 2, 5, 64>}, {pipeline_mode = #tpu.pipeline_mode<synchronous>, transform_indices = @transform_11, window_bounds = array<i64: 2, 64, 256>}, {pipeline_mode = #tpu.pipeline_mode<synchronous>, transform_indices = @transform_12, window_bounds = array<i64: 2, 1, 256>}, {pipeline_mode = #tpu.pipeline_mode<synchronous>, transform_indices = @transform_13, window_bounds = array<i64: 2, 256, 64>}, {pipeline_mode = #tpu.pipeline_mode<synchronous>, transform_indices = @transform_14, window_bounds = array<i64: 2, 64, 64>}, {pipeline_mode = #tpu.pipeline_mode<synchronous>, transform_indices = @transform_15, window_bounds = array<i64: 2, 1, 64>}, {pipeline_mode = #tpu.pipeline_mode<synchronous>, transform_indices = @transform_16, window_bounds = array<i64: 64, 32>}, {pipeline_mode = #tpu.pipeline_mode<synchronous>, transform_indices = @transform_17, window_bounds = array<i64: 1, 32>}, {pipeline_mode = #tpu.pipeline_mode<synchronous>, transform_indices = @transform_18, window_bounds = array<i64: 2, 2, 32>}, {pipeline_mode = #tpu.pipeline_mode<synchronous>, transform_indices = @transform_19, window_bounds = array<i64: 2, 6, 32, 32>}, {pipeline_mode = #tpu.pipeline_mode<synchronous>, transform_indices = @transform_20, window_bounds = array<i64: 2, 32, 256>}, {pipeline_mode = #tpu.pipeline_mode<synchronous>, transform_indices = @transform_21, window_bounds = array<i64: 2, 128, 32>}, {pipeline_mode = #tpu.pipeline_mode<synchronous>, transform_indices = @transform_22, window_bounds = array<i64: 32, 64>}, {pipeline_mode = #tpu.pipeline_mode<synchronous>, transform_indices = @transform_23, window_bounds = array<i64: 19, 64>}]} {
    %c0 = arith.constant 0 : index
    %c0_0 = arith.constant 0 : index
    %0 = vector.load %arg1[%c0, %c0_0] : memref<16x64xf32, #tpu.memory_space<vmem>>, vector<16x64xf32>
    %c0_1 = arith.constant 0 : index
    %c0_2 = arith.constant 0 : index
    %c0_3 = arith.constant 0 : index
    %1 = vector.load %arg11[%c0_1, %c0_2, %c0_3] : memref<2x5x64xf32, #tpu.memory_space<vmem>>, vector<1x5x64xf32>
    %2 = vector.shape_cast %1 : vector<1x5x64xf32> to vector<5x64xf32>
    %3 = vector.extract_strided_slice %2 {offsets = [0, 0], sizes = [1, 64], strides = [1, 1]} : vector<5x64xf32> to vector<1x64xf32>
    %4 = vector.extract_strided_slice %2 {offsets = [1, 0], sizes = [1, 64], strides = [1, 1]} : vector<5x64xf32> to vector<1x64xf32>
    %cst = arith.constant dense<0.000000e+00> : vector<16xf32>
    %5 = vector.multi_reduction <add>, %0, %cst [1] : vector<16x64xf32> to vector<16xf32>
    %6 = vector.shape_cast %5 : vector<16xf32> to vector<16x1xf32>
    %cst_4 = arith.constant 6.400000e+01 : f32
    %7 = vector.broadcast %cst_4 : f32 to vector<16x1xf32>
    %8 = arith.divf %6, %7 : vector<16x1xf32>
    %9 = vector.broadcast %8 : vector<16x1xf32> to vector<16x64xf32>
    %10 = arith.subf %0, %9 : vector<16x64xf32>
    %11 = arith.mulf %10, %10 : vector<16x64xf32>
    %cst_5 = arith.constant dense<0.000000e+00> : vector<16xf32>
    %12 = vector.multi_reduction <add>, %11, %cst_5 [1] : vector<16x64xf32> to vector<16xf32>
    %13 = vector.shape_cast %12 : vector<16xf32> to vector<16x1xf32>
    %cst_6 = arith.constant 6.400000e+01 : f32
    %14 = vector.broadcast %cst_6 : f32 to vector<16x1xf32>
    %15 = arith.divf %13, %14 : vector<16x1xf32>
    %16 = vector.broadcast %8 : vector<16x1xf32> to vector<16x64xf32>
    %17 = arith.subf %0, %16 : vector<16x64xf32>
    %cst_7 = arith.constant 9.99999974E-6 : f32
    %18 = vector.broadcast %cst_7 : f32 to vector<16x1xf32>
    %19 = arith.addf %15, %18 : vector<16x1xf32>
    %20 = math.rsqrt %19 : vector<16x1xf32>
    %21 = vector.broadcast %20 : vector<16x1xf32> to vector<16x64xf32>
    %22 = arith.mulf %17, %21 : vector<16x64xf32>
    %23 = vector.broadcast %3 : vector<1x64xf32> to vector<16x64xf32>
    %24 = arith.mulf %22, %23 : vector<16x64xf32>
    %25 = vector.broadcast %4 : vector<1x64xf32> to vector<16x64xf32>
    %26 = arith.addf %24, %25 : vector<16x64xf32>
    %c0_8 = arith.constant 0 : index
    %c0_9 = arith.constant 0 : index
    %c0_10 = arith.constant 0 : index
    %27 = vector.load %arg9[%c0_8, %c0_9, %c0_10] : memref<2x16x16xbf16, #tpu.memory_space<vmem>>, vector<1x16x16xbf16>
    %28 = vector.shape_cast %27 : vector<1x16x16xbf16> to vector<16x16xbf16>
    %29 = arith.truncf %26 : vector<16x64xf32> to vector<16x64xbf16>
    %cst_11 = arith.constant dense<0.000000e+00> : vector<16x64xf32>
    %30 = tpu.matmul %28, %29, %cst_11 {dimension_numbers = #tpu.dot_dimension_numbers<[1], [0], [0], [1], [0, 0, 1, 1], [], []>} : vector<16x16xbf16>, vector<16x64xbf16>, vector<16x64xf32> -> vector<16x64xf32>
    %c0_12 = arith.constant 0 : index
    %c0_13 = arith.constant 0 : index
    %c0_14 = arith.constant 0 : index
    %31 = vector.load %arg10[%c0_12, %c0_13, %c0_14] : memref<2x16x1xf32, #tpu.memory_space<vmem>>, vector<1x16x1xf32>
    %32 = vector.shape_cast %31 : vector<1x16x1xf32> to vector<16x1xf32>
    %33 = vector.broadcast %32 : vector<16x1xf32> to vector<16x64xf32>
    %34 = arith.addf %30, %33 : vector<16x64xf32>
    %35 = arith.addf %34, %0 : vector<16x64xf32>
    %36 = vector.extract_strided_slice %2 {offsets = [2, 0], sizes = [1, 64], strides = [1, 1]} : vector<5x64xf32> to vector<1x64xf32>
    %37 = vector.extract_strided_slice %2 {offsets = [3, 0], sizes = [1, 64], strides = [1, 1]} : vector<5x64xf32> to vector<1x64xf32>
    %cst_15 = arith.constant dense<0.000000e+00> : vector<16xf32>
    %38 = vector.multi_reduction <add>, %35, %cst_15 [1] : vector<16x64xf32> to vector<16xf32>
    %39 = vector.shape_cast %38 : vector<16xf32> to vector<16x1xf32>
    %cst_16 = arith.constant 6.400000e+01 : f32
    %40 = vector.broadcast %cst_16 : f32 to vector<16x1xf32>
    %41 = arith.divf %39, %40 : vector<16x1xf32>
    %42 = vector.broadcast %41 : vector<16x1xf32> to vector<16x64xf32>
    %43 = arith.subf %35, %42 : vector<16x64xf32>
    %44 = arith.mulf %43, %43 : vector<16x64xf32>
    %cst_17 = arith.constant dense<0.000000e+00> : vector<16xf32>
    %45 = vector.multi_reduction <add>, %44, %cst_17 [1] : vector<16x64xf32> to vector<16xf32>
    %46 = vector.shape_cast %45 : vector<16xf32> to vector<16x1xf32>
    %cst_18 = arith.constant 6.400000e+01 : f32
    %47 = vector.broadcast %cst_18 : f32 to vector<16x1xf32>
    %48 = arith.divf %46, %47 : vector<16x1xf32>
    %49 = vector.broadcast %41 : vector<16x1xf32> to vector<16x64xf32>
    %50 = arith.subf %35, %49 : vector<16x64xf32>
    %cst_19 = arith.constant 9.99999974E-6 : f32
    %51 = vector.broadcast %cst_19 : f32 to vector<16x1xf32>
    %52 = arith.addf %48, %51 : vector<16x1xf32>
    %53 = math.rsqrt %52 : vector<16x1xf32>
    %54 = vector.broadcast %53 : vector<16x1xf32> to vector<16x64xf32>
    %55 = arith.mulf %50, %54 : vector<16x64xf32>
    %56 = vector.broadcast %36 : vector<1x64xf32> to vector<16x64xf32>
    %57 = arith.mulf %55, %56 : vector<16x64xf32>
    %58 = vector.broadcast %37 : vector<1x64xf32> to vector<16x64xf32>
    %59 = arith.addf %57, %58 : vector<16x64xf32>
    %60 = arith.truncf %59 : vector<16x64xf32> to vector<16x64xbf16>
    %c0_20 = arith.constant 0 : index
    %c0_21 = arith.constant 0 : index
    %c0_22 = arith.constant 0 : index
    %61 = vector.load %arg12[%c0_20, %c0_21, %c0_22] : memref<2x64x256xbf16, #tpu.memory_space<vmem>>, vector<1x64x256xbf16>
    %62 = vector.shape_cast %61 : vector<1x64x256xbf16> to vector<64x256xbf16>
    %cst_23 = arith.constant dense<0.000000e+00> : vector<16x256xf32>
    %63 = tpu.matmul %60, %62, %cst_23 {dimension_numbers = #tpu.dot_dimension_numbers<[1], [0], [0], [1], [0, 0, 1, 1], [], []>} : vector<16x64xbf16>, vector<64x256xbf16>, vector<16x256xf32> -> vector<16x256xf32>
    %c0_24 = arith.constant 0 : index
    %c0_25 = arith.constant 0 : index
    %c0_26 = arith.constant 0 : index
    %64 = vector.load %arg13[%c0_24, %c0_25, %c0_26] : memref<2x1x256xf32, #tpu.memory_space<vmem>>, vector<1x1x256xf32>
    %65 = vector.shape_cast %64 : vector<1x1x256xf32> to vector<1x256xf32>
    %66 = vector.broadcast %65 : vector<1x256xf32> to vector<16x256xf32>
    %67 = arith.addf %63, %66 : vector<16x256xf32>
    %cst_27 = arith.constant 5.000000e-01 : f32
    %68 = vector.broadcast %cst_27 : f32 to vector<16x256xf32>
    %69 = arith.mulf %68, %67 : vector<16x256xf32>
    %cst_28 = arith.constant 4.471500e-02 : f32
    %70 = vector.broadcast %cst_28 : f32 to vector<16x256xf32>
    %71 = arith.mulf %70, %67 : vector<16x256xf32>
    %72 = arith.mulf %71, %67 : vector<16x256xf32>
    %73 = arith.mulf %72, %67 : vector<16x256xf32>
    %74 = arith.addf %67, %73 : vector<16x256xf32>
    %cst_29 = arith.constant 0.797884583 : f32
    %75 = vector.broadcast %cst_29 : f32 to vector<16x256xf32>
    %76 = arith.mulf %75, %74 : vector<16x256xf32>
    %77 = math.tanh %76 : vector<16x256xf32>
    %cst_30 = arith.constant 1.000000e+00 : f32
    %78 = vector.broadcast %cst_30 : f32 to vector<16x256xf32>
    %79 = arith.addf %78, %77 : vector<16x256xf32>
    %80 = arith.mulf %69, %79 : vector<16x256xf32>
    %81 = arith.truncf %80 : vector<16x256xf32> to vector<16x256xbf16>
    %c0_31 = arith.constant 0 : index
    %c0_32 = arith.constant 0 : index
    %c0_33 = arith.constant 0 : index
    %82 = vector.load %arg14[%c0_31, %c0_32, %c0_33] : memref<2x256x64xbf16, #tpu.memory_space<vmem>>, vector<1x256x64xbf16>
    %83 = vector.shape_cast %82 : vector<1x256x64xbf16> to vector<256x64xbf16>
    %cst_34 = arith.constant dense<0.000000e+00> : vector<16x64xf32>
    %84 = tpu.matmul %81, %83, %cst_34 {dimension_numbers = #tpu.dot_dimension_numbers<[1], [0], [0], [1], [0, 0, 1, 1], [], []>} : vector<16x256xbf16>, vector<256x64xbf16>, vector<16x64xf32> -> vector<16x64xf32>
    %85 = vector.extract_strided_slice %2 {offsets = [4, 0], sizes = [1, 64], strides = [1, 1]} : vector<5x64xf32> to vector<1x64xf32>
    %86 = vector.broadcast %85 : vector<1x64xf32> to vector<16x64xf32>
    %87 = arith.addf %84, %86 : vector<16x64xf32>
    %88 = arith.addf %87, %35 : vector<16x64xf32>
    %c1 = arith.constant 1 : index
    %c0_35 = arith.constant 0 : index
    %c0_36 = arith.constant 0 : index
    %89 = vector.load %arg11[%c1, %c0_35, %c0_36] : memref<2x5x64xf32, #tpu.memory_space<vmem>>, vector<1x5x64xf32>
    %90 = vector.shape_cast %89 : vector<1x5x64xf32> to vector<5x64xf32>
    %91 = vector.extract_strided_slice %90 {offsets = [0, 0], sizes = [1, 64], strides = [1, 1]} : vector<5x64xf32> to vector<1x64xf32>
    %92 = vector.extract_strided_slice %90 {offsets = [1, 0], sizes = [1, 64], strides = [1, 1]} : vector<5x64xf32> to vector<1x64xf32>
    %cst_37 = arith.constant dense<0.000000e+00> : vector<16xf32>
    %93 = vector.multi_reduction <add>, %88, %cst_37 [1] : vector<16x64xf32> to vector<16xf32>
    %94 = vector.shape_cast %93 : vector<16xf32> to vector<16x1xf32>
    %cst_38 = arith.constant 6.400000e+01 : f32
    %95 = vector.broadcast %cst_38 : f32 to vector<16x1xf32>
    %96 = arith.divf %94, %95 : vector<16x1xf32>
    %97 = vector.broadcast %96 : vector<16x1xf32> to vector<16x64xf32>
    %98 = arith.subf %88, %97 : vector<16x64xf32>
    %99 = arith.mulf %98, %98 : vector<16x64xf32>
    %cst_39 = arith.constant dense<0.000000e+00> : vector<16xf32>
    %100 = vector.multi_reduction <add>, %99, %cst_39 [1] : vector<16x64xf32> to vector<16xf32>
    %101 = vector.shape_cast %100 : vector<16xf32> to vector<16x1xf32>
    %cst_40 = arith.constant 6.400000e+01 : f32
    %102 = vector.broadcast %cst_40 : f32 to vector<16x1xf32>
    %103 = arith.divf %101, %102 : vector<16x1xf32>
    %104 = vector.broadcast %96 : vector<16x1xf32> to vector<16x64xf32>
    %105 = arith.subf %88, %104 : vector<16x64xf32>
    %cst_41 = arith.constant 9.99999974E-6 : f32
    %106 = vector.broadcast %cst_41 : f32 to vector<16x1xf32>
    %107 = arith.addf %103, %106 : vector<16x1xf32>
    %108 = math.rsqrt %107 : vector<16x1xf32>
    %109 = vector.broadcast %108 : vector<16x1xf32> to vector<16x64xf32>
    %110 = arith.mulf %105, %109 : vector<16x64xf32>
    %111 = vector.broadcast %91 : vector<1x64xf32> to vector<16x64xf32>
    %112 = arith.mulf %110, %111 : vector<16x64xf32>
    %113 = vector.broadcast %92 : vector<1x64xf32> to vector<16x64xf32>
    %114 = arith.addf %112, %113 : vector<16x64xf32>
    %c1_42 = arith.constant 1 : index
    %c0_43 = arith.constant 0 : index
    %c0_44 = arith.constant 0 : index
    %115 = vector.load %arg9[%c1_42, %c0_43, %c0_44] : memref<2x16x16xbf16, #tpu.memory_space<vmem>>, vector<1x16x16xbf16>
    %116 = vector.shape_cast %115 : vector<1x16x16xbf16> to vector<16x16xbf16>
    %117 = arith.truncf %114 : vector<16x64xf32> to vector<16x64xbf16>
    %cst_45 = arith.constant dense<0.000000e+00> : vector<16x64xf32>
    %118 = tpu.matmul %116, %117, %cst_45 {dimension_numbers = #tpu.dot_dimension_numbers<[1], [0], [0], [1], [0, 0, 1, 1], [], []>} : vector<16x16xbf16>, vector<16x64xbf16>, vector<16x64xf32> -> vector<16x64xf32>
    %c1_46 = arith.constant 1 : index
    %c0_47 = arith.constant 0 : index
    %c0_48 = arith.constant 0 : index
    %119 = vector.load %arg10[%c1_46, %c0_47, %c0_48] : memref<2x16x1xf32, #tpu.memory_space<vmem>>, vector<1x16x1xf32>
    %120 = vector.shape_cast %119 : vector<1x16x1xf32> to vector<16x1xf32>
    %121 = vector.broadcast %120 : vector<16x1xf32> to vector<16x64xf32>
    %122 = arith.addf %118, %121 : vector<16x64xf32>
    %123 = arith.addf %122, %88 : vector<16x64xf32>
    %124 = vector.extract_strided_slice %90 {offsets = [2, 0], sizes = [1, 64], strides = [1, 1]} : vector<5x64xf32> to vector<1x64xf32>
    %125 = vector.extract_strided_slice %90 {offsets = [3, 0], sizes = [1, 64], strides = [1, 1]} : vector<5x64xf32> to vector<1x64xf32>
    %cst_49 = arith.constant dense<0.000000e+00> : vector<16xf32>
    %126 = vector.multi_reduction <add>, %123, %cst_49 [1] : vector<16x64xf32> to vector<16xf32>
    %127 = vector.shape_cast %126 : vector<16xf32> to vector<16x1xf32>
    %cst_50 = arith.constant 6.400000e+01 : f32
    %128 = vector.broadcast %cst_50 : f32 to vector<16x1xf32>
    %129 = arith.divf %127, %128 : vector<16x1xf32>
    %130 = vector.broadcast %129 : vector<16x1xf32> to vector<16x64xf32>
    %131 = arith.subf %123, %130 : vector<16x64xf32>
    %132 = arith.mulf %131, %131 : vector<16x64xf32>
    %cst_51 = arith.constant dense<0.000000e+00> : vector<16xf32>
    %133 = vector.multi_reduction <add>, %132, %cst_51 [1] : vector<16x64xf32> to vector<16xf32>
    %134 = vector.shape_cast %133 : vector<16xf32> to vector<16x1xf32>
    %cst_52 = arith.constant 6.400000e+01 : f32
    %135 = vector.broadcast %cst_52 : f32 to vector<16x1xf32>
    %136 = arith.divf %134, %135 : vector<16x1xf32>
    %137 = vector.broadcast %129 : vector<16x1xf32> to vector<16x64xf32>
    %138 = arith.subf %123, %137 : vector<16x64xf32>
    %cst_53 = arith.constant 9.99999974E-6 : f32
    %139 = vector.broadcast %cst_53 : f32 to vector<16x1xf32>
    %140 = arith.addf %136, %139 : vector<16x1xf32>
    %141 = math.rsqrt %140 : vector<16x1xf32>
    %142 = vector.broadcast %141 : vector<16x1xf32> to vector<16x64xf32>
    %143 = arith.mulf %138, %142 : vector<16x64xf32>
    %144 = vector.broadcast %124 : vector<1x64xf32> to vector<16x64xf32>
    %145 = arith.mulf %143, %144 : vector<16x64xf32>
    %146 = vector.broadcast %125 : vector<1x64xf32> to vector<16x64xf32>
    %147 = arith.addf %145, %146 : vector<16x64xf32>
    %148 = arith.truncf %147 : vector<16x64xf32> to vector<16x64xbf16>
    %c1_54 = arith.constant 1 : index
    %c0_55 = arith.constant 0 : index
    %c0_56 = arith.constant 0 : index
    %149 = vector.load %arg12[%c1_54, %c0_55, %c0_56] : memref<2x64x256xbf16, #tpu.memory_space<vmem>>, vector<1x64x256xbf16>
    %150 = vector.shape_cast %149 : vector<1x64x256xbf16> to vector<64x256xbf16>
    %cst_57 = arith.constant dense<0.000000e+00> : vector<16x256xf32>
    %151 = tpu.matmul %148, %150, %cst_57 {dimension_numbers = #tpu.dot_dimension_numbers<[1], [0], [0], [1], [0, 0, 1, 1], [], []>} : vector<16x64xbf16>, vector<64x256xbf16>, vector<16x256xf32> -> vector<16x256xf32>
    %c1_58 = arith.constant 1 : index
    %c0_59 = arith.constant 0 : index
    %c0_60 = arith.constant 0 : index
    %152 = vector.load %arg13[%c1_58, %c0_59, %c0_60] : memref<2x1x256xf32, #tpu.memory_space<vmem>>, vector<1x1x256xf32>
    %153 = vector.shape_cast %152 : vector<1x1x256xf32> to vector<1x256xf32>
    %154 = vector.broadcast %153 : vector<1x256xf32> to vector<16x256xf32>
    %155 = arith.addf %151, %154 : vector<16x256xf32>
    %cst_61 = arith.constant 5.000000e-01 : f32
    %156 = vector.broadcast %cst_61 : f32 to vector<16x256xf32>
    %157 = arith.mulf %156, %155 : vector<16x256xf32>
    %cst_62 = arith.constant 4.471500e-02 : f32
    %158 = vector.broadcast %cst_62 : f32 to vector<16x256xf32>
    %159 = arith.mulf %158, %155 : vector<16x256xf32>
    %160 = arith.mulf %159, %155 : vector<16x256xf32>
    %161 = arith.mulf %160, %155 : vector<16x256xf32>
    %162 = arith.addf %155, %161 : vector<16x256xf32>
    %cst_63 = arith.constant 0.797884583 : f32
    %163 = vector.broadcast %cst_63 : f32 to vector<16x256xf32>
    %164 = arith.mulf %163, %162 : vector<16x256xf32>
    %165 = math.tanh %164 : vector<16x256xf32>
    %cst_64 = arith.constant 1.000000e+00 : f32
    %166 = vector.broadcast %cst_64 : f32 to vector<16x256xf32>
    %167 = arith.addf %166, %165 : vector<16x256xf32>
    %168 = arith.mulf %157, %167 : vector<16x256xf32>
    %169 = arith.truncf %168 : vector<16x256xf32> to vector<16x256xbf16>
    %c1_65 = arith.constant 1 : index
    %c0_66 = arith.constant 0 : index
    %c0_67 = arith.constant 0 : index
    %170 = vector.load %arg14[%c1_65, %c0_66, %c0_67] : memref<2x256x64xbf16, #tpu.memory_space<vmem>>, vector<1x256x64xbf16>
    %171 = vector.shape_cast %170 : vector<1x256x64xbf16> to vector<256x64xbf16>
    %cst_68 = arith.constant dense<0.000000e+00> : vector<16x64xf32>
    %172 = tpu.matmul %169, %171, %cst_68 {dimension_numbers = #tpu.dot_dimension_numbers<[1], [0], [0], [1], [0, 0, 1, 1], [], []>} : vector<16x256xbf16>, vector<256x64xbf16>, vector<16x64xf32> -> vector<16x64xf32>
    %173 = vector.extract_strided_slice %90 {offsets = [4, 0], sizes = [1, 64], strides = [1, 1]} : vector<5x64xf32> to vector<1x64xf32>
    %174 = vector.broadcast %173 : vector<1x64xf32> to vector<16x64xf32>
    %175 = arith.addf %172, %174 : vector<16x64xf32>
    %176 = arith.addf %175, %123 : vector<16x64xf32>
    %c0_69 = arith.constant 0 : index
    %c0_70 = arith.constant 0 : index
    %177 = vector.load %arg7[%c0_69, %c0_70] : memref<2x16xf32, #tpu.memory_space<vmem>>, vector<2x16xf32>
    %cst_71 = arith.constant dense<0.000000e+00> : vector<2x64xf32>
    %178 = tpu.matmul %177, %176, %cst_71 {dimension_numbers = #tpu.dot_dimension_numbers<[1], [0], [0], [1], [0, 0, 1, 1], [], []>} : vector<2x16xf32>, vector<16x64xf32>, vector<2x64xf32> -> vector<2x64xf32>
    %179 = arith.truncf %178 : vector<2x64xf32> to vector<2x64xbf16>
    %c0_72 = arith.constant 0 : index
    %c0_73 = arith.constant 0 : index
    %c0_74 = arith.constant 0 : index
    %180 = vector.load %arg15[%c0_72, %c0_73, %c0_74] : memref<2x64x64xbf16, #tpu.memory_space<vmem>>, vector<1x64x64xbf16>
    %181 = vector.shape_cast %180 : vector<1x64x64xbf16> to vector<64x64xbf16>
    %cst_75 = arith.constant dense<0.000000e+00> : vector<2x64xf32>
    %182 = tpu.matmul %179, %181, %cst_75 {dimension_numbers = #tpu.dot_dimension_numbers<[1], [0], [0], [1], [0, 0, 1, 1], [], []>} : vector<2x64xbf16>, vector<64x64xbf16>, vector<2x64xf32> -> vector<2x64xf32>
    %c0_76 = arith.constant 0 : index
    %c0_77 = arith.constant 0 : index
    %c0_78 = arith.constant 0 : index
    %183 = vector.load %arg16[%c0_76, %c0_77, %c0_78] : memref<2x1x64xf32, #tpu.memory_space<vmem>>, vector<1x1x64xf32>
    %184 = vector.shape_cast %183 : vector<1x1x64xf32> to vector<1x64xf32>
    %185 = vector.broadcast %184 : vector<1x64xf32> to vector<2x64xf32>
    %186 = arith.addf %182, %185 : vector<2x64xf32>
    %187 = arith.truncf %186 : vector<2x64xf32> to vector<2x64xbf16>
    %c1_79 = arith.constant 1 : index
    %c0_80 = arith.constant 0 : index
    %c0_81 = arith.constant 0 : index
    %188 = vector.load %arg15[%c1_79, %c0_80, %c0_81] : memref<2x64x64xbf16, #tpu.memory_space<vmem>>, vector<1x64x64xbf16>
    %189 = vector.shape_cast %188 : vector<1x64x64xbf16> to vector<64x64xbf16>
    %cst_82 = arith.constant dense<0.000000e+00> : vector<2x64xf32>
    %190 = tpu.matmul %187, %189, %cst_82 {dimension_numbers = #tpu.dot_dimension_numbers<[1], [0], [0], [1], [0, 0, 1, 1], [], []>} : vector<2x64xbf16>, vector<64x64xbf16>, vector<2x64xf32> -> vector<2x64xf32>
    %c1_83 = arith.constant 1 : index
    %c0_84 = arith.constant 0 : index
    %c0_85 = arith.constant 0 : index
    %191 = vector.load %arg16[%c1_83, %c0_84, %c0_85] : memref<2x1x64xf32, #tpu.memory_space<vmem>>, vector<1x1x64xf32>
    %192 = vector.shape_cast %191 : vector<1x1x64xf32> to vector<1x64xf32>
    %193 = vector.broadcast %192 : vector<1x64xf32> to vector<2x64xf32>
    %194 = arith.addf %190, %193 : vector<2x64xf32>
    %195 = arith.truncf %194 : vector<2x64xf32> to vector<2x64xbf16>
    %c0_86 = arith.constant 0 : index
    %c0_87 = arith.constant 0 : index
    %196 = vector.load %arg17[%c0_86, %c0_87] : memref<64x32xbf16, #tpu.memory_space<vmem>>, vector<64x32xbf16>
    %cst_88 = arith.constant dense<0.000000e+00> : vector<2x32xf32>
    %197 = tpu.matmul %195, %196, %cst_88 {dimension_numbers = #tpu.dot_dimension_numbers<[1], [0], [0], [1], [0, 0, 1, 1], [], []>} : vector<2x64xbf16>, vector<64x32xbf16>, vector<2x32xf32> -> vector<2x32xf32>
    %c0_89 = arith.constant 0 : index
    %c0_90 = arith.constant 0 : index
    %198 = vector.load %arg18[%c0_89, %c0_90] : memref<1x32xf32, #tpu.memory_space<vmem>>, vector<1x32xf32>
    %199 = vector.broadcast %198 : vector<1x32xf32> to vector<2x32xf32>
    %200 = arith.addf %197, %199 : vector<2x32xf32>
    %c0_91 = arith.constant 0 : index
    %c0_92 = arith.constant 0 : index
    %c0_93 = arith.constant 0 : index
    %201 = vector.load %arg4[%c0_91, %c0_92, %c0_93] : memref<2x18x32xf32, #tpu.memory_space<vmem>>, vector<1x18x32xf32>
    %202 = vector.shape_cast %201 : vector<1x18x32xf32> to vector<18x32xf32>
    %c1_94 = arith.constant 1 : index
    %c0_95 = arith.constant 0 : index
    %c0_96 = arith.constant 0 : index
    %203 = vector.load %arg4[%c1_94, %c0_95, %c0_96] : memref<2x18x32xf32, #tpu.memory_space<vmem>>, vector<1x18x32xf32>
    %204 = vector.shape_cast %203 : vector<1x18x32xf32> to vector<18x32xf32>
    %c0_97 = arith.constant 0 : index
    %c0_98 = arith.constant 0 : index
    %205 = vector.load %arg5[%c0_97, %c0_98] : memref<18x18xf32, #tpu.memory_space<vmem>>, vector<18x18xf32>
    %c0_99 = arith.constant 0 : index
    %c0_100 = arith.constant 0 : index
    %c0_101 = arith.constant 0 : index
    %206 = vector.load %arg6[%c0_99, %c0_100, %c0_101] : memref<4x1x32xf32, #tpu.memory_space<vmem>>, vector<4x1x32xf32>
    %c0_102 = arith.constant 0 : index
    %c0_103 = arith.constant 0 : index
    %207 = vector.load %arg2[%c0_102, %c0_103] : memref<18x32xf32, #tpu.memory_space<vmem>>, vector<18x32xf32>
    %c0_104 = arith.constant 0 : index
    %c0_105 = arith.constant 0 : index
    %208 = vector.load %arg8[%c0_104, %c0_105] : memref<18x2xf32, #tpu.memory_space<vmem>>, vector<18x2xf32>
    %cst_106 = arith.constant dense<0.000000e+00> : vector<18x32xf32>
    %209 = tpu.matmul %208, %200, %cst_106 {dimension_numbers = #tpu.dot_dimension_numbers<[1], [0], [0], [1], [0, 0, 1, 1], [], []>} : vector<18x2xf32>, vector<2x32xf32>, vector<18x32xf32> -> vector<18x32xf32>
    %210 = arith.addf %207, %209 : vector<18x32xf32>
    %c0_107 = arith.constant 0 : index
    %c0_108 = arith.constant 0 : index
    %c0_109 = arith.constant 0 : index
    %c0_110 = arith.constant 0 : index
    %211 = vector.load %arg20[%c0_107, %c0_108, %c0_109, %c0_110] : memref<2x6x32x32xbf16, #tpu.memory_space<vmem>>, vector<1x6x32x32xbf16>
    %212 = vector.shape_cast %211 : vector<1x6x32x32xbf16> to vector<6x32x32xbf16>
    %c0_111 = arith.constant 0 : index
    %c0_112 = arith.constant 0 : index
    %c0_113 = arith.constant 0 : index
    %213 = vector.load %arg19[%c0_111, %c0_112, %c0_113] : memref<2x2x32xf32, #tpu.memory_space<vmem>>, vector<1x2x32xf32>
    %214 = vector.shape_cast %213 : vector<1x2x32xf32> to vector<2x32xf32>
    %215 = vector.extract_strided_slice %214 {offsets = [0, 0], sizes = [1, 32], strides = [1, 1]} : vector<2x32xf32> to vector<1x32xf32>
    %216 = arith.mulf %210, %210 : vector<18x32xf32>
    %cst_114 = arith.constant dense<0.000000e+00> : vector<18xf32>
    %217 = vector.multi_reduction <add>, %216, %cst_114 [1] : vector<18x32xf32> to vector<18xf32>
    %218 = vector.shape_cast %217 : vector<18xf32> to vector<18x1xf32>
    %cst_115 = arith.constant 3.200000e+01 : f32
    %219 = vector.broadcast %cst_115 : f32 to vector<18x1xf32>
    %220 = arith.divf %218, %219 : vector<18x1xf32>
    %cst_116 = arith.constant 9.99999997E-7 : f32
    %221 = vector.broadcast %cst_116 : f32 to vector<18x1xf32>
    %222 = arith.addf %220, %221 : vector<18x1xf32>
    %223 = math.rsqrt %222 : vector<18x1xf32>
    %224 = vector.broadcast %223 : vector<18x1xf32> to vector<18x32xf32>
    %225 = arith.mulf %210, %224 : vector<18x32xf32>
    %226 = vector.broadcast %215 : vector<1x32xf32> to vector<18x32xf32>
    %227 = arith.mulf %225, %226 : vector<18x32xf32>
    %228 = arith.truncf %227 : vector<18x32xf32> to vector<18x32xbf16>
    %229 = vector.extract_strided_slice %212 {offsets = [0, 0, 0], sizes = [1, 32, 32], strides = [1, 1, 1]} : vector<6x32x32xbf16> to vector<1x32x32xbf16>
    %230 = vector.shape_cast %229 : vector<1x32x32xbf16> to vector<32x32xbf16>
    %cst_117 = arith.constant dense<0.000000e+00> : vector<18x32xf32>
    %231 = tpu.matmul %228, %230, %cst_117 {dimension_numbers = #tpu.dot_dimension_numbers<[1], [0], [0], [1], [0, 0, 1, 1], [], []>} : vector<18x32xbf16>, vector<32x32xbf16>, vector<18x32xf32> -> vector<18x32xf32>
    %232 = vector.extract_strided_slice %212 {offsets = [1, 0, 0], sizes = [1, 32, 32], strides = [1, 1, 1]} : vector<6x32x32xbf16> to vector<1x32x32xbf16>
    %233 = vector.shape_cast %232 : vector<1x32x32xbf16> to vector<32x32xbf16>
    %cst_118 = arith.constant dense<0.000000e+00> : vector<18x32xf32>
    %234 = tpu.matmul %228, %233, %cst_118 {dimension_numbers = #tpu.dot_dimension_numbers<[1], [0], [0], [1], [0, 0, 1, 1], [], []>} : vector<18x32xbf16>, vector<32x32xbf16>, vector<18x32xf32> -> vector<18x32xf32>
    %235 = vector.extract_strided_slice %212 {offsets = [2, 0, 0], sizes = [1, 32, 32], strides = [1, 1, 1]} : vector<6x32x32xbf16> to vector<1x32x32xbf16>
    %236 = vector.shape_cast %235 : vector<1x32x32xbf16> to vector<32x32xbf16>
    %cst_119 = arith.constant dense<0.000000e+00> : vector<18x32xf32>
    %237 = tpu.matmul %228, %236, %cst_119 {dimension_numbers = #tpu.dot_dimension_numbers<[1], [0], [0], [1], [0, 0, 1, 1], [], []>} : vector<18x32xbf16>, vector<32x32xbf16>, vector<18x32xf32> -> vector<18x32xf32>
    %238 = vector.extract_strided_slice %212 {offsets = [3, 0, 0], sizes = [1, 32, 32], strides = [1, 1, 1]} : vector<6x32x32xbf16> to vector<1x32x32xbf16>
    %239 = vector.shape_cast %238 : vector<1x32x32xbf16> to vector<32x32xbf16>
    %cst_120 = arith.constant dense<0.000000e+00> : vector<18x32xf32>
    %240 = tpu.matmul %228, %239, %cst_120 {dimension_numbers = #tpu.dot_dimension_numbers<[1], [0], [0], [1], [0, 0, 1, 1], [], []>} : vector<18x32xbf16>, vector<32x32xbf16>, vector<18x32xf32> -> vector<18x32xf32>
    %241 = vector.extract_strided_slice %212 {offsets = [4, 0, 0], sizes = [1, 32, 32], strides = [1, 1, 1]} : vector<6x32x32xbf16> to vector<1x32x32xbf16>
    %242 = vector.shape_cast %241 : vector<1x32x32xbf16> to vector<32x32xbf16>
    %cst_121 = arith.constant dense<0.000000e+00> : vector<18x32xf32>
    %243 = tpu.matmul %228, %242, %cst_121 {dimension_numbers = #tpu.dot_dimension_numbers<[1], [0], [0], [1], [0, 0, 1, 1], [], []>} : vector<18x32xbf16>, vector<32x32xbf16>, vector<18x32xf32> -> vector<18x32xf32>
    %244 = arith.mulf %231, %202 : vector<18x32xf32>
    %245 = arith.mulf %234, %204 : vector<18x32xf32>
    %246 = arith.addf %244, %245 : vector<18x32xf32>
    %247 = arith.mulf %237, %202 : vector<18x32xf32>
    %248 = arith.mulf %240, %204 : vector<18x32xf32>
    %249 = arith.addf %247, %248 : vector<18x32xf32>
    %250 = vector.shape_cast %246 : vector<18x32xf32> to vector<1x18x32xf32>
    %251 = vector.broadcast %250 : vector<1x18x32xf32> to vector<4x18x32xf32>
    %252 = vector.broadcast %206 : vector<4x1x32xf32> to vector<4x18x32xf32>
    %253 = arith.mulf %251, %252 : vector<4x18x32xf32>
    %254 = arith.truncf %253 : vector<4x18x32xf32> to vector<4x18x32xbf16>
    %255 = arith.truncf %249 : vector<18x32xf32> to vector<18x32xbf16>
    %256 = vector.shape_cast %255 : vector<18x32xbf16> to vector<1x18x32xbf16>
    %257 = vector.shape_cast %256 : vector<1x18x32xbf16> to vector<1x18x32xbf16>
    %258 = vector.broadcast %257 : vector<1x18x32xbf16> to vector<4x18x32xbf16>
    "tpu.trace_start"() <{level = 10 : i32, message = "hqd,hkd->hqk"}> : () -> ()
    %cst_122 = arith.constant dense<0.000000e+00> : vector<4x18x18xf32>
    %259 = tpu.matmul %254, %258, %cst_122 {dimension_numbers = #tpu.dot_dimension_numbers<[2], [2], [1], [1], [0, 0, 0, 1, 1, 1], [0], [0]>} : vector<4x18x32xbf16>, vector<4x18x32xbf16>, vector<4x18x18xf32> -> vector<4x18x18xf32>
    "tpu.trace_stop"() : () -> ()
    %260 = vector.shape_cast %205 : vector<18x18xf32> to vector<1x18x18xf32>
    %261 = vector.broadcast %260 : vector<1x18x18xf32> to vector<4x18x18xf32>
    %262 = arith.addf %259, %261 : vector<4x18x18xf32>
    %cst_123 = arith.constant dense<0xFF800000> : vector<4x18xf32>
    %263 = vector.multi_reduction <maximumf>, %262, %cst_123 [2] : vector<4x18x18xf32> to vector<4x18xf32>
    %264 = vector.shape_cast %263 : vector<4x18xf32> to vector<4x18x1xf32>
    %265 = vector.broadcast %264 : vector<4x18x1xf32> to vector<4x18x18xf32>
    %266 = arith.subf %262, %265 : vector<4x18x18xf32>
    %267 = math.exp %266 : vector<4x18x18xf32>
    %cst_124 = arith.constant dense<0.000000e+00> : vector<4x18xf32>
    %268 = vector.multi_reduction <add>, %267, %cst_124 [2] : vector<4x18x18xf32> to vector<4x18xf32>
    %269 = vector.shape_cast %268 : vector<4x18xf32> to vector<4x18x1xf32>
    %270 = tpu.reciprocal %269 {approx = true} : vector<4x18x1xf32> -> vector<4x18x1xf32>
    %271 = vector.broadcast %270 : vector<4x18x1xf32> to vector<4x18x18xf32>
    %272 = arith.mulf %267, %271 : vector<4x18x18xf32>
    %273 = vector.shape_cast %243 : vector<18x32xf32> to vector<1x18x32xf32>
    %274 = vector.broadcast %273 : vector<1x18x32xf32> to vector<4x18x32xf32>
    %275 = vector.broadcast %206 : vector<4x1x32xf32> to vector<4x18x32xf32>
    %276 = arith.mulf %274, %275 : vector<4x18x32xf32>
    %277 = arith.truncf %276 : vector<4x18x32xf32> to vector<4x18x32xbf16>
    %278 = arith.truncf %272 : vector<4x18x18xf32> to vector<4x18x18xbf16>
    "tpu.trace_start"() <{level = 10 : i32, message = "hqk,hkd->hqd"}> : () -> ()
    %cst_125 = arith.constant dense<0.000000e+00> : vector<4x18x32xf32>
    %279 = tpu.matmul %278, %277, %cst_125 {dimension_numbers = #tpu.dot_dimension_numbers<[2], [1], [1], [2], [0, 0, 0, 1, 1, 2], [0], [0]>} : vector<4x18x18xbf16>, vector<4x18x32xbf16>, vector<4x18x32xf32> -> vector<4x18x32xf32>
    "tpu.trace_stop"() : () -> ()
    %cst_126 = arith.constant dense<0.000000e+00> : vector<18x32xf32>
    %280 = vector.multi_reduction <add>, %279, %cst_126 [0] : vector<4x18x32xf32> to vector<18x32xf32>
    %281 = arith.truncf %280 : vector<18x32xf32> to vector<18x32xbf16>
    %282 = vector.extract_strided_slice %212 {offsets = [5, 0, 0], sizes = [1, 32, 32], strides = [1, 1, 1]} : vector<6x32x32xbf16> to vector<1x32x32xbf16>
    %283 = vector.shape_cast %282 : vector<1x32x32xbf16> to vector<32x32xbf16>
    %cst_127 = arith.constant dense<0.000000e+00> : vector<18x32xf32>
    %284 = tpu.matmul %281, %283, %cst_127 {dimension_numbers = #tpu.dot_dimension_numbers<[1], [0], [0], [1], [0, 0, 1, 1], [], []>} : vector<18x32xbf16>, vector<32x32xbf16>, vector<18x32xf32> -> vector<18x32xf32>
    %285 = arith.addf %210, %284 : vector<18x32xf32>
    %286 = vector.extract_strided_slice %214 {offsets = [1, 0], sizes = [1, 32], strides = [1, 1]} : vector<2x32xf32> to vector<1x32xf32>
    %287 = arith.mulf %285, %285 : vector<18x32xf32>
    %cst_128 = arith.constant dense<0.000000e+00> : vector<18xf32>
    %288 = vector.multi_reduction <add>, %287, %cst_128 [1] : vector<18x32xf32> to vector<18xf32>
    %289 = vector.shape_cast %288 : vector<18xf32> to vector<18x1xf32>
    %cst_129 = arith.constant 3.200000e+01 : f32
    %290 = vector.broadcast %cst_129 : f32 to vector<18x1xf32>
    %291 = arith.divf %289, %290 : vector<18x1xf32>
    %cst_130 = arith.constant 9.99999997E-7 : f32
    %292 = vector.broadcast %cst_130 : f32 to vector<18x1xf32>
    %293 = arith.addf %291, %292 : vector<18x1xf32>
    %294 = math.rsqrt %293 : vector<18x1xf32>
    %295 = vector.broadcast %294 : vector<18x1xf32> to vector<18x32xf32>
    %296 = arith.mulf %285, %295 : vector<18x32xf32>
    %297 = vector.broadcast %286 : vector<1x32xf32> to vector<18x32xf32>
    %298 = arith.mulf %296, %297 : vector<18x32xf32>
    %299 = arith.truncf %298 : vector<18x32xf32> to vector<18x32xbf16>
    %c0_131 = arith.constant 0 : index
    %c0_132 = arith.constant 0 : index
    %c0_133 = arith.constant 0 : index
    %300 = vector.load %arg21[%c0_131, %c0_132, %c0_133] : memref<2x32x256xbf16, #tpu.memory_space<vmem>>, vector<1x32x256xbf16>
    %301 = vector.shape_cast %300 : vector<1x32x256xbf16> to vector<32x256xbf16>
    %cst_134 = arith.constant dense<0.000000e+00> : vector<18x256xf32>
    %302 = tpu.matmul %299, %301, %cst_134 {dimension_numbers = #tpu.dot_dimension_numbers<[1], [0], [0], [1], [0, 0, 1, 1], [], []>} : vector<18x32xbf16>, vector<32x256xbf16>, vector<18x256xf32> -> vector<18x256xf32>
    %303 = vector.extract_strided_slice %302 {offsets = [0, 0], sizes = [18, 128], strides = [1, 1]} : vector<18x256xf32> to vector<18x128xf32>
    %304 = vector.extract_strided_slice %302 {offsets = [0, 128], sizes = [18, 128], strides = [1, 1]} : vector<18x256xf32> to vector<18x128xf32>
    %305 = arith.negf %303 : vector<18x128xf32>
    %306 = math.exp %305 : vector<18x128xf32>
    %cst_135 = arith.constant 1.000000e+00 : f32
    %307 = vector.broadcast %cst_135 : f32 to vector<18x128xf32>
    %308 = arith.addf %307, %306 : vector<18x128xf32>
    %309 = arith.divf %307, %308 : vector<18x128xf32>
    %310 = arith.mulf %303, %309 : vector<18x128xf32>
    %311 = arith.mulf %310, %304 : vector<18x128xf32>
    %312 = arith.truncf %311 : vector<18x128xf32> to vector<18x128xbf16>
    %c0_136 = arith.constant 0 : index
    %c0_137 = arith.constant 0 : index
    %c0_138 = arith.constant 0 : index
    %313 = vector.load %arg22[%c0_136, %c0_137, %c0_138] : memref<2x128x32xbf16, #tpu.memory_space<vmem>>, vector<1x128x32xbf16>
    %314 = vector.shape_cast %313 : vector<1x128x32xbf16> to vector<128x32xbf16>
    %cst_139 = arith.constant dense<0.000000e+00> : vector<18x32xf32>
    %315 = tpu.matmul %312, %314, %cst_139 {dimension_numbers = #tpu.dot_dimension_numbers<[1], [0], [0], [1], [0, 0, 1, 1], [], []>} : vector<18x128xbf16>, vector<128x32xbf16>, vector<18x32xf32> -> vector<18x32xf32>
    %316 = arith.addf %285, %315 : vector<18x32xf32>
    %c1_140 = arith.constant 1 : index
    %c0_141 = arith.constant 0 : index
    %c0_142 = arith.constant 0 : index
    %c0_143 = arith.constant 0 : index
    %317 = vector.load %arg20[%c1_140, %c0_141, %c0_142, %c0_143] : memref<2x6x32x32xbf16, #tpu.memory_space<vmem>>, vector<1x6x32x32xbf16>
    %318 = vector.shape_cast %317 : vector<1x6x32x32xbf16> to vector<6x32x32xbf16>
    %c1_144 = arith.constant 1 : index
    %c0_145 = arith.constant 0 : index
    %c0_146 = arith.constant 0 : index
    %319 = vector.load %arg19[%c1_144, %c0_145, %c0_146] : memref<2x2x32xf32, #tpu.memory_space<vmem>>, vector<1x2x32xf32>
    %320 = vector.shape_cast %319 : vector<1x2x32xf32> to vector<2x32xf32>
    %321 = vector.extract_strided_slice %320 {offsets = [0, 0], sizes = [1, 32], strides = [1, 1]} : vector<2x32xf32> to vector<1x32xf32>
    %322 = arith.mulf %316, %316 : vector<18x32xf32>
    %cst_147 = arith.constant dense<0.000000e+00> : vector<18xf32>
    %323 = vector.multi_reduction <add>, %322, %cst_147 [1] : vector<18x32xf32> to vector<18xf32>
    %324 = vector.shape_cast %323 : vector<18xf32> to vector<18x1xf32>
    %cst_148 = arith.constant 3.200000e+01 : f32
    %325 = vector.broadcast %cst_148 : f32 to vector<18x1xf32>
    %326 = arith.divf %324, %325 : vector<18x1xf32>
    %cst_149 = arith.constant 9.99999997E-7 : f32
    %327 = vector.broadcast %cst_149 : f32 to vector<18x1xf32>
    %328 = arith.addf %326, %327 : vector<18x1xf32>
    %329 = math.rsqrt %328 : vector<18x1xf32>
    %330 = vector.broadcast %329 : vector<18x1xf32> to vector<18x32xf32>
    %331 = arith.mulf %316, %330 : vector<18x32xf32>
    %332 = vector.broadcast %321 : vector<1x32xf32> to vector<18x32xf32>
    %333 = arith.mulf %331, %332 : vector<18x32xf32>
    %334 = arith.truncf %333 : vector<18x32xf32> to vector<18x32xbf16>
    %335 = vector.extract_strided_slice %318 {offsets = [0, 0, 0], sizes = [1, 32, 32], strides = [1, 1, 1]} : vector<6x32x32xbf16> to vector<1x32x32xbf16>
    %336 = vector.shape_cast %335 : vector<1x32x32xbf16> to vector<32x32xbf16>
    %cst_150 = arith.constant dense<0.000000e+00> : vector<18x32xf32>
    %337 = tpu.matmul %334, %336, %cst_150 {dimension_numbers = #tpu.dot_dimension_numbers<[1], [0], [0], [1], [0, 0, 1, 1], [], []>} : vector<18x32xbf16>, vector<32x32xbf16>, vector<18x32xf32> -> vector<18x32xf32>
    %338 = vector.extract_strided_slice %318 {offsets = [1, 0, 0], sizes = [1, 32, 32], strides = [1, 1, 1]} : vector<6x32x32xbf16> to vector<1x32x32xbf16>
    %339 = vector.shape_cast %338 : vector<1x32x32xbf16> to vector<32x32xbf16>
    %cst_151 = arith.constant dense<0.000000e+00> : vector<18x32xf32>
    %340 = tpu.matmul %334, %339, %cst_151 {dimension_numbers = #tpu.dot_dimension_numbers<[1], [0], [0], [1], [0, 0, 1, 1], [], []>} : vector<18x32xbf16>, vector<32x32xbf16>, vector<18x32xf32> -> vector<18x32xf32>
    %341 = vector.extract_strided_slice %318 {offsets = [2, 0, 0], sizes = [1, 32, 32], strides = [1, 1, 1]} : vector<6x32x32xbf16> to vector<1x32x32xbf16>
    %342 = vector.shape_cast %341 : vector<1x32x32xbf16> to vector<32x32xbf16>
    %cst_152 = arith.constant dense<0.000000e+00> : vector<18x32xf32>
    %343 = tpu.matmul %334, %342, %cst_152 {dimension_numbers = #tpu.dot_dimension_numbers<[1], [0], [0], [1], [0, 0, 1, 1], [], []>} : vector<18x32xbf16>, vector<32x32xbf16>, vector<18x32xf32> -> vector<18x32xf32>
    %344 = vector.extract_strided_slice %318 {offsets = [3, 0, 0], sizes = [1, 32, 32], strides = [1, 1, 1]} : vector<6x32x32xbf16> to vector<1x32x32xbf16>
    %345 = vector.shape_cast %344 : vector<1x32x32xbf16> to vector<32x32xbf16>
    %cst_153 = arith.constant dense<0.000000e+00> : vector<18x32xf32>
    %346 = tpu.matmul %334, %345, %cst_153 {dimension_numbers = #tpu.dot_dimension_numbers<[1], [0], [0], [1], [0, 0, 1, 1], [], []>} : vector<18x32xbf16>, vector<32x32xbf16>, vector<18x32xf32> -> vector<18x32xf32>
    %347 = vector.extract_strided_slice %318 {offsets = [4, 0, 0], sizes = [1, 32, 32], strides = [1, 1, 1]} : vector<6x32x32xbf16> to vector<1x32x32xbf16>
    %348 = vector.shape_cast %347 : vector<1x32x32xbf16> to vector<32x32xbf16>
    %cst_154 = arith.constant dense<0.000000e+00> : vector<18x32xf32>
    %349 = tpu.matmul %334, %348, %cst_154 {dimension_numbers = #tpu.dot_dimension_numbers<[1], [0], [0], [1], [0, 0, 1, 1], [], []>} : vector<18x32xbf16>, vector<32x32xbf16>, vector<18x32xf32> -> vector<18x32xf32>
    %350 = arith.mulf %337, %202 : vector<18x32xf32>
    %351 = arith.mulf %340, %204 : vector<18x32xf32>
    %352 = arith.addf %350, %351 : vector<18x32xf32>
    %353 = arith.mulf %343, %202 : vector<18x32xf32>
    %354 = arith.mulf %346, %204 : vector<18x32xf32>
    %355 = arith.addf %353, %354 : vector<18x32xf32>
    %356 = vector.shape_cast %352 : vector<18x32xf32> to vector<1x18x32xf32>
    %357 = vector.broadcast %356 : vector<1x18x32xf32> to vector<4x18x32xf32>
    %358 = vector.broadcast %206 : vector<4x1x32xf32> to vector<4x18x32xf32>
    %359 = arith.mulf %357, %358 : vector<4x18x32xf32>
    %360 = arith.truncf %359 : vector<4x18x32xf32> to vector<4x18x32xbf16>
    %361 = arith.truncf %355 : vector<18x32xf32> to vector<18x32xbf16>
    %362 = vector.shape_cast %361 : vector<18x32xbf16> to vector<1x18x32xbf16>
    %363 = vector.shape_cast %362 : vector<1x18x32xbf16> to vector<1x18x32xbf16>
    %364 = vector.broadcast %363 : vector<1x18x32xbf16> to vector<4x18x32xbf16>
    "tpu.trace_start"() <{level = 10 : i32, message = "hqd,hkd->hqk"}> : () -> ()
    %cst_155 = arith.constant dense<0.000000e+00> : vector<4x18x18xf32>
    %365 = tpu.matmul %360, %364, %cst_155 {dimension_numbers = #tpu.dot_dimension_numbers<[2], [2], [1], [1], [0, 0, 0, 1, 1, 1], [0], [0]>} : vector<4x18x32xbf16>, vector<4x18x32xbf16>, vector<4x18x18xf32> -> vector<4x18x18xf32>
    "tpu.trace_stop"() : () -> ()
    %366 = vector.shape_cast %205 : vector<18x18xf32> to vector<1x18x18xf32>
    %367 = vector.broadcast %366 : vector<1x18x18xf32> to vector<4x18x18xf32>
    %368 = arith.addf %365, %367 : vector<4x18x18xf32>
    %cst_156 = arith.constant dense<0xFF800000> : vector<4x18xf32>
    %369 = vector.multi_reduction <maximumf>, %368, %cst_156 [2] : vector<4x18x18xf32> to vector<4x18xf32>
    %370 = vector.shape_cast %369 : vector<4x18xf32> to vector<4x18x1xf32>
    %371 = vector.broadcast %370 : vector<4x18x1xf32> to vector<4x18x18xf32>
    %372 = arith.subf %368, %371 : vector<4x18x18xf32>
    %373 = math.exp %372 : vector<4x18x18xf32>
    %cst_157 = arith.constant dense<0.000000e+00> : vector<4x18xf32>
    %374 = vector.multi_reduction <add>, %373, %cst_157 [2] : vector<4x18x18xf32> to vector<4x18xf32>
    %375 = vector.shape_cast %374 : vector<4x18xf32> to vector<4x18x1xf32>
    %376 = tpu.reciprocal %375 {approx = true} : vector<4x18x1xf32> -> vector<4x18x1xf32>
    %377 = vector.broadcast %376 : vector<4x18x1xf32> to vector<4x18x18xf32>
    %378 = arith.mulf %373, %377 : vector<4x18x18xf32>
    %379 = vector.shape_cast %349 : vector<18x32xf32> to vector<1x18x32xf32>
    %380 = vector.broadcast %379 : vector<1x18x32xf32> to vector<4x18x32xf32>
    %381 = vector.broadcast %206 : vector<4x1x32xf32> to vector<4x18x32xf32>
    %382 = arith.mulf %380, %381 : vector<4x18x32xf32>
    %383 = arith.truncf %382 : vector<4x18x32xf32> to vector<4x18x32xbf16>
    %384 = arith.truncf %378 : vector<4x18x18xf32> to vector<4x18x18xbf16>
    "tpu.trace_start"() <{level = 10 : i32, message = "hqk,hkd->hqd"}> : () -> ()
    %cst_158 = arith.constant dense<0.000000e+00> : vector<4x18x32xf32>
    %385 = tpu.matmul %384, %383, %cst_158 {dimension_numbers = #tpu.dot_dimension_numbers<[2], [1], [1], [2], [0, 0, 0, 1, 1, 2], [0], [0]>} : vector<4x18x18xbf16>, vector<4x18x32xbf16>, vector<4x18x32xf32> -> vector<4x18x32xf32>
    "tpu.trace_stop"() : () -> ()
    %cst_159 = arith.constant dense<0.000000e+00> : vector<18x32xf32>
    %386 = vector.multi_reduction <add>, %385, %cst_159 [0] : vector<4x18x32xf32> to vector<18x32xf32>
    %387 = arith.truncf %386 : vector<18x32xf32> to vector<18x32xbf16>
    %388 = vector.extract_strided_slice %318 {offsets = [5, 0, 0], sizes = [1, 32, 32], strides = [1, 1, 1]} : vector<6x32x32xbf16> to vector<1x32x32xbf16>
    %389 = vector.shape_cast %388 : vector<1x32x32xbf16> to vector<32x32xbf16>
    %cst_160 = arith.constant dense<0.000000e+00> : vector<18x32xf32>
    %390 = tpu.matmul %387, %389, %cst_160 {dimension_numbers = #tpu.dot_dimension_numbers<[1], [0], [0], [1], [0, 0, 1, 1], [], []>} : vector<18x32xbf16>, vector<32x32xbf16>, vector<18x32xf32> -> vector<18x32xf32>
    %391 = arith.addf %316, %390 : vector<18x32xf32>
    %392 = vector.extract_strided_slice %320 {offsets = [1, 0], sizes = [1, 32], strides = [1, 1]} : vector<2x32xf32> to vector<1x32xf32>
    %393 = arith.mulf %391, %391 : vector<18x32xf32>
    %cst_161 = arith.constant dense<0.000000e+00> : vector<18xf32>
    %394 = vector.multi_reduction <add>, %393, %cst_161 [1] : vector<18x32xf32> to vector<18xf32>
    %395 = vector.shape_cast %394 : vector<18xf32> to vector<18x1xf32>
    %cst_162 = arith.constant 3.200000e+01 : f32
    %396 = vector.broadcast %cst_162 : f32 to vector<18x1xf32>
    %397 = arith.divf %395, %396 : vector<18x1xf32>
    %cst_163 = arith.constant 9.99999997E-7 : f32
    %398 = vector.broadcast %cst_163 : f32 to vector<18x1xf32>
    %399 = arith.addf %397, %398 : vector<18x1xf32>
    %400 = math.rsqrt %399 : vector<18x1xf32>
    %401 = vector.broadcast %400 : vector<18x1xf32> to vector<18x32xf32>
    %402 = arith.mulf %391, %401 : vector<18x32xf32>
    %403 = vector.broadcast %392 : vector<1x32xf32> to vector<18x32xf32>
    %404 = arith.mulf %402, %403 : vector<18x32xf32>
    %405 = arith.truncf %404 : vector<18x32xf32> to vector<18x32xbf16>
    %c1_164 = arith.constant 1 : index
    %c0_165 = arith.constant 0 : index
    %c0_166 = arith.constant 0 : index
    %406 = vector.load %arg21[%c1_164, %c0_165, %c0_166] : memref<2x32x256xbf16, #tpu.memory_space<vmem>>, vector<1x32x256xbf16>
    %407 = vector.shape_cast %406 : vector<1x32x256xbf16> to vector<32x256xbf16>
    %cst_167 = arith.constant dense<0.000000e+00> : vector<18x256xf32>
    %408 = tpu.matmul %405, %407, %cst_167 {dimension_numbers = #tpu.dot_dimension_numbers<[1], [0], [0], [1], [0, 0, 1, 1], [], []>} : vector<18x32xbf16>, vector<32x256xbf16>, vector<18x256xf32> -> vector<18x256xf32>
    %409 = vector.extract_strided_slice %408 {offsets = [0, 0], sizes = [18, 128], strides = [1, 1]} : vector<18x256xf32> to vector<18x128xf32>
    %410 = vector.extract_strided_slice %408 {offsets = [0, 128], sizes = [18, 128], strides = [1, 1]} : vector<18x256xf32> to vector<18x128xf32>
    %411 = arith.negf %409 : vector<18x128xf32>
    %412 = math.exp %411 : vector<18x128xf32>
    %cst_168 = arith.constant 1.000000e+00 : f32
    %413 = vector.broadcast %cst_168 : f32 to vector<18x128xf32>
    %414 = arith.addf %413, %412 : vector<18x128xf32>
    %415 = arith.divf %413, %414 : vector<18x128xf32>
    %416 = arith.mulf %409, %415 : vector<18x128xf32>
    %417 = arith.mulf %416, %410 : vector<18x128xf32>
    %418 = arith.truncf %417 : vector<18x128xf32> to vector<18x128xbf16>
    %c1_169 = arith.constant 1 : index
    %c0_170 = arith.constant 0 : index
    %c0_171 = arith.constant 0 : index
    %419 = vector.load %arg22[%c1_169, %c0_170, %c0_171] : memref<2x128x32xbf16, #tpu.memory_space<vmem>>, vector<1x128x32xbf16>
    %420 = vector.shape_cast %419 : vector<1x128x32xbf16> to vector<128x32xbf16>
    %cst_172 = arith.constant dense<0.000000e+00> : vector<18x32xf32>
    %421 = tpu.matmul %418, %420, %cst_172 {dimension_numbers = #tpu.dot_dimension_numbers<[1], [0], [0], [1], [0, 0, 1, 1], [], []>} : vector<18x128xbf16>, vector<128x32xbf16>, vector<18x32xf32> -> vector<18x32xf32>
    %422 = arith.addf %391, %421 : vector<18x32xf32>
    %423 = arith.truncf %422 : vector<18x32xf32> to vector<18x32xbf16>
    %c0_173 = arith.constant 0 : index
    %c0_174 = arith.constant 0 : index
    %424 = vector.load %arg23[%c0_173, %c0_174] : memref<32x64xbf16, #tpu.memory_space<vmem>>, vector<32x64xbf16>
    %cst_175 = arith.constant dense<0.000000e+00> : vector<18x64xf32>
    %425 = tpu.matmul %423, %424, %cst_175 {dimension_numbers = #tpu.dot_dimension_numbers<[1], [0], [0], [1], [0, 0, 1, 1], [], []>} : vector<18x32xbf16>, vector<32x64xbf16>, vector<18x64xf32> -> vector<18x64xf32>
    %c0_176 = arith.constant 0 : index
    %c0_177 = arith.constant 0 : index
    %426 = vector.load %arg24[%c0_176, %c0_177] : memref<19x64xf32, #tpu.memory_space<vmem>>, vector<18x64xf32>
    tpu.vector_store %arg24[%c0_176, %c0_177], %425 {strides = array<i32>} : memref<19x64xf32, #tpu.memory_space<vmem>>, vector<18x64xf32>,
    %cst_178 = arith.constant dense<0xFF800000> : vector<18xf32>
    %427 = vector.multi_reduction <maximumf>, %425, %cst_178 [1] : vector<18x64xf32> to vector<18xf32>
    %428 = vector.shape_cast %427 : vector<18xf32> to vector<18x1xf32>
    %429 = vector.broadcast %428 : vector<18x1xf32> to vector<18x64xf32>
    %430 = arith.subf %425, %429 : vector<18x64xf32>
    %431 = math.exp %430 : vector<18x64xf32>
    %cst_179 = arith.constant dense<0.000000e+00> : vector<18xf32>
    %432 = vector.multi_reduction <add>, %431, %cst_179 [1] : vector<18x64xf32> to vector<18xf32>
    %433 = vector.shape_cast %432 : vector<18xf32> to vector<18x1xf32>
    %434 = math.log %433 : vector<18x1xf32>
    %435 = arith.addf %434, %428 : vector<18x1xf32>
    %c0_180 = arith.constant 0 : index
    %c0_181 = arith.constant 0 : index
    %436 = vector.load %arg3[%c0_180, %c0_181] : memref<18x64xf32, #tpu.memory_space<vmem>>, vector<18x64xf32>
    %437 = arith.mulf %425, %436 : vector<18x64xf32>
    %cst_182 = arith.constant dense<0.000000e+00> : vector<18xf32>
    %438 = vector.multi_reduction <add>, %437, %cst_182 [1] : vector<18x64xf32> to vector<18xf32>
    %439 = vector.shape_cast %438 : vector<18xf32> to vector<18x1xf32>
    %cst_183 = arith.constant dense<0.000000e+00> : vector<18xf32>
    %440 = vector.multi_reduction <add>, %436, %cst_183 [1] : vector<18x64xf32> to vector<18xf32>
    %441 = vector.shape_cast %440 : vector<18xf32> to vector<18x1xf32>
    %442 = arith.mulf %441, %435 : vector<18x1xf32>
    %443 = arith.subf %442, %439 : vector<18x1xf32>
    %cst_184 = arith.constant dense<0.000000e+00> : vector<1xf32>
    %444 = vector.multi_reduction <add>, %443, %cst_184 [0] : vector<18x1xf32> to vector<1xf32>
    %445 = vector.shape_cast %444 : vector<1xf32> to vector<1x1xf32>
    %cst_185 = arith.constant 0.0714285746 : f32
    %446 = vector.broadcast %cst_185 : f32 to vector<1x1xf32>
    %447 = arith.mulf %445, %446 : vector<1x1xf32>
    %448 = vector.shape_cast %447 : vector<1x1xf32> to vector<1x1xf32>
    %449 = vector.broadcast %448 : vector<1x1xf32> to vector<1x64xf32>
    %c18 = arith.constant 18 : index
    %c0_186 = arith.constant 0 : index
    %450 = vector.load %arg24[%c18, %c0_186] : memref<19x64xf32, #tpu.memory_space<vmem>>, vector<1x64xf32>
    tpu.vector_store %arg24[%c18, %c0_186], %449 {strides = array<i32>} : memref<19x64xf32, #tpu.memory_space<vmem>>, vector<1x64xf32>,
    return
  }
  func.func @transform_0(%arg0: i32) -> (i32, i32) {
    %c0_i32 = arith.constant 0 : i32
    %c0_i32_0 = arith.constant 0 : i32
    %c0_i32_1 = arith.constant 0 : i32
    return %c0_i32, %c0_i32_0 : i32, i32
  }
  func.func @transform_1(%arg0: i32) -> (i32, i32) {
    %c0_i32 = arith.constant 0 : i32
    %c0_i32_0 = arith.constant 0 : i32
    %c0_i32_1 = arith.constant 0 : i32
    return %c0_i32, %c0_i32_0 : i32, i32
  }
  func.func @transform_2(%arg0: i32) -> (i32, i32) {
    %c0_i32 = arith.constant 0 : i32
    %c0_i32_0 = arith.constant 0 : i32
    %c0_i32_1 = arith.constant 0 : i32
    return %c0_i32, %c0_i32_0 : i32, i32
  }
  func.func @transform_3(%arg0: i32) -> (i32, i32, i32) {
    %c0_i32 = arith.constant 0 : i32
    %c0_i32_0 = arith.constant 0 : i32
    %c0_i32_1 = arith.constant 0 : i32
    %c0_i32_2 = arith.constant 0 : i32
    return %c0_i32, %c0_i32_0, %c0_i32_1 : i32, i32, i32
  }
  func.func @transform_4(%arg0: i32) -> (i32, i32) {
    %c0_i32 = arith.constant 0 : i32
    %c0_i32_0 = arith.constant 0 : i32
    %c0_i32_1 = arith.constant 0 : i32
    return %c0_i32, %c0_i32_0 : i32, i32
  }
  func.func @transform_5(%arg0: i32) -> (i32, i32, i32) {
    %c0_i32 = arith.constant 0 : i32
    %c0_i32_0 = arith.constant 0 : i32
    %c0_i32_1 = arith.constant 0 : i32
    %c0_i32_2 = arith.constant 0 : i32
    return %c0_i32, %c0_i32_0, %c0_i32_1 : i32, i32, i32
  }
  func.func @transform_6(%arg0: i32) -> (i32, i32) {
    %c0_i32 = arith.constant 0 : i32
    %c0_i32_0 = arith.constant 0 : i32
    %c0_i32_1 = arith.constant 0 : i32
    return %c0_i32, %c0_i32_0 : i32, i32
  }
  func.func @transform_7(%arg0: i32) -> (i32, i32) {
    %c0_i32 = arith.constant 0 : i32
    %c0_i32_0 = arith.constant 0 : i32
    %c0_i32_1 = arith.constant 0 : i32
    return %c0_i32, %c0_i32_0 : i32, i32
  }
  func.func @transform_8(%arg0: i32) -> (i32, i32, i32) {
    %c0_i32 = arith.constant 0 : i32
    %c0_i32_0 = arith.constant 0 : i32
    %c0_i32_1 = arith.constant 0 : i32
    %c0_i32_2 = arith.constant 0 : i32
    return %c0_i32, %c0_i32_0, %c0_i32_1 : i32, i32, i32
  }
  func.func @transform_9(%arg0: i32) -> (i32, i32, i32) {
    %c0_i32 = arith.constant 0 : i32
    %c0_i32_0 = arith.constant 0 : i32
    %c0_i32_1 = arith.constant 0 : i32
    %c0_i32_2 = arith.constant 0 : i32
    return %c0_i32, %c0_i32_0, %c0_i32_1 : i32, i32, i32
  }
  func.func @transform_10(%arg0: i32) -> (i32, i32, i32) {
    %c0_i32 = arith.constant 0 : i32
    %c0_i32_0 = arith.constant 0 : i32
    %c0_i32_1 = arith.constant 0 : i32
    %c0_i32_2 = arith.constant 0 : i32
    return %c0_i32, %c0_i32_0, %c0_i32_1 : i32, i32, i32
  }
  func.func @transform_11(%arg0: i32) -> (i32, i32, i32) {
    %c0_i32 = arith.constant 0 : i32
    %c0_i32_0 = arith.constant 0 : i32
    %c0_i32_1 = arith.constant 0 : i32
    %c0_i32_2 = arith.constant 0 : i32
    return %c0_i32, %c0_i32_0, %c0_i32_1 : i32, i32, i32
  }
  func.func @transform_12(%arg0: i32) -> (i32, i32, i32) {
    %c0_i32 = arith.constant 0 : i32
    %c0_i32_0 = arith.constant 0 : i32
    %c0_i32_1 = arith.constant 0 : i32
    %c0_i32_2 = arith.constant 0 : i32
    return %c0_i32, %c0_i32_0, %c0_i32_1 : i32, i32, i32
  }
  func.func @transform_13(%arg0: i32) -> (i32, i32, i32) {
    %c0_i32 = arith.constant 0 : i32
    %c0_i32_0 = arith.constant 0 : i32
    %c0_i32_1 = arith.constant 0 : i32
    %c0_i32_2 = arith.constant 0 : i32
    return %c0_i32, %c0_i32_0, %c0_i32_1 : i32, i32, i32
  }
  func.func @transform_14(%arg0: i32) -> (i32, i32, i32) {
    %c0_i32 = arith.constant 0 : i32
    %c0_i32_0 = arith.constant 0 : i32
    %c0_i32_1 = arith.constant 0 : i32
    %c0_i32_2 = arith.constant 0 : i32
    return %c0_i32, %c0_i32_0, %c0_i32_1 : i32, i32, i32
  }
  func.func @transform_15(%arg0: i32) -> (i32, i32, i32) {
    %c0_i32 = arith.constant 0 : i32
    %c0_i32_0 = arith.constant 0 : i32
    %c0_i32_1 = arith.constant 0 : i32
    %c0_i32_2 = arith.constant 0 : i32
    return %c0_i32, %c0_i32_0, %c0_i32_1 : i32, i32, i32
  }
  func.func @transform_16(%arg0: i32) -> (i32, i32) {
    %c0_i32 = arith.constant 0 : i32
    %c0_i32_0 = arith.constant 0 : i32
    %c0_i32_1 = arith.constant 0 : i32
    return %c0_i32, %c0_i32_0 : i32, i32
  }
  func.func @transform_17(%arg0: i32) -> (i32, i32) {
    %c0_i32 = arith.constant 0 : i32
    %c0_i32_0 = arith.constant 0 : i32
    %c0_i32_1 = arith.constant 0 : i32
    return %c0_i32, %c0_i32_0 : i32, i32
  }
  func.func @transform_18(%arg0: i32) -> (i32, i32, i32) {
    %c0_i32 = arith.constant 0 : i32
    %c0_i32_0 = arith.constant 0 : i32
    %c0_i32_1 = arith.constant 0 : i32
    %c0_i32_2 = arith.constant 0 : i32
    return %c0_i32, %c0_i32_0, %c0_i32_1 : i32, i32, i32
  }
  func.func @transform_19(%arg0: i32) -> (i32, i32, i32, i32) {
    %c0_i32 = arith.constant 0 : i32
    %c0_i32_0 = arith.constant 0 : i32
    %c0_i32_1 = arith.constant 0 : i32
    %c0_i32_2 = arith.constant 0 : i32
    %c0_i32_3 = arith.constant 0 : i32
    return %c0_i32, %c0_i32_0, %c0_i32_1, %c0_i32_2 : i32, i32, i32, i32
  }
  func.func @transform_20(%arg0: i32) -> (i32, i32, i32) {
    %c0_i32 = arith.constant 0 : i32
    %c0_i32_0 = arith.constant 0 : i32
    %c0_i32_1 = arith.constant 0 : i32
    %c0_i32_2 = arith.constant 0 : i32
    return %c0_i32, %c0_i32_0, %c0_i32_1 : i32, i32, i32
  }
  func.func @transform_21(%arg0: i32) -> (i32, i32, i32) {
    %c0_i32 = arith.constant 0 : i32
    %c0_i32_0 = arith.constant 0 : i32
    %c0_i32_1 = arith.constant 0 : i32
    %c0_i32_2 = arith.constant 0 : i32
    return %c0_i32, %c0_i32_0, %c0_i32_1 : i32, i32, i32
  }
  func.func @transform_22(%arg0: i32) -> (i32, i32) {
    %c0_i32 = arith.constant 0 : i32
    %c0_i32_0 = arith.constant 0 : i32
    %c0_i32_1 = arith.constant 0 : i32
    return %c0_i32, %c0_i32_0 : i32, i32
  }
  func.func @transform_23(%arg0: i32) -> (i32, i32) {
    %c0_i32 = arith.constant 0 : i32
    %c0_i32_0 = arith.constant 0 : i32
    %c0_i32_1 = arith.constant 0 : i32
    return %c0_i32, %c0_i32_0 : i32, i32
  }
}

</mosaic_0001>

<llo_original>
// kernel: tile.24
$region0: #{tile.24}
  #allocation0 [shape = 's32[1]{0}', space=sflag, size = 0x4, scoped, tag = 'scoped memory for tile.24']
  %s0 = inlined_call_operand.vmem [shape: f32[9,8], index: 0, kind: input, shape index: {}]
  %s1 = inlined_call_operand.vmem [shape: f32[2,9,4,8], index: 1, kind: output, shape index: {}]
  // Predicated region
  $region2: #{tile.24} parent=0 // pred_check
    _
  $region3: #{tile.24} parent=0 // pred_check_branch
    %3 = sbr.rel (0) target = $region5
  $region4: #{tile.24} parent=0 // pred_region
    _
  $region5: #{tile.24} parent=0 // pred_fallthru
    _
  %v4 = vld [vmem:[%s0] ss:$0 sm:$0xff]
  %5 = vst [vmem:[%s1] sm:$0x3] %v4
  %s6 = scalar_lea.vmem %s1, 16
  %7 = vst [vmem:[%s6] sm:$0x3] %v4
  %s8 = scalar_lea.vmem %s1, 32
  %9 = vst [vmem:[%s8] sm:$0x3] %v4
  %s10 = scalar_lea.vmem %s1, 48
  %11 = vst [vmem:[%s10] sm:$0x3] %v4
  %s12 = scalar_lea.vmem %s0, 1
  %v13 = vld [vmem:[%s12] ss:$0 sm:$0xff]
  %s14 = scalar_lea.vmem %s1, 2
  %15 = vst [vmem:[%s14] sm:$0x3] %v13
  %s16 = scalar_lea.vmem %s1, 18
  %17 = vst [vmem:[%s16] sm:$0x3] %v13
  %s18 = scalar_lea.vmem %s1, 34
  %19 = vst [vmem:[%s18] sm:$0x3] %v13
  %s20 = scalar_lea.vmem %s1, 50
  %21 = vst [vmem:[%s20] sm:$0x3] %v13
  %s22 = scalar_lea.vmem %s0, 2
  %v23 = vld [vmem:[%s22] ss:$0 sm:$0xff]
  %s24 = scalar_lea.vmem %s1, 4
  %25 = vst [vmem:[%s24] sm:$0x3] %v23
  %s26 = scalar_lea.vmem %s1, 20
  %27 = vst [vmem:[%s26] sm:$0x3] %v23
  %s28 = scalar_lea.vmem %s1, 36
  %29 = vst [vmem:[%s28] sm:$0x3] %v23
  %s30 = scalar_lea.vmem %s1, 52
  %31 = vst [vmem:[%s30] sm:$0x3] %v23
  %s32 = scalar_lea.vmem %s0, 3
  %v33 = vld [vmem:[%s32] ss:$0 sm:$0xff]
  %s34 = scalar_lea.vmem %s1, 6
  %35 = vst [vmem:[%s34] sm:$0x3] %v33
  %s36 = scalar_lea.vmem %s1, 22
  %37 = vst [vmem:[%s36] sm:$0x3] %v33
  %s38 = scalar_lea.vmem %s1, 38
  %39 = vst [vmem:[%s38] sm:$0x3] %v33
  %s40 = scalar_lea.vmem %s1, 54
  %41 = vst [vmem:[%s40] sm:$0x3] %v33
  %s42 = scalar_lea.vmem %s0, 4
  %v43 = vld [vmem:[%s42] ss:$0 sm:$0xff]
  %s44 = scalar_lea.vmem %s1, 8
  %45 = vst [vmem:[%s44] sm:$0x3] %v43
  %s46 = scalar_lea.vmem %s1, 24
  %47 = vst [vmem:[%s46] sm:$0x3] %v43
  %s48 = scalar_lea.vmem %s1, 40
  %49 = vst [vmem:[%s48] sm:$0x3] %v43
  %s50 = scalar_lea.vmem %s1, 56
  %51 = vst [vmem:[%s50] sm:$0x3] %v43
  %s52 = scalar_lea.vmem %s0, 5
  %v53 = vld [vmem:[%s52] ss:$0 sm:$0xff]
  %s54 = scalar_lea.vmem %s1, 10
  %55 = vst [vmem:[%s54] sm:$0x3] %v53
  %s56 = scalar_lea.vmem %s1, 26
  %57 = vst [vmem:[%s56] sm:$0x3] %v53
  %s58 = scalar_lea.vmem %s1, 42
  %59 = vst [vmem:[%s58] sm:$0x3] %v53
  %s60 = scalar_lea.vmem %s1, 58
  %61 = vst [vmem:[%s60] sm:$0x3] %v53
  %s62 = scalar_lea.vmem %s0, 6
  %v63 = vld [vmem:[%s62] ss:$0 sm:$0xff]
  %s64 = scalar_lea.vmem %s1, 12
  %65 = vst [vmem:[%s64] sm:$0x3] %v63
  %s66 = scalar_lea.vmem %s1, 28
  %67 = vst [vmem:[%s66] sm:$0x3] %v63
  %s68 = scalar_lea.vmem %s1, 44
  %69 = vst [vmem:[%s68] sm:$0x3] %v63
  %s70 = scalar_lea.vmem %s1, 60
  %71 = vst [vmem:[%s70] sm:$0x3] %v63
  %s72 = scalar_lea.vmem %s0, 7
  %v73 = vld [vmem:[%s72] ss:$0 sm:$0xff]
  %s74 = scalar_lea.vmem %s1, 14
  %75 = vst [vmem:[%s74] sm:$0x3] %v73
  %s76 = scalar_lea.vmem %s1, 30
  %77 = vst [vmem:[%s76] sm:$0x3] %v73
  %s78 = scalar_lea.vmem %s1, 46
  %79 = vst [vmem:[%s78] sm:$0x3] %v73
  %s80 = scalar_lea.vmem %s1, 62
  %81 = vst [vmem:[%s80] sm:$0x3] %v73

// kernel: tile.29
$region0: #{tile.29}
  %s0 = inlined_call_operand.vmem [shape: f32[2,9,4,8], index: 0, kind: input, shape index: {}]
  %s1 = inlined_call_operand.vmem [shape: f32[1,18,32], index: 1, kind: output, shape index: {}]
  $region1: #{tile.29} parent=0
    #allocation0 [shape = 'u8[131072]{0}', space=vmem, size = 0x20000, scoped, tag = 'scoped mem for input reshape']
    %s3 = sshllo.u32 0, 2
    %s4 = smul.addr 2, 31
    %s5 = scalar_lea.vmem %s0, %s4
    %v6 = vld [vmem:[%s5] sm:%s3]
    %s7 = scalar_lea.vmem [#allocation0], 248
    %8 = vst [vmem:[%s7] sm:%s3] %v6
    %s9 = smul.addr 2, 30
    %s10 = scalar_lea.vmem %s0, %s9
    %v11 = vld [vmem:[%s10] sm:%s3]
    %s12 = scalar_lea.vmem [#allocation0], 240
    %13 = vst [vmem:[%s12] sm:%s3] %v11
    %s14 = smul.addr 2, 29
    %s15 = scalar_lea.vmem %s0, %s14
    %v16 = vld [vmem:[%s15] sm:%s3]
    %s17 = scalar_lea.vmem [#allocation0], 232
    %18 = vst [vmem:[%s17] sm:%s3] %v16
    %s19 = smul.addr 2, 28
    %s20 = scalar_lea.vmem %s0, %s19
    %v21 = vld [vmem:[%s20] sm:%s3]
    %s22 = scalar_lea.vmem [#allocation0], 224
    %23 = vst [vmem:[%s22] sm:%s3] %v21
    %s24 = smul.addr 2, 27
    %s25 = scalar_lea.vmem %s0, %s24
    %v26 = vld [vmem:[%s25] sm:%s3]
    %s27 = scalar_lea.vmem [#allocation0], 216
    %28 = vst [vmem:[%s27] sm:%s3] %v26
    %s29 = smul.addr 2, 26
    %s30 = scalar_lea.vmem %s0, %s29
    %v31 = vld [vmem:[%s30] sm:%s3]
    %s32 = scalar_lea.vmem [#allocation0], 208
    %33 = vst [vmem:[%s32] sm:%s3] %v31
    %s34 = smul.addr 2, 25
    %s35 = scalar_lea.vmem %s0, %s34
    %v36 = vld [vmem:[%s35] sm:%s3]
    %s37 = scalar_lea.vmem [#allocation0], 200
    %38 = vst [vmem:[%s37] sm:%s3] %v36
    %s39 = smul.addr 2, 24
    %s40 = scalar_lea.vmem %s0, %s39
    %v41 = vld [vmem:[%s40] sm:%s3]
    %s42 = scalar_lea.vmem [#allocation0], 192
    %43 = vst [vmem:[%s42] sm:%s3] %v41
    %s44 = smul.addr 2, 23
    %s45 = scalar_lea.vmem %s0, %s44
    %v46 = vld [vmem:[%s45] sm:%s3]
    %s47 = scalar_lea.vmem [#allocation0], 184
    %48 = vst [vmem:[%s47] sm:%s3] %v46
    %s49 = smul.addr 2, 22
    %s50 = scalar_lea.vmem %s0, %s49
    %v51 = vld [vmem:[%s50] sm:%s3]
    %s52 = scalar_lea.vmem [#allocation0], 176
    %53 = vst [vmem:[%s52] sm:%s3] %v51
    %s54 = smul.addr 2, 21
    %s55 = scalar_lea.vmem %s0, %s54
    %v56 = vld [vmem:[%s55] sm:%s3]
    %s57 = scalar_lea.vmem [#allocation0], 168
    %58 = vst [vmem:[%s57] sm:%s3] %v56
    %s59 = smul.addr 2, 20
    %s60 = scalar_lea.vmem %s0, %s59
    %v61 = vld [vmem:[%s60] sm:%s3]
    %s62 = scalar_lea.vmem [#allocation0], 160
    %63 = vst [vmem:[%s62] sm:%s3] %v61
    %s64 = smul.addr 2, 19
    %s65 = scalar_lea.vmem %s0, %s64
    %v66 = vld [vmem:[%s65] sm:%s3]
    %s67 = scalar_lea.vmem [#allocation0], 152
    %68 = vst [vmem:[%s67] sm:%s3] %v66
    %s69 = smul.addr 2, 18
    %s70 = scalar_lea.vmem %s0, %s69
    %v71 = vld [vmem:[%s70] sm:%s3]
    %s72 = scalar_lea.vmem [#allocation0], 144
    %73 = vst [vmem:[%s72] sm:%s3] %v71
    %s74 = smul.addr 2, 17
    %s75 = scalar_lea.vmem %s0, %s74
    %v76 = vld [vmem:[%s75] sm:%s3]
    %s77 = scalar_lea.vmem [#allocation0], 136
    %78 = vst [vmem:[%s77] sm:%s3] %v76
    %s79 = smul.addr 2, 16
    %s80 = scalar_lea.vmem %s0, %s79
    %v81 = vld [vmem:[%s80] sm:%s3]
    %s82 = scalar_lea.vmem [#allocation0], 128
    %83 = vst [vmem:[%s82] sm:%s3] %v81
    %s84 = smul.addr 2, 15
    %s85 = scalar_lea.vmem %s0, %s84
    %v86 = vld [vmem:[%s85] sm:%s3]
    %s87 = scalar_lea.vmem [#allocation0], 120
    %88 = vst [vmem:[%s87] sm:%s3] %v86
    %s89 = smul.addr 2, 14
    %s90 = scalar_lea.vmem %s0, %s89
    %v91 = vld [vmem:[%s90] sm:%s3]
    %s92 = scalar_lea.vmem [#allocation0], 112
    %93 = vst [vmem:[%s92] sm:%s3] %v91
    %s94 = smul.addr 2, 13
    %s95 = scalar_lea.vmem %s0, %s94
    %v96 = vld [vmem:[%s95] sm:%s3]
    %s97 = scalar_lea.vmem [#allocation0], 104
    %98 = vst [vmem:[%s97] sm:%s3] %v96
    %s99 = smul.addr 2, 12
    %s100 = scalar_lea.vmem %s0, %s99
    %v101 = vld [vmem:[%s100] sm:%s3]
    %s102 = scalar_lea.vmem [#allocation0], 96
    %103 = vst [vmem:[%s102] sm:%s3] %v101
    %s104 = smul.addr 2, 11
    %s105 = scalar_lea.vmem %s0, %s104
    %v106 = vld [vmem:[%s105] sm:%s3]
    %s107 = scalar_lea.vmem [#allocation0], 88
    %108 = vst [vmem:[%s107] sm:%s3] %v106
    %s109 = smul.addr 2, 10
    %s110 = scalar_lea.vmem %s0, %s109
    %v111 = vld [vmem:[%s110] sm:%s3]
    %s112 = scalar_lea.vmem [#allocation0], 80
    %113 = vst [vmem:[%s112] sm:%s3] %v111
    %s114 = smul.addr 2, 9
    %s115 = scalar_lea.vmem %s0, %s114
    %v116 = vld [vmem:[%s115] sm:%s3]
    %s117 = scalar_lea.vmem [#allocation0], 72
    %118 = vst [vmem:[%s117] sm:%s3] %v116
    %s119 = smul.addr 2, 8
    %s120 = scalar_lea.vmem %s0, %s119
    %v121 = vld [vmem:[%s120] sm:%s3]
    %s122 = scalar_lea.vmem [#allocation0], 64
    %123 = vst [vmem:[%s122] sm:%s3] %v121
    %s124 = smul.addr 2, 7
    %s125 = scalar_lea.vmem %s0, %s124
    %v126 = vld [vmem:[%s125] sm:%s3]
    %s127 = scalar_lea.vmem [#allocation0], 56
    %128 = vst [vmem:[%s127] sm:%s3] %v126
    %s129 = smul.addr 2, 6
    %s130 = scalar_lea.vmem %s0, %s129
    %v131 = vld [vmem:[%s130] sm:%s3]
    %s132 = scalar_lea.vmem [#allocation0], 48
    %133 = vst [vmem:[%s132] sm:%s3] %v131
    %s134 = smul.addr 2, 5
    %s135 = scalar_lea.vmem %s0, %s134
    %v136 = vld [vmem:[%s135] sm:%s3]
    %s137 = scalar_lea.vmem [#allocation0], 40
    %138 = vst [vmem:[%s137] sm:%s3] %v136
    %s139 = smul.addr 2, 4
    %s140 = scalar_lea.vmem %s0, %s139
    %v141 = vld [vmem:[%s140] sm:%s3]
    %s142 = scalar_lea.vmem [#allocation0], 32
    %143 = vst [vmem:[%s142] sm:%s3] %v141
    %s144 = smul.addr 2, 3
    %s145 = scalar_lea.vmem %s0, %s144
    %v146 = vld [vmem:[%s145] sm:%s3]
    %s147 = scalar_lea.vmem [#allocation0], 24
    %148 = vst [vmem:[%s147] sm:%s3] %v146
    %s149 = smul.addr 2, 2
    %s150 = scalar_lea.vmem %s0, %s149
    %v151 = vld [vmem:[%s150] sm:%s3]
    %s152 = scalar_lea.vmem [#allocation0], 16
    %153 = vst [vmem:[%s152] sm:%s3] %v151
    %s154 = scalar_lea.vmem %s0, 2
    %v155 = vld [vmem:[%s154] sm:%s3]
    %s156 = scalar_lea.vmem [#allocation0], 8
    %157 = vst [vmem:[%s156] sm:%s3] %v155
    %v158 = vld [vmem:[%s0] sm:%s3]
    %159 = vst [vmem:[#allocation0] sm:%s3] %v158
    %v160 = vld [vmem:[#allocation0] ss:$8 sm:$0xf]
    %v161 = vld [vmem:[#allocation0] ss:$8 sm:$0xf0]
    %vm162 = vcmask 1047556
    %v163 = vsel %vm162, %v161, %v160
    %vm164 = vcmask 72704
    %165 = vst.msk [vmem:[%s1] sm:$0xff] %vm164, %v163
    %s166 = scalar_lea.vmem [#allocation0], 64
    %v167 = vld [vmem:[%s166] ss:$8 sm:$0xf]
    %s168 = scalar_lea.vmem [#allocation0], 64
    %v169 = vld [vmem:[%s168] ss:$8 sm:$0xf0]
    %vm170 = vcmask 1047556
    %v171 = vsel %vm170, %v169, %v167
    %vm172 = vcmask 72704
    %s173 = scalar_lea.vmem %s1, 8
    %174 = vst.msk [vmem:[%s173] sm:$0xff] %vm172, %v171
    %s175 = scalar_lea.vmem [#allocation0], 128
    %v176 = vld [vmem:[%s175] ss:$8 sm:$0xf]
    %s177 = scalar_lea.vmem [#allocation0], 128
    %v178 = vld [vmem:[%s177] ss:$8 sm:$0xf0]
    %vm179 = vcmask 1047556
    %v180 = vsel %vm179, %v178, %v176
    %vm181 = vcmask 72704
    %s182 = scalar_lea.vmem %s1, 16
    %183 = vst.msk [vmem:[%s182] sm:$0xff] %vm181, %v180
    %s184 = scalar_lea.vmem [#allocation0], 192
    %v185 = vld [vmem:[%s184] ss:$8 sm:$0xf]
    %s186 = scalar_lea.vmem [#allocation0], 192
    %v187 = vld [vmem:[%s186] ss:$8 sm:$0xf0]
    %vm188 = vcmask 1047556
    %v189 = vsel %vm188, %v187, %v185
    %vm190 = vcmask 72704
    %s191 = scalar_lea.vmem %s1, 24
    %192 = vst.msk [vmem:[%s191] sm:$0xff] %vm190, %v189
    %s193 = scalar_lea.vmem [#allocation0], 1
    %v194 = vld [vmem:[%s193] ss:$8 sm:$0xf]
    %s195 = scalar_lea.vmem [#allocation0], 1
    %v196 = vld [vmem:[%s195] ss:$8 sm:$0xf0]
    %vm197 = vcmask 1047556
    %v198 = vsel %vm197, %v196, %v194
    %199 = vrot.lane.b32.xlu0 %v198, 9
    %v200 = vpop.permute.xlu0 %199
    %vm201 = vcmask 146504
    %202 = vst.msk [vmem:[%s1] sm:$0xff] %vm201, %v200
    %s203 = scalar_lea.vmem [#allocation0], 65
    %v204 = vld [vmem:[%s203] ss:$8 sm:$0xf]
    %s205 = scalar_lea.vmem [#allocation0], 65
    %v206 = vld [vmem:[%s205] ss:$8 sm:$0xf0]
    %vm207 = vcmask 1047556
    %v208 = vsel %vm207, %v206, %v204
    %209 = vrot.lane.b32.xlu0 %v208, 9
    %v210 = vpop.permute.xlu0 %209
    %vm211 = vcmask 146504
    %s212 = scalar_lea.vmem %s1, 8
    %213 = vst.msk [vmem:[%s212] sm:$0xff] %vm211, %v210
    %s214 = scalar_lea.vmem [#allocation0], 129
    %v215 = vld [vmem:[%s214] ss:$8 sm:$0xf]
    %s216 = scalar_lea.vmem [#allocation0], 129
    %v217 = vld [vmem:[%s216] ss:$8 sm:$0xf0]
    %vm218 = vcmask 1047556
    %v219 = vsel %vm218, %v217, %v215
    %220 = vrot.lane.b32.xlu0 %v219, 9
    %v221 = vpop.permute.xlu0 %220
    %vm222 = vcmask 146504
    %s223 = scalar_lea.vmem %s1, 16
    %224 = vst.msk [vmem:[%s223] sm:$0xff] %vm222, %v221
    %s225 = scalar_lea.vmem [#allocation0], 193
    %v226 = vld [vmem:[%s225] ss:$8 sm:$0xf]
    %s227 = scalar_lea.vmem [#allocation0], 193
    %v228 = vld [vmem:[%s227] ss:$8 sm:$0xf0]
    %vm229 = vcmask 1047556
    %v230 = vsel %vm229, %v228, %v226
    %231 = vrot.lane.b32.xlu0 %v230, 9
    %v232 = vpop.permute.xlu0 %231
    %vm233 = vcmask 146504
    %s234 = scalar_lea.vmem %s1, 24
    %235 = vst.msk [vmem:[%s234] sm:$0xff] %vm233, %v232

// kernel: memory_transformer_forward.1
$region0: #{memory_transformer_forward.1}
  #allocation0 [shape = 'u32[]', space=smem, size = 0x4, offset = 0x4, fixed_abs, tag = 'smem constant byte address 0x4 - core index']
  #allocation1 [shape = 'u32[144,128]{1,0:T(1,128)}', space=vmem, size = 0x12000, scoped, tag = 'internal scratch']
  %s0 = inlined_call_operand.vmem [shape: f32[16,64], index: 0, kind: input, shape index: {}]
  %s1 = inlined_call_operand.vmem [shape: f32[18,32], index: 1, kind: input, shape index: {}]
  %s2 = inlined_call_operand.vmem [shape: f32[18,64], index: 2, kind: input, shape index: {}]
  %s3 = inlined_call_operand.vmem [shape: f32[2,18,32], index: 3, kind: input, shape index: {}]
  %s4 = inlined_call_operand.vmem [shape: f32[18,18], index: 4, kind: input, shape index: {}]
  %s5 = inlined_call_operand.vmem [shape: f32[4,1,32], index: 5, kind: input, shape index: {}]
  %s6 = inlined_call_operand.vmem [shape: f32[2,16], index: 6, kind: input, shape index: {}]
  %s7 = inlined_call_operand.vmem [shape: f32[18,2], index: 7, kind: input, shape index: {}]
  %s8 = inlined_call_operand.vmem [shape: bf16[2,16,16], index: 8, kind: input, shape index: {}]
  %s9 = inlined_call_operand.vmem [shape: f32[2,16,1], index: 9, kind: input, shape index: {}]
  %s10 = inlined_call_operand.vmem [shape: f32[2,5,64], index: 10, kind: input, shape index: {}]
  %s11 = inlined_call_operand.vmem [shape: bf16[2,64,256], index: 11, kind: input, shape index: {}]
  %s12 = inlined_call_operand.vmem [shape: f32[2,1,256], index: 12, kind: input, shape index: {}]
  %s13 = inlined_call_operand.vmem [shape: bf16[2,256,64], index: 13, kind: input, shape index: {}]
  %s14 = inlined_call_operand.vmem [shape: bf16[2,64,64], index: 14, kind: input, shape index: {}]
  %s15 = inlined_call_operand.vmem [shape: f32[2,1,64], index: 15, kind: input, shape index: {}]
  %s16 = inlined_call_operand.vmem [shape: bf16[64,32], index: 16, kind: input, shape index: {}]
  %s17 = inlined_call_operand.vmem [shape: f32[1,32], index: 17, kind: input, shape index: {}]
  %s18 = inlined_call_operand.vmem [shape: f32[2,2,32], index: 18, kind: input, shape index: {}]
  %s19 = inlined_call_operand.vmem [shape: bf16[2,6,32,32], index: 19, kind: input, shape index: {}]
  %s20 = inlined_call_operand.vmem [shape: bf16[2,32,256], index: 20, kind: input, shape index: {}]
  %s21 = inlined_call_operand.vmem [shape: bf16[2,128,32], index: 21, kind: input, shape index: {}]
  %s22 = inlined_call_operand.vmem [shape: bf16[32,64], index: 22, kind: input, shape index: {}]
  %s23 = inlined_call_operand.vmem [shape: f32[19,64], index: 23, kind: output, shape index: {}]
  %s24 = sld [smem:[#allocation0]]
  $region102: #{memory_transformer_forward.1} parent=0
    _
  %s26 = ssub.s32 1, %s24
  %s27 = scalar_select 0, %s26, %s24
  // Predicated region
  $region2: #{memory_transformer_forward.1} parent=0 // pred_check
    _
  $region3: #{memory_transformer_forward.1} parent=0 // pred_check_branch
    %29 = sbr.rel (0) target = $region5
  $region4: #{memory_transformer_forward.1} parent=0 // pred_region
    _
  $region5: #{memory_transformer_forward.1} parent=0 // pred_fallthru
    _
  // Predicated region
  $region6: #{memory_transformer_forward.1} parent=0 // pred_check
    _
  $region7: #{memory_transformer_forward.1} parent=0 // pred_check_branch
    %31 = sbr.rel (0) target = $region9
  $region8: #{memory_transformer_forward.1} parent=0 // pred_region
    _
  $region9: #{memory_transformer_forward.1} parent=0 // pred_fallthru
    _
  // Predicated region
  $region10: #{memory_transformer_forward.1} parent=0 // pred_check
    _
  $region11: #{memory_transformer_forward.1} parent=0 // pred_check_branch
    %33 = sbr.rel (0) target = $region13
  $region12: #{memory_transformer_forward.1} parent=0 // pred_region
    _
  $region13: #{memory_transformer_forward.1} parent=0 // pred_fallthru
    _
  // Predicated region
  $region14: #{memory_transformer_forward.1} parent=0 // pred_check
    _
  $region15: #{memory_transformer_forward.1} parent=0 // pred_check_branch
    %35 = sbr.rel (0) target = $region17
  $region16: #{memory_transformer_forward.1} parent=0 // pred_region
    _
  $region17: #{memory_transformer_forward.1} parent=0 // pred_fallthru
    _
  // Predicated region
  $region18: #{memory_transformer_forward.1} parent=0 // pred_check
    _
  $region19: #{memory_transformer_forward.1} parent=0 // pred_check_branch
    %37 = sbr.rel (0) target = $region21
  $region20: #{memory_transformer_forward.1} parent=0 // pred_region
    _
  $region21: #{memory_transformer_forward.1} parent=0 // pred_fallthru
    _
  // Predicated region
  $region22: #{memory_transformer_forward.1} parent=0 // pred_check
    _
  $region23: #{memory_transformer_forward.1} parent=0 // pred_check_branch
    %39 = sbr.rel (0) target = $region25
  $region24: #{memory_transformer_forward.1} parent=0 // pred_region
    _
  $region25: #{memory_transformer_forward.1} parent=0 // pred_fallthru
    _
  // Predicated region
  $region26: #{memory_transformer_forward.1} parent=0 // pred_check
    _
  $region27: #{memory_transformer_forward.1} parent=0 // pred_check_branch
    %41 = sbr.rel (0) target = $region29
  $region28: #{memory_transformer_forward.1} parent=0 // pred_region
    _
  $region29: #{memory_transformer_forward.1} parent=0 // pred_fallthru
    _
  // Predicated region
  $region30: #{memory_transformer_forward.1} parent=0 // pred_check
    _
  $region31: #{memory_transformer_forward.1} parent=0 // pred_check_branch
    %43 = sbr.rel (0) target = $region33
  $region32: #{memory_transformer_forward.1} parent=0 // pred_region
    _
  $region33: #{memory_transformer_forward.1} parent=0 // pred_fallthru
    _
  // Predicated region
  $region34: #{memory_transformer_forward.1} parent=0 // pred_check
    _
  $region35: #{memory_transformer_forward.1} parent=0 // pred_check_branch
    %45 = sbr.rel (0) target = $region37
  $region36: #{memory_transformer_forward.1} parent=0 // pred_region
    _
  $region37: #{memory_transformer_forward.1} parent=0 // pred_fallthru
    _
  // Predicated region
  $region38: #{memory_transformer_forward.1} parent=0 // pred_check
    _
  $region39: #{memory_transformer_forward.1} parent=0 // pred_check_branch
    %47 = sbr.rel (0) target = $region41
  $region40: #{memory_transformer_forward.1} parent=0 // pred_region
    _
  $region41: #{memory_transformer_forward.1} parent=0 // pred_fallthru
    _
  // Predicated region
  $region42: #{memory_transformer_forward.1} parent=0 // pred_check
    _
  $region43: #{memory_transformer_forward.1} parent=0 // pred_check_branch
    %49 = sbr.rel (0) target = $region45
  $region44: #{memory_transformer_forward.1} parent=0 // pred_region
    _
  $region45: #{memory_transformer_forward.1} parent=0 // pred_fallthru
    _
  // Predicated region
  $region46: #{memory_transformer_forward.1} parent=0 // pred_check
    _
  $region47: #{memory_transformer_forward.1} parent=0 // pred_check_branch
    %51 = sbr.rel (0) target = $region49
  $region48: #{memory_transformer_forward.1} parent=0 // pred_region
    _
  $region49: #{memory_transformer_forward.1} parent=0 // pred_fallthru
    _
  // Predicated region
  $region50: #{memory_transformer_forward.1} parent=0 // pred_check
    _
  $region51: #{memory_transformer_forward.1} parent=0 // pred_check_branch
    %53 = sbr.rel (0) target = $region53
  $region52: #{memory_transformer_forward.1} parent=0 // pred_region
    _
  $region53: #{memory_transformer_forward.1} parent=0 // pred_fallthru
    _
  // Predicated region
  $region54: #{memory_transformer_forward.1} parent=0 // pred_check
    _
  $region55: #{memory_transformer_forward.1} parent=0 // pred_check_branch
    %55 = sbr.rel (0) target = $region57
  $region56: #{memory_transformer_forward.1} parent=0 // pred_region
    _
  $region57: #{memory_transformer_forward.1} parent=0 // pred_fallthru
    _
  // Predicated region
  $region58: #{memory_transformer_forward.1} parent=0 // pred_check
    _
  $region59: #{memory_transformer_forward.1} parent=0 // pred_check_branch
    %57 = sbr.rel (0) target = $region61
  $region60: #{memory_transformer_forward.1} parent=0 // pred_region
    _
  $region61: #{memory_transformer_forward.1} parent=0 // pred_fallthru
    _
  // Predicated region
  $region62: #{memory_transformer_forward.1} parent=0 // pred_check
    _
  $region63: #{memory_transformer_forward.1} parent=0 // pred_check_branch
    %59 = sbr.rel (0) target = $region65
  $region64: #{memory_transformer_forward.1} parent=0 // pred_region
    _
  $region65: #{memory_transformer_forward.1} parent=0 // pred_fallthru
    _
  // Predicated region
  $region66: #{memory_transformer_forward.1} parent=0 // pred_check
    _
  $region67: #{memory_transformer_forward.1} parent=0 // pred_check_branch
    %61 = sbr.rel (0) target = $region69
  $region68: #{memory_transformer_forward.1} parent=0 // pred_region
    _
  $region69: #{memory_transformer_forward.1} parent=0 // pred_fallthru
    _
  // Predicated region
  $region70: #{memory_transformer_forward.1} parent=0 // pred_check
    _
  $region71: #{memory_transformer_forward.1} parent=0 // pred_check_branch
    %63 = sbr.rel (0) target = $region73
  $region72: #{memory_transformer_forward.1} parent=0 // pred_region
    _
  $region73: #{memory_transformer_forward.1} parent=0 // pred_fallthru
    _
  // Predicated region
  $region74: #{memory_transformer_forward.1} parent=0 // pred_check
    _
  $region75: #{memory_transformer_forward.1} parent=0 // pred_check_branch
    %65 = sbr.rel (0) target = $region77
  $region76: #{memory_transformer_forward.1} parent=0 // pred_region
    _
  $region77: #{memory_transformer_forward.1} parent=0 // pred_fallthru
    _
  // Predicated region
  $region78: #{memory_transformer_forward.1} parent=0 // pred_check
    _
  $region79: #{memory_transformer_forward.1} parent=0 // pred_check_branch
    %67 = sbr.rel (0) target = $region81
  $region80: #{memory_transformer_forward.1} parent=0 // pred_region
    _
  $region81: #{memory_transformer_forward.1} parent=0 // pred_fallthru
    _
  // Predicated region
  $region82: #{memory_transformer_forward.1} parent=0 // pred_check
    _
  $region83: #{memory_transformer_forward.1} parent=0 // pred_check_branch
    %69 = sbr.rel (0) target = $region85
  $region84: #{memory_transformer_forward.1} parent=0 // pred_region
    _
  $region85: #{memory_transformer_forward.1} parent=0 // pred_fallthru
    _
  // Predicated region
  $region86: #{memory_transformer_forward.1} parent=0 // pred_check
    _
  $region87: #{memory_transformer_forward.1} parent=0 // pred_check_branch
    %71 = sbr.rel (0) target = $region89
  $region88: #{memory_transformer_forward.1} parent=0 // pred_region
    _
  $region89: #{memory_transformer_forward.1} parent=0 // pred_fallthru
    _
  // Predicated region
  $region90: #{memory_transformer_forward.1} parent=0 // pred_check
    _
  $region91: #{memory_transformer_forward.1} parent=0 // pred_check_branch
    %73 = sbr.rel (0) target = $region93
  $region92: #{memory_transformer_forward.1} parent=0 // pred_region
    _
  $region93: #{memory_transformer_forward.1} parent=0 // pred_fallthru
    _
  %v75 = vld [vmem:[%s0] sm:$0xff]
  %v76 = vld [vmem:[%s0 + $0x8] sm:$0xff]
  %v77 = vld [vmem:[%s10] sm:$0x1f]
  %vm78 = vcmask 523264
  %v79 = vsel %vm78, %v75, 0.0
  %80 = vadd.xlane.f32.xlu0 %v79
  %v81 = vpop.xlane.xlu0 %80
  %v82 = vsel %vm78, %v76, 0.0
  %83 = vadd.xlane.f32.xlu0 %v82
  %v84 = vpop.xlane.xlu0 %83
  %v85 = vrcp.pop 64.0
  %v86 = vmul.f32 %v81, %v85
  %v87 = vmul.f32 %v84, %v85
  %v88 = vsub.f32 %v75, %v86
  %v89 = vsub.f32 %v76, %v87
  %v90 = vmul.f32 %v88, %v88
  %v91 = vmul.f32 %v89, %v89
  %v92 = vsel %vm78, %v90, 0.0
  %93 = vadd.xlane.f32.xlu0 %v92
  %v94 = vpop.xlane.xlu0 %93
  %v95 = vsel %vm78, %v91, 0.0
  %96 = vadd.xlane.f32.xlu0 %v95
  %v97 = vpop.xlane.xlu0 %96
  %v98 = vmul.f32 %v94, %v85
  %v99 = vmul.f32 %v97, %v85
  %v100 = vadd.f32 %v98, 1e-05
  %v101 = vadd.f32 %v99, 1e-05
  %v102 = vrsqrt.pop %v100
  %v103 = vrsqrt.pop %v101
  %v104 = vmul.f32 %v88, %v102
  %v105 = vmul.f32 %v89, %v103
  %v106 = vlaneseq
  %v107 = vshrl.u32 %v106, 7
  %v108 = vsub.s32 0, %v107
  %v109 = vrot.slane %v77, %v108
  %v110 = vmul.f32 %v104, %v109
  %v111 = vmul.f32 %v105, %v109
  %v112 = vlaneseq
  %v113 = vshrl.u32 %v112, 7
  %v114 = vsub.s32 1, %v113
  %v115 = vrot.slane %v77, %v114
  %v116 = vadd.f32 %v110, %v115
  %v117 = vadd.f32 %v111, %v115
  %v118 = vld [vmem:[%s8] sm:$0xf]
  %v119 = vld [vmem:[%s8 + $0x4] sm:$0xf]
  %v120 = vpack.c.bf16 %v117, %v116
  %v121 = vld [vmem:[%s9] sm:$0xff]
  %v122 = vld [vmem:[%s9 + $0x8] sm:$0xff]
  %124 = vset.pattern.permute.xlu0 0
  %125 = vperm.xlu0 %124, %v121
  %v126 = vpop.permute.xlu0 %125
  %129 = vset.pattern.permute.xlu0 0
  %130 = vperm.xlu0 %129, %v122
  %v131 = vpop.permute.xlu0 %130
  %v135 = vunpack.c.l.b16 %v118
  %v136 = vunpack.c.l.b16 %v119
  %v137 = vpack.c.b16 %v136, %v135
  %vm138 = vcmask 130048
  %v140 = vsel %vm138, %v137, 0
  %142 = vmatprep.subr.bf16.mxu0 0
  %143 = vmatpush1.bf16.msra.mxu0 %v120
  %144 = vmatprep.subr.bf16.mxu0 0
  %145 = vmatpush1.bf16.msra.mxu0 0
  %146 = vmatprep.subr.bf16.mxu0 0
  %147 = vmatpush1.bf16.msra.mxu0 0
  %148 = vmatprep.subr.bf16.mxu0 0
  %149 = vmatpush1.bf16.msra.mxu0 0
  %150 = vmatprep.subr.bf16.mxu0 0
  %151 = vmatpush1.bf16.msra.mxu0 0
  %152 = vmatprep.subr.bf16.mxu0 0
  %153 = vmatpush1.bf16.msra.mxu0 0
  %154 = vmatprep.subr.bf16.mxu0 0
  %155 = vmatpush1.bf16.msra.mxu0 0
  %156 = vmatprep.subr.bf16.mxu0 0
  %157 = vmatpush1.bf16.msra.mxu0 0
  %158 = vmatprep.subr.bf16.mxu0 0
  %159 = vmatpush1.bf16.msra.mxu0 0
  %160 = vmatprep.subr.bf16.mxu0 0
  %161 = vmatpush1.bf16.msra.mxu0 0
  %162 = vmatprep.subr.bf16.mxu0 0
  %163 = vmatpush1.bf16.msra.mxu0 0
  %164 = vmatprep.subr.bf16.mxu0 0
  %165 = vmatpush1.bf16.msra.mxu0 0
  %166 = vmatprep.subr.bf16.mxu0 0
  %167 = vmatpush1.bf16.msra.mxu0 0
  %168 = vmatprep.subr.bf16.mxu0 0
  %169 = vmatpush1.bf16.msra.mxu0 0
  %170 = vmatprep.subr.bf16.mxu0 0
  %171 = vmatpush1.bf16.msra.mxu0 0
  %172 = vmatprep.subr.bf16.mxu0 0
  %173 = vmatpush1.bf16.msra.mxu0 0
  %174 = vmatprep.mubr.bf16.mxu0 0
  %175 = vmatmul.mubr.bf16.gmra.mrb[0].mxu0 %v140
  %v176 = vpop.f32.mrb[0].mxu0
  %v177 = vadd.f32 %v126, %v176
  %v178 = vpop.f32.mrb[0].mxu0
  %v179 = vpop.f32.mrb[0].mxu0
  %v180 = vadd.f32 %v131, %v179
  %v181 = vpop.f32.mrb[0].mxu0
  %182 = vdwg.mxu0
  %v183 = vadd.f32 %v177, %v75
  %v184 = vadd.f32 %v180, %v76
  %v185 = vsel %vm78, %v183, 0.0
  %186 = vadd.xlane.f32.xlu0 %v185
  %v187 = vpop.xlane.xlu0 %186
  %v188 = vsel %vm78, %v184, 0.0
  %189 = vadd.xlane.f32.xlu0 %v188
  %v190 = vpop.xlane.xlu0 %189
  %v191 = vmul.f32 %v187, %v85
  %v192 = vmul.f32 %v190, %v85
  %v193 = vsub.f32 %v183, %v191
  %v194 = vsub.f32 %v184, %v192
  %v195 = vmul.f32 %v193, %v193
  %v196 = vmul.f32 %v194, %v194
  %v197 = vsel %vm78, %v195, 0.0
  %198 = vadd.xlane.f32.xlu0 %v197
  %v199 = vpop.xlane.xlu0 %198
  %v200 = vsel %vm78, %v196, 0.0
  %201 = vadd.xlane.f32.xlu0 %v200
  %v202 = vpop.xlane.xlu0 %201
  %v203 = vmul.f32 %v199, %v85
  %v204 = vmul.f32 %v202, %v85
  %v205 = vadd.f32 %v203, 1e-05
  %v206 = vadd.f32 %v204, 1e-05
  %v207 = vrsqrt.pop %v205
  %v208 = vrsqrt.pop %v206
  %v209 = vmul.f32 %v193, %v207
  %v210 = vmul.f32 %v194, %v208
  %v211 = vlaneseq
  %v212 = vshrl.u32 %v211, 7
  %v213 = vsub.s32 2, %v212
  %v214 = vrot.slane %v77, %v213
  %v215 = vmul.f32 %v209, %v214
  %v216 = vmul.f32 %v210, %v214
  %v217 = vlaneseq
  %v218 = vshrl.u32 %v217, 7
  %v219 = vsub.s32 3, %v218
  %v220 = vrot.slane %v77, %v219
  %v221 = vadd.f32 %v215, %v220
  %v222 = vadd.f32 %v216, %v220
  %v223 = vpack.c.bf16 %v222, %v221
  %v224 = vld [vmem:[%s11] sm:$0xff]
  %v225 = vld [vmem:[%s11 + $0x8] sm:$0xff]
  %v226 = vld [vmem:[%s11 + $0x10] sm:$0xff]
  %v227 = vld [vmem:[%s11 + $0x18] sm:$0xff]
  %v228 = vld [vmem:[%s11 + $0x20] sm:$0xff]
  %v229 = vld [vmem:[%s11 + $0x28] sm:$0xff]
  %v230 = vld [vmem:[%s11 + $0x30] sm:$0xff]
  %v231 = vld [vmem:[%s11 + $0x38] sm:$0xff]
  %v232 = vld [vmem:[%s12] sm:$0x3]
  %v234 = vlaneseq
  %v235 = vshrl.u32 %v234, 7
  %v236 = vsub.s32 0, %v235
  %v237 = vrot.slane %v232, %v236
  %v238 = vlaneseq
  %v239 = vshrl.u32 %v238, 7
  %v240 = vsub.s32 1, %v239
  %v241 = vrot.slane %v232, %v240
  %v252 = vunpack.c.l.b16 %v224
  %v253 = vunpack.c.h.b16 %v224
  %v254 = vunpack.c.l.b16 %v225
  %v255 = vunpack.c.h.b16 %v225
  %v256 = vunpack.c.l.b16 %v226
  %v257 = vunpack.c.h.b16 %v226
  %v258 = vunpack.c.l.b16 %v227
  %v259 = vunpack.c.h.b16 %v227
  %v260 = vunpack.c.l.b16 %v228
  %v261 = vunpack.c.h.b16 %v228
  %v262 = vunpack.c.l.b16 %v229
  %v263 = vunpack.c.h.b16 %v229
  %v264 = vunpack.c.l.b16 %v230
  %v265 = vunpack.c.h.b16 %v230
  %v266 = vunpack.c.l.b16 %v231
  %v267 = vunpack.c.h.b16 %v231
  %v268 = vpack.c.b16 %v254, %v252
  %v269 = vpack.c.b16 %v255, %v253
  %v270 = vpack.c.b16 %v258, %v256
  %v271 = vpack.c.b16 %v259, %v257
  %v272 = vpack.c.b16 %v262, %v260
  %v273 = vpack.c.b16 %v263, %v261
  %v274 = vpack.c.b16 %v266, %v264
  %v275 = vpack.c.b16 %v267, %v265
  %v285 = vsel %vm78, %v223, 0
  %287 = vmatprep.subr.bf16.mxu0 %v269
  %288 = vmatpush1.bf16.msra.mxu0 %v268
  %289 = vmatprep.subr.bf16.mxu0 %v271
  %290 = vmatpush1.bf16.msra.mxu0 %v270
  %291 = vmatprep.subr.bf16.mxu0 %v273
  %292 = vmatpush1.bf16.msra.mxu0 %v272
  %293 = vmatprep.subr.bf16.mxu0 %v275
  %294 = vmatpush1.bf16.msra.mxu0 %v274
  %295 = vmatprep.subr.bf16.mxu0 0
  %296 = vmatpush1.bf16.msra.mxu0 0
  %297 = vmatprep.subr.bf16.mxu0 0
  %298 = vmatpush1.bf16.msra.mxu0 0
  %299 = vmatprep.subr.bf16.mxu0 0
  %300 = vmatpush1.bf16.msra.mxu0 0
  %301 = vmatprep.subr.bf16.mxu0 0
  %302 = vmatpush1.bf16.msra.mxu0 0
  %303 = vmatprep.subr.bf16.mxu0 0
  %304 = vmatpush1.bf16.msra.mxu0 0
  %305 = vmatprep.subr.bf16.mxu0 0
  %306 = vmatpush1.bf16.msra.mxu0 0
  %307 = vmatprep.subr.bf16.mxu0 0
  %308 = vmatpush1.bf16.msra.mxu0 0
  %309 = vmatprep.subr.bf16.mxu0 0
  %310 = vmatpush1.bf16.msra.mxu0 0
  %311 = vmatprep.subr.bf16.mxu0 0
  %312 = vmatpush1.bf16.msra.mxu0 0
  %313 = vmatprep.subr.bf16.mxu0 0
  %314 = vmatpush1.bf16.msra.mxu0 0
  %315 = vmatprep.subr.bf16.mxu0 0
  %316 = vmatpush1.bf16.msra.mxu0 0
  %317 = vmatprep.subr.bf16.mxu0 0
  %318 = vmatpush1.bf16.msra.mxu0 0
  %319 = vmatprep.mubr.bf16.mxu0 0
  %320 = vmatmul.mubr.bf16.gmra.mrb[0].mxu0 %v285
  %v321 = vpop.f32.mrb[0].mxu0
  %v322 = vadd.f32 %v237, %v321
  %v323 = vpop.f32.mrb[0].mxu0
  %v324 = vadd.f32 %v241, %v323
  %v325 = vpop.f32.mrb[0].mxu0
  %v326 = vadd.f32 %v237, %v325
  %v327 = vpop.f32.mrb[0].mxu0
  %v328 = vadd.f32 %v241, %v327
  %329 = vdwg.mxu0
  %v330 = vmul.f32 %v322, 0.5
  %v331 = vmul.f32 %v324, 0.5
  %v332 = vmul.f32 %v326, 0.5
  %v333 = vmul.f32 %v328, 0.5
  %v334 = vmul.f32 %v322, 0.044715
  %v335 = vmul.f32 %v324, 0.044715
  %v336 = vmul.f32 %v326, 0.044715
  %v337 = vmul.f32 %v328, 0.044715
  %v338 = vmul.f32 %v334, %v322
  %v339 = vmul.f32 %v335, %v324
  %v340 = vmul.f32 %v336, %v326
  %v341 = vmul.f32 %v337, %v328
  %v342 = vmul.f32 %v338, %v322
  %v343 = vmul.f32 %v339, %v324
  %v344 = vmul.f32 %v340, %v326
  %v345 = vmul.f32 %v341, %v328
  %v346 = vadd.f32 %v322, %v342
  %v347 = vadd.f32 %v324, %v343
  %v348 = vadd.f32 %v326, %v344
  %v349 = vadd.f32 %v328, %v345
  %v350 = vmul.f32 %v346, 0.7978846
  %v351 = vmul.f32 %v347, 0.7978846
  %v352 = vmul.f32 %v348, 0.7978846
  %v353 = vmul.f32 %v349, 0.7978846
  %v354 = vtanh.pop %v350
  %v355 = vtanh.pop %v351
  %v356 = vtanh.pop %v352
  %v357 = vtanh.pop %v353
  %v358 = vadd.f32 %v354, 1.0
  %v359 = vadd.f32 %v355, 1.0
  %v360 = vadd.f32 %v356, 1.0
  %v361 = vadd.f32 %v357, 1.0
  %v362 = vmul.f32 %v330, %v358
  %v363 = vmul.f32 %v331, %v359
  %v364 = vmul.f32 %v332, %v360
  %v365 = vmul.f32 %v333, %v361
  %v366 = vpack.c.bf16 %v364, %v362
  %v367 = vpack.c.bf16 %v365, %v363
  %v368 = vld [vmem:[%s13] sm:$0xf]
  %v369 = vld [vmem:[%s13 + $0x4] sm:$0xf]
  %v370 = vld [vmem:[%s13 + $0x8] sm:$0xf]
  %v371 = vld [vmem:[%s13 + $0xc] sm:$0xf]
  %v372 = vld [vmem:[%s13 + $0x10] sm:$0xf]
  %v373 = vld [vmem:[%s13 + $0x14] sm:$0xf]
  %v374 = vld [vmem:[%s13 + $0x18] sm:$0xf]
  %v375 = vld [vmem:[%s13 + $0x1c] sm:$0xf]
  %v376 = vld [vmem:[%s13 + $0x20] sm:$0xf]
  %v377 = vld [vmem:[%s13 + $0x24] sm:$0xf]
  %v378 = vld [vmem:[%s13 + $0x28] sm:$0xf]
  %v379 = vld [vmem:[%s13 + $0x2c] sm:$0xf]
  %v380 = vld [vmem:[%s13 + $0x30] sm:$0xf]
  %v381 = vld [vmem:[%s13 + $0x34] sm:$0xf]
  %v382 = vld [vmem:[%s13 + $0x38] sm:$0xf]
  %v383 = vld [vmem:[%s13 + $0x3c] sm:$0xf]
  %v384 = vld [vmem:[%s13 + $0x40] sm:$0xf]
  %v385 = vld [vmem:[%s13 + $0x44] sm:$0xf]
  %v386 = vld [vmem:[%s13 + $0x48] sm:$0xf]
  %v387 = vld [vmem:[%s13 + $0x4c] sm:$0xf]
  %v388 = vld [vmem:[%s13 + $0x50] sm:$0xf]
  %v389 = vld [vmem:[%s13 + $0x54] sm:$0xf]
  %v390 = vld [vmem:[%s13 + $0x58] sm:$0xf]
  %v391 = vld [vmem:[%s13 + $0x5c] sm:$0xf]
  %v392 = vld [vmem:[%s13 + $0x60] sm:$0xf]
  %v393 = vld [vmem:[%s13 + $0x64] sm:$0xf]
  %v394 = vld [vmem:[%s13 + $0x68] sm:$0xf]
  %v395 = vld [vmem:[%s13 + $0x6c] sm:$0xf]
  %v396 = vld [vmem:[%s13 + $0x70] sm:$0xf]
  %v397 = vld [vmem:[%s13 + $0x74] sm:$0xf]
  %v398 = vld [vmem:[%s13 + $0x78] sm:$0xf]
  %v399 = vld [vmem:[%s13 + $0x7c] sm:$0xf]
  %v400 = vlaneseq
  %v401 = vshrl.u32 %v400, 7
  %v402 = vsub.s32 4, %v401
  %v403 = vrot.slane %v77, %v402
  %v436 = vunpack.c.l.b16 %v368
  %v437 = vunpack.c.l.b16 %v369
  %v438 = vunpack.c.l.b16 %v370
  %v439 = vunpack.c.l.b16 %v371
  %v440 = vunpack.c.l.b16 %v372
  %v441 = vunpack.c.l.b16 %v373
  %v442 = vunpack.c.l.b16 %v374
  %v443 = vunpack.c.l.b16 %v375
  %v444 = vunpack.c.l.b16 %v376
  %v445 = vunpack.c.l.b16 %v377
  %v446 = vunpack.c.l.b16 %v378
  %v447 = vunpack.c.l.b16 %v379
  %v448 = vunpack.c.l.b16 %v380
  %v449 = vunpack.c.l.b16 %v381
  %v450 = vunpack.c.l.b16 %v382
  %v451 = vunpack.c.l.b16 %v383
  %v452 = vunpack.c.l.b16 %v384
  %v453 = vunpack.c.l.b16 %v385
  %v454 = vunpack.c.l.b16 %v386
  %v455 = vunpack.c.l.b16 %v387
  %v456 = vunpack.c.l.b16 %v388
  %v457 = vunpack.c.l.b16 %v389
  %v458 = vunpack.c.l.b16 %v390
  %v459 = vunpack.c.l.b16 %v391
  %v460 = vunpack.c.l.b16 %v392
  %v461 = vunpack.c.l.b16 %v393
  %v462 = vunpack.c.l.b16 %v394
  %v463 = vunpack.c.l.b16 %v395
  %v464 = vunpack.c.l.b16 %v396
  %v465 = vunpack.c.l.b16 %v397
  %v466 = vunpack.c.l.b16 %v398
  %v467 = vunpack.c.l.b16 %v399
  %v468 = vpack.c.b16 %v437, %v436
  %v469 = vpack.c.b16 %v439, %v438
  %v470 = vpack.c.b16 %v441, %v440
  %v471 = vpack.c.b16 %v443, %v442
  %v472 = vpack.c.b16 %v445, %v444
  %v473 = vpack.c.b16 %v447, %v446
  %v474 = vpack.c.b16 %v449, %v448
  %v475 = vpack.c.b16 %v451, %v450
  %v476 = vpack.c.b16 %v453, %v452
  %v477 = vpack.c.b16 %v455, %v454
  %v478 = vpack.c.b16 %v457, %v456
  %v479 = vpack.c.b16 %v459, %v458
  %v480 = vpack.c.b16 %v461, %v460
  %v481 = vpack.c.b16 %v463, %v462
  %v482 = vpack.c.b16 %v465, %v464
  %v483 = vpack.c.b16 %v467, %v466
  %500 = vmatprep.subr.bf16.mxu0 0
  %501 = vmatpush1.bf16.msra.mxu0 %v468
  %502 = vmatprep.subr.bf16.mxu0 0
  %503 = vmatpush1.bf16.msra.mxu0 %v469
  %504 = vmatprep.subr.bf16.mxu0 0
  %505 = vmatpush1.bf16.msra.mxu0 %v470
  %506 = vmatprep.subr.bf16.mxu0 0
  %507 = vmatpush1.bf16.msra.mxu0 %v471
  %508 = vmatprep.subr.bf16.mxu0 0
  %509 = vmatpush1.bf16.msra.mxu0 %v472
  %510 = vmatprep.subr.bf16.mxu0 0
  %511 = vmatpush1.bf16.msra.mxu0 %v473
  %512 = vmatprep.subr.bf16.mxu0 0
  %513 = vmatpush1.bf16.msra.mxu0 %v474
  %514 = vmatprep.subr.bf16.mxu0 0
  %515 = vmatpush1.bf16.msra.mxu0 %v475
  %516 = vmatprep.subr.bf16.mxu0 0
  %517 = vmatpush1.bf16.msra.mxu0 %v476
  %518 = vmatprep.subr.bf16.mxu0 0
  %519 = vmatpush1.bf16.msra.mxu0 %v477
  %520 = vmatprep.subr.bf16.mxu0 0
  %521 = vmatpush1.bf16.msra.mxu0 %v478
  %522 = vmatprep.subr.bf16.mxu0 0
  %523 = vmatpush1.bf16.msra.mxu0 %v479
  %524 = vmatprep.subr.bf16.mxu0 0
  %525 = vmatpush1.bf16.msra.mxu0 %v480
  %526 = vmatprep.subr.bf16.mxu0 0
  %527 = vmatpush1.bf16.msra.mxu0 %v481
  %528 = vmatprep.subr.bf16.mxu0 0
  %529 = vmatpush1.bf16.msra.mxu0 %v482
  %530 = vmatprep.subr.bf16.mxu0 0
  %531 = vmatpush1.bf16.msra.mxu0 %v483
  %532 = vmatprep.mubr.bf16.mxu0 %v367
  %533 = vmatmul.mubr.bf16.gmra.mrb[0].mxu0 %v366
  %v534 = vpop.f32.mrb[0].mxu0
  %v535 = vadd.f32 %v403, %v534
  %v536 = vpop.f32.mrb[0].mxu0
  %v537 = vpop.f32.mrb[0].mxu0
  %v538 = vadd.f32 %v403, %v537
  %v539 = vpop.f32.mrb[0].mxu0
  %540 = vdwg.mxu0
  %v541 = vadd.f32 %v535, %v183
  %v542 = vadd.f32 %v538, %v184
  %s543 = scalar_lea.vmem %s10, 8
  %v544 = vld [vmem:[%s543] sm:$0x1f]
  %v545 = vsel %vm78, %v541, 0.0
  %546 = vadd.xlane.f32.xlu0 %v545
  %v547 = vpop.xlane.xlu0 %546
  %v548 = vsel %vm78, %v542, 0.0
  %549 = vadd.xlane.f32.xlu0 %v548
  %v550 = vpop.xlane.xlu0 %549
  %v551 = vmul.f32 %v547, %v85
  %v552 = vmul.f32 %v550, %v85
  %v553 = vsub.f32 %v541, %v551
  %v554 = vsub.f32 %v542, %v552
  %v555 = vmul.f32 %v553, %v553
  %v556 = vmul.f32 %v554, %v554
  %v557 = vsel %vm78, %v555, 0.0
  %558 = vadd.xlane.f32.xlu0 %v557
  %v559 = vpop.xlane.xlu0 %558
  %v560 = vsel %vm78, %v556, 0.0
  %561 = vadd.xlane.f32.xlu0 %v560
  %v562 = vpop.xlane.xlu0 %561
  %v563 = vmul.f32 %v559, %v85
  %v564 = vmul.f32 %v562, %v85
  %v565 = vadd.f32 %v563, 1e-05
  %v566 = vadd.f32 %v564, 1e-05
  %v567 = vrsqrt.pop %v565
  %v568 = vrsqrt.pop %v566
  %v569 = vmul.f32 %v553, %v567
  %v570 = vmul.f32 %v554, %v568
  %v571 = vlaneseq
  %v572 = vshrl.u32 %v571, 7
  %v573 = vsub.s32 0, %v572
  %v574 = vrot.slane %v544, %v573
  %v575 = vmul.f32 %v569, %v574
  %v576 = vmul.f32 %v570, %v574
  %v577 = vlaneseq
  %v578 = vshrl.u32 %v577, 7
  %v579 = vsub.s32 1, %v578
  %v580 = vrot.slane %v544, %v579
  %v581 = vadd.f32 %v575, %v580
  %v582 = vadd.f32 %v576, %v580
  %s583 = scalar_lea.vmem %s8, 8
  %v584 = vld [vmem:[%s583] sm:$0xf]
  %v585 = vld [vmem:[%s583 + $0x4] sm:$0xf]
  %v586 = vpack.c.bf16 %v582, %v581
  %s587 = scalar_lea.vmem %s9, 16
  %v588 = vld [vmem:[%s587] sm:$0xff]
  %v589 = vld [vmem:[%s587 + $0x8] sm:$0xff]
  %591 = vset.pattern.permute.xlu0 0
  %592 = vperm.xlu0 %591, %v588
  %v593 = vpop.permute.xlu0 %592
  %596 = vset.pattern.permute.xlu0 0
  %597 = vperm.xlu0 %596, %v589
  %v598 = vpop.permute.xlu0 %597
  %v602 = vunpack.c.l.b16 %v584
  %v603 = vunpack.c.l.b16 %v585
  %v604 = vpack.c.b16 %v603, %v602
  %v606 = vsel %vm138, %v604, 0
  %608 = vmatprep.subr.bf16.mxu0 0
  %609 = vmatpush1.bf16.msra.mxu0 %v586
  %610 = vmatprep.subr.bf16.mxu0 0
  %611 = vmatpush1.bf16.msra.mxu0 0
  %612 = vmatprep.subr.bf16.mxu0 0
  %613 = vmatpush1.bf16.msra.mxu0 0
  %614 = vmatprep.subr.bf16.mxu0 0
  %615 = vmatpush1.bf16.msra.mxu0 0
  %616 = vmatprep.subr.bf16.mxu0 0
  %617 = vmatpush1.bf16.msra.mxu0 0
  %618 = vmatprep.subr.bf16.mxu0 0
  %619 = vmatpush1.bf16.msra.mxu0 0
  %620 = vmatprep.subr.bf16.mxu0 0
  %621 = vmatpush1.bf16.msra.mxu0 0
  %622 = vmatprep.subr.bf16.mxu0 0
  %623 = vmatpush1.bf16.msra.mxu0 0
  %624 = vmatprep.subr.bf16.mxu0 0
  %625 = vmatpush1.bf16.msra.mxu0 0
  %626 = vmatprep.subr.bf16.mxu0 0
  %627 = vmatpush1.bf16.msra.mxu0 0
  %628 = vmatprep.subr.bf16.mxu0 0
  %629 = vmatpush1.bf16.msra.mxu0 0
  %630 = vmatprep.subr.bf16.mxu0 0
  %631 = vmatpush1.bf16.msra.mxu0 0
  %632 = vmatprep.subr.bf16.mxu0 0
  %633 = vmatpush1.bf16.msra.mxu0 0
  %634 = vmatprep.subr.bf16.mxu0 0
  %635 = vmatpush1.bf16.msra.mxu0 0
  %636 = vmatprep.subr.bf16.mxu0 0
  %637 = vmatpush1.bf16.msra.mxu0 0
  %638 = vmatprep.subr.bf16.mxu0 0
  %639 = vmatpush1.bf16.msra.mxu0 0
  %640 = vmatprep.mubr.bf16.mxu0 0
  %641 = vmatmul.mubr.bf16.gmra.mrb[0].mxu0 %v606
  %v642 = vpop.f32.mrb[0].mxu0
  %v643 = vadd.f32 %v593, %v642
  %v644 = vpop.f32.mrb[0].mxu0
  %v645 = vpop.f32.mrb[0].mxu0
  %v646 = vadd.f32 %v598, %v645
  %v647 = vpop.f32.mrb[0].mxu0
  %648 = vdwg.mxu0
  %v649 = vadd.f32 %v643, %v541
  %v650 = vadd.f32 %v646, %v542
  %v651 = vsel %vm78, %v649, 0.0
  %652 = vadd.xlane.f32.xlu0 %v651
  %v653 = vpop.xlane.xlu0 %652
  %v654 = vsel %vm78, %v650, 0.0
  %655 = vadd.xlane.f32.xlu0 %v654
  %v656 = vpop.xlane.xlu0 %655
  %v657 = vmul.f32 %v653, %v85
  %v658 = vmul.f32 %v656, %v85
  %v659 = vsub.f32 %v649, %v657
  %v660 = vsub.f32 %v650, %v658
  %v661 = vmul.f32 %v659, %v659
  %v662 = vmul.f32 %v660, %v660
  %v663 = vsel %vm78, %v661, 0.0
  %664 = vadd.xlane.f32.xlu0 %v663
  %v665 = vpop.xlane.xlu0 %664
  %v666 = vsel %vm78, %v662, 0.0
  %667 = vadd.xlane.f32.xlu0 %v666
  %v668 = vpop.xlane.xlu0 %667
  %v669 = vmul.f32 %v665, %v85
  %v670 = vmul.f32 %v668, %v85
  %v671 = vadd.f32 %v669, 1e-05
  %v672 = vadd.f32 %v670, 1e-05
  %v673 = vrsqrt.pop %v671
  %v674 = vrsqrt.pop %v672
  %v675 = vmul.f32 %v659, %v673
  %v676 = vmul.f32 %v660, %v674
  %v677 = vlaneseq
  %v678 = vshrl.u32 %v677, 7
  %v679 = vsub.s32 2, %v678
  %v680 = vrot.slane %v544, %v679
  %v681 = vmul.f32 %v675, %v680
  %v682 = vmul.f32 %v676, %v680
  %v683 = vlaneseq
  %v684 = vshrl.u32 %v683, 7
  %v685 = vsub.s32 3, %v684
  %v686 = vrot.slane %v544, %v685
  %v687 = vadd.f32 %v681, %v686
  %v688 = vadd.f32 %v682, %v686
  %v689 = vpack.c.bf16 %v688, %v687
  %s690 = scalar_lea.vmem %s11, 64
  %v691 = vld [vmem:[%s690] sm:$0xff]
  %v692 = vld [vmem:[%s690 + $0x8] sm:$0xff]
  %v693 = vld [vmem:[%s690 + $0x10] sm:$0xff]
  %v694 = vld [vmem:[%s690 + $0x18] sm:$0xff]
  %v695 = vld [vmem:[%s690 + $0x20] sm:$0xff]
  %v696 = vld [vmem:[%s690 + $0x28] sm:$0xff]
  %v697 = vld [vmem:[%s690 + $0x30] sm:$0xff]
  %v698 = vld [vmem:[%s690 + $0x38] sm:$0xff]
  %s699 = scalar_lea.vmem %s12, 2
  %v700 = vld [vmem:[%s699] sm:$0x3]
  %v702 = vlaneseq
  %v703 = vshrl.u32 %v702, 7
  %v704 = vsub.s32 0, %v703
  %v705 = vrot.slane %v700, %v704
  %v706 = vlaneseq
  %v707 = vshrl.u32 %v706, 7
  %v708 = vsub.s32 1, %v707
  %v709 = vrot.slane %v700, %v708
  %v720 = vunpack.c.l.b16 %v691
  %v721 = vunpack.c.h.b16 %v691
  %v722 = vunpack.c.l.b16 %v692
  %v723 = vunpack.c.h.b16 %v692
  %v724 = vunpack.c.l.b16 %v693
  %v725 = vunpack.c.h.b16 %v693
  %v726 = vunpack.c.l.b16 %v694
  %v727 = vunpack.c.h.b16 %v694
  %v728 = vunpack.c.l.b16 %v695
  %v729 = vunpack.c.h.b16 %v695
  %v730 = vunpack.c.l.b16 %v696
  %v731 = vunpack.c.h.b16 %v696
  %v732 = vunpack.c.l.b16 %v697
  %v733 = vunpack.c.h.b16 %v697
  %v734 = vunpack.c.l.b16 %v698
  %v735 = vunpack.c.h.b16 %v698
  %v736 = vpack.c.b16 %v722, %v720
  %v737 = vpack.c.b16 %v723, %v721
  %v738 = vpack.c.b16 %v726, %v724
  %v739 = vpack.c.b16 %v727, %v725
  %v740 = vpack.c.b16 %v730, %v728
  %v741 = vpack.c.b16 %v731, %v729
  %v742 = vpack.c.b16 %v734, %v732
  %v743 = vpack.c.b16 %v735, %v733
  %v753 = vsel %vm78, %v689, 0
  %755 = vmatprep.subr.bf16.mxu0 %v737
  %756 = vmatpush1.bf16.msra.mxu0 %v736
  %757 = vmatprep.subr.bf16.mxu0 %v739
  %758 = vmatpush1.bf16.msra.mxu0 %v738
  %759 = vmatprep.subr.bf16.mxu0 %v741
  %760 = vmatpush1.bf16.msra.mxu0 %v740
  %761 = vmatprep.subr.bf16.mxu0 %v743
  %762 = vmatpush1.bf16.msra.mxu0 %v742
  %763 = vmatprep.subr.bf16.mxu0 0
  %764 = vmatpush1.bf16.msra.mxu0 0
  %765 = vmatprep.subr.bf16.mxu0 0
  %766 = vmatpush1.bf16.msra.mxu0 0
  %767 = vmatprep.subr.bf16.mxu0 0
  %768 = vmatpush1.bf16.msra.mxu0 0
  %769 = vmatprep.subr.bf16.mxu0 0
  %770 = vmatpush1.bf16.msra.mxu0 0
  %771 = vmatprep.subr.bf16.mxu0 0
  %772 = vmatpush1.bf16.msra.mxu0 0
  %773 = vmatprep.subr.bf16.mxu0 0
  %774 = vmatpush1.bf16.msra.mxu0 0
  %775 = vmatprep.subr.bf16.mxu0 0
  %776 = vmatpush1.bf16.msra.mxu0 0
  %777 = vmatprep.subr.bf16.mxu0 0
  %778 = vmatpush1.bf16.msra.mxu0 0
  %779 = vmatprep.subr.bf16.mxu0 0
  %780 = vmatpush1.bf16.msra.mxu0 0
  %781 = vmatprep.subr.bf16.mxu0 0
  %782 = vmatpush1.bf16.msra.mxu0 0
  %783 = vmatprep.subr.bf16.mxu0 0
  %784 = vmatpush1.bf16.msra.mxu0 0
  %785 = vmatprep.subr.bf16.mxu0 0
  %786 = vmatpush1.bf16.msra.mxu0 0
  %787 = vmatprep.mubr.bf16.mxu0 0
  %788 = vmatmul.mubr.bf16.gmra.mrb[0].mxu0 %v753
  %v789 = vpop.f32.mrb[0].mxu0
  %v790 = vadd.f32 %v705, %v789
  %v791 = vpop.f32.mrb[0].mxu0
  %v792 = vadd.f32 %v709, %v791
  %v793 = vpop.f32.mrb[0].mxu0
  %v794 = vadd.f32 %v705, %v793
  %v795 = vpop.f32.mrb[0].mxu0
  %v796 = vadd.f32 %v709, %v795
  %797 = vdwg.mxu0
  %v798 = vmul.f32 %v790, 0.5
  %v799 = vmul.f32 %v792, 0.5
  %v800 = vmul.f32 %v794, 0.5
  %v801 = vmul.f32 %v796, 0.5
  %v802 = vmul.f32 %v790, 0.044715
  %v803 = vmul.f32 %v792, 0.044715
  %v804 = vmul.f32 %v794, 0.044715
  %v805 = vmul.f32 %v796, 0.044715
  %v806 = vmul.f32 %v802, %v790
  %v807 = vmul.f32 %v803, %v792
  %v808 = vmul.f32 %v804, %v794
  %v809 = vmul.f32 %v805, %v796
  %v810 = vmul.f32 %v806, %v790
  %v811 = vmul.f32 %v807, %v792
  %v812 = vmul.f32 %v808, %v794
  %v813 = vmul.f32 %v809, %v796
  %v814 = vadd.f32 %v790, %v810
  %v815 = vadd.f32 %v792, %v811
  %v816 = vadd.f32 %v794, %v812
  %v817 = vadd.f32 %v796, %v813
  %v818 = vmul.f32 %v814, 0.7978846
  %v819 = vmul.f32 %v815, 0.7978846
  %v820 = vmul.f32 %v816, 0.7978846
  %v821 = vmul.f32 %v817, 0.7978846
  %v822 = vtanh.pop %v818
  %v823 = vtanh.pop %v819
  %v824 = vtanh.pop %v820
  %v825 = vtanh.pop %v821
  %v826 = vadd.f32 %v822, 1.0
  %v827 = vadd.f32 %v823, 1.0
  %v828 = vadd.f32 %v824, 1.0
  %v829 = vadd.f32 %v825, 1.0
  %v830 = vmul.f32 %v798, %v826
  %v831 = vmul.f32 %v799, %v827
  %v832 = vmul.f32 %v800, %v828
  %v833 = vmul.f32 %v801, %v829
  %v834 = vpack.c.bf16 %v832, %v830
  %v835 = vpack.c.bf16 %v833, %v831
  %s836 = scalar_lea.vmem %s13, 128
  %v837 = vld [vmem:[%s836] sm:$0xf]
  %v838 = vld [vmem:[%s836 + $0x4] sm:$0xf]
  %v839 = vld [vmem:[%s836 + $0x8] sm:$0xf]
  %v840 = vld [vmem:[%s836 + $0xc] sm:$0xf]
  %v841 = vld [vmem:[%s836 + $0x10] sm:$0xf]
  %v842 = vld [vmem:[%s836 + $0x14] sm:$0xf]
  %v843 = vld [vmem:[%s836 + $0x18] sm:$0xf]
  %v844 = vld [vmem:[%s836 + $0x1c] sm:$0xf]
  %v845 = vld [vmem:[%s836 + $0x20] sm:$0xf]
  %v846 = vld [vmem:[%s836 + $0x24] sm:$0xf]
  %v847 = vld [vmem:[%s836 + $0x28] sm:$0xf]
  %v848 = vld [vmem:[%s836 + $0x2c] sm:$0xf]
  %v849 = vld [vmem:[%s836 + $0x30] sm:$0xf]
  %v850 = vld [vmem:[%s836 + $0x34] sm:$0xf]
  %v851 = vld [vmem:[%s836 + $0x38] sm:$0xf]
  %v852 = vld [vmem:[%s836 + $0x3c] sm:$0xf]
  %v853 = vld [vmem:[%s836 + $0x40] sm:$0xf]
  %v854 = vld [vmem:[%s836 + $0x44] sm:$0xf]
  %v855 = vld [vmem:[%s836 + $0x48] sm:$0xf]
  %v856 = vld [vmem:[%s836 + $0x4c] sm:$0xf]
  %v857 = vld [vmem:[%s836 + $0x50] sm:$0xf]
  %v858 = vld [vmem:[%s836 + $0x54] sm:$0xf]
  %v859 = vld [vmem:[%s836 + $0x58] sm:$0xf]
  %v860 = vld [vmem:[%s836 + $0x5c] sm:$0xf]
  %v861 = vld [vmem:[%s836 + $0x60] sm:$0xf]
  %v862 = vld [vmem:[%s836 + $0x64] sm:$0xf]
  %v863 = vld [vmem:[%s836 + $0x68] sm:$0xf]
  %v864 = vld [vmem:[%s836 + $0x6c] sm:$0xf]
  %v865 = vld [vmem:[%s836 + $0x70] sm:$0xf]
  %v866 = vld [vmem:[%s836 + $0x74] sm:$0xf]
  %v867 = vld [vmem:[%s836 + $0x78] sm:$0xf]
  %v868 = vld [vmem:[%s836 + $0x7c] sm:$0xf]
  %v869 = vlaneseq
  %v870 = vshrl.u32 %v869, 7
  %v871 = vsub.s32 4, %v870
  %v872 = vrot.slane %v544, %v871
  %v905 = vunpack.c.l.b16 %v837
  %v906 = vunpack.c.l.b16 %v838
  %v907 = vunpack.c.l.b16 %v839
  %v908 = vunpack.c.l.b16 %v840
  %v909 = vunpack.c.l.b16 %v841
  %v910 = vunpack.c.l.b16 %v842
  %v911 = vunpack.c.l.b16 %v843
  %v912 = vunpack.c.l.b16 %v844
  %v913 = vunpack.c.l.b16 %v845
  %v914 = vunpack.c.l.b16 %v846
  %v915 = vunpack.c.l.b16 %v847
  %v916 = vunpack.c.l.b16 %v848
  %v917 = vunpack.c.l.b16 %v849
  %v918 = vunpack.c.l.b16 %v850
  %v919 = vunpack.c.l.b16 %v851
  %v920 = vunpack.c.l.b16 %v852
  %v921 = vunpack.c.l.b16 %v853
  %v922 = vunpack.c.l.b16 %v854
  %v923 = vunpack.c.l.b16 %v855
  %v924 = vunpack.c.l.b16 %v856
  %v925 = vunpack.c.l.b16 %v857
  %v926 = vunpack.c.l.b16 %v858
  %v927 = vunpack.c.l.b16 %v859
  %v928 = vunpack.c.l.b16 %v860
  %v929 = vunpack.c.l.b16 %v861
  %v930 = vunpack.c.l.b16 %v862
  %v931 = vunpack.c.l.b16 %v863
  %v932 = vunpack.c.l.b16 %v864
  %v933 = vunpack.c.l.b16 %v865
  %v934 = vunpack.c.l.b16 %v866
  %v935 = vunpack.c.l.b16 %v867
  %v936 = vunpack.c.l.b16 %v868
  %v937 = vpack.c.b16 %v906, %v905
  %v938 = vpack.c.b16 %v908, %v907
  %v939 = vpack.c.b16 %v910, %v909
  %v940 = vpack.c.b16 %v912, %v911
  %v941 = vpack.c.b16 %v914, %v913
  %v942 = vpack.c.b16 %v916, %v915
  %v943 = vpack.c.b16 %v918, %v917
  %v944 = vpack.c.b16 %v920, %v919
  %v945 = vpack.c.b16 %v922, %v921
  %v946 = vpack.c.b16 %v924, %v923
  %v947 = vpack.c.b16 %v926, %v925
  %v948 = vpack.c.b16 %v928, %v927
  %v949 = vpack.c.b16 %v930, %v929
  %v950 = vpack.c.b16 %v932, %v931
  %v951 = vpack.c.b16 %v934, %v933
  %v952 = vpack.c.b16 %v936, %v935
  %969 = vmatprep.subr.bf16.mxu0 0
  %970 = vmatpush1.bf16.msra.mxu0 %v937
  %971 = vmatprep.subr.bf16.mxu0 0
  %972 = vmatpush1.bf16.msra.mxu0 %v938
  %973 = vmatprep.subr.bf16.mxu0 0
  %974 = vmatpush1.bf16.msra.mxu0 %v939
  %975 = vmatprep.subr.bf16.mxu0 0
  %976 = vmatpush1.bf16.msra.mxu0 %v940
  %977 = vmatprep.subr.bf16.mxu0 0
  %978 = vmatpush1.bf16.msra.mxu0 %v941
  %979 = vmatprep.subr.bf16.mxu0 0
  %980 = vmatpush1.bf16.msra.mxu0 %v942
  %981 = vmatprep.subr.bf16.mxu0 0
  %982 = vmatpush1.bf16.msra.mxu0 %v943
  %983 = vmatprep.subr.bf16.mxu0 0
  %984 = vmatpush1.bf16.msra.mxu0 %v944
  %985 = vmatprep.subr.bf16.mxu0 0
  %986 = vmatpush1.bf16.msra.mxu0 %v945
  %987 = vmatprep.subr.bf16.mxu0 0
  %988 = vmatpush1.bf16.msra.mxu0 %v946
  %989 = vmatprep.subr.bf16.mxu0 0
  %990 = vmatpush1.bf16.msra.mxu0 %v947
  %991 = vmatprep.subr.bf16.mxu0 0
  %992 = vmatpush1.bf16.msra.mxu0 %v948
  %993 = vmatprep.subr.bf16.mxu0 0
  %994 = vmatpush1.bf16.msra.mxu0 %v949
  %995 = vmatprep.subr.bf16.mxu0 0
  %996 = vmatpush1.bf16.msra.mxu0 %v950
  %997 = vmatprep.subr.bf16.mxu0 0
  %998 = vmatpush1.bf16.msra.mxu0 %v951
  %999 = vmatprep.subr.bf16.mxu0 0
  %1000 = vmatpush1.bf16.msra.mxu0 %v952
  %1001 = vmatprep.mubr.bf16.mxu0 %v835
  %1002 = vmatmul.mubr.bf16.gmra.mrb[0].mxu0 %v834
  %v1003 = vpop.f32.mrb[0].mxu0
  %v1004 = vadd.f32 %v872, %v1003
  %v1005 = vpop.f32.mrb[0].mxu0
  %v1006 = vpop.f32.mrb[0].mxu0
  %v1007 = vadd.f32 %v872, %v1006
  %v1008 = vpop.f32.mrb[0].mxu0
  %1009 = vdwg.mxu0
  %v1010 = vadd.f32 %v1004, %v649
  %v1011 = vadd.f32 %v1007, %v650
  %v1012 = vld [vmem:[%s6] sm:$0x3]
  %v1014 = vsel %vm138, %v1012, 0
  %1016 = vmatprep.subr.mxu0 0.0
  %1017 = vmatpush1.msra.mxu0 %v1010
  %1018 = vmatprep.subr.mxu0 0.0
  %1019 = vmatpush1.msra.mxu0 %v1011
  %1020 = vmatprep.subr.mxu0 0.0
  %1021 = vmatpush1.msra.mxu0 0.0
  %1022 = vmatprep.subr.mxu0 0.0
  %1023 = vmatpush1.msra.mxu0 0.0
  %1024 = vmatprep.subr.mxu0 0.0
  %1025 = vmatpush1.msra.mxu0 0.0
  %1026 = vmatprep.subr.mxu0 0.0
  %1027 = vmatpush1.msra.mxu0 0.0
  %1028 = vmatprep.subr.mxu0 0.0
  %1029 = vmatpush1.msra.mxu0 0.0
  %1030 = vmatprep.subr.mxu0 0.0
  %1031 = vmatpush1.msra.mxu0 0.0
  %1032 = vmatprep.subr.mxu0 0.0
  %1033 = vmatpush1.msra.mxu0 0.0
  %1034 = vmatprep.subr.mxu0 0.0
  %1035 = vmatpush1.msra.mxu0 0.0
  %1036 = vmatprep.subr.mxu0 0.0
  %1037 = vmatpush1.msra.mxu0 0.0
  %1038 = vmatprep.subr.mxu0 0.0
  %1039 = vmatpush1.msra.mxu0 0.0
  %1040 = vmatprep.subr.mxu0 0.0
  %1041 = vmatpush1.msra.mxu0 0.0
  %1042 = vmatprep.subr.mxu0 0.0
  %1043 = vmatpush1.msra.mxu0 0.0
  %1044 = vmatprep.subr.mxu0 0.0
  %1045 = vmatpush1.msra.mxu0 0.0
  %1046 = vmatprep.subr.mxu0 0.0
  %1047 = vmatpush1.msra.mxu0 0.0
  %1048 = vmatprep.subr.mxu0 0.0
  %1049 = vmatpush1.msra.mxu0 0.0
  %1050 = vmatprep.subr.mxu0 0.0
  %1051 = vmatpush1.msra.mxu0 0.0
  %1052 = vmatprep.subr.mxu0 0.0
  %1053 = vmatpush1.msra.mxu0 0.0
  %1054 = vmatprep.subr.mxu0 0.0
  %1055 = vmatpush1.msra.mxu0 0.0
  %1056 = vmatprep.subr.mxu0 0.0
  %1057 = vmatpush1.msra.mxu0 0.0
  %1058 = vmatprep.subr.mxu0 0.0
  %1059 = vmatpush1.msra.mxu0 0.0
  %1060 = vmatprep.subr.mxu0 0.0
  %1061 = vmatpush1.msra.mxu0 0.0
  %1062 = vmatprep.subr.mxu0 0.0
  %1063 = vmatpush1.msra.mxu0 0.0
  %1064 = vmatprep.subr.mxu0 0.0
  %1065 = vmatpush1.msra.mxu0 0.0
  %1066 = vmatprep.subr.mxu0 0.0
  %1067 = vmatpush1.msra.mxu0 0.0
  %1068 = vmatprep.subr.mxu0 0.0
  %1069 = vmatpush1.msra.mxu0 0.0
  %1070 = vmatprep.subr.mxu0 0.0
  %1071 = vmatpush1.msra.mxu0 0.0
  %1072 = vmatprep.subr.mxu0 0.0
  %1073 = vmatpush1.msra.mxu0 0.0
  %1074 = vmatprep.subr.mxu0 0.0
  %1075 = vmatpush1.msra.mxu0 0.0
  %1076 = vmatprep.subr.mxu0 0.0
  %1077 = vmatpush1.msra.mxu0 0.0
  %1078 = vmatprep.subr.mxu0 0.0
  %1079 = vmatpush1.msra.mxu0 0.0
  %1080 = vmatprep.mubr.f32.mxu0 0.0
  %1081 = vmatmul.mubr.f32.gmra.mrb[0].mxu0 %v1014
  %v1082 = vpop.f32.mrb[0].mxu0
  %v1083 = vadd.f32 0.0, %v1082
  %v1084 = vpop.f32.mrb[0].mxu0
  %1085 = vdwg.mxu0
  %v1086 = vpack.c.bf16 %v1083, %v1083
  %v1087 = vld [vmem:[%s14] sm:$0xf]
  %v1088 = vld [vmem:[%s14 + $0x4] sm:$0xf]
  %v1089 = vld [vmem:[%s14 + $0x8] sm:$0xf]
  %v1090 = vld [vmem:[%s14 + $0xc] sm:$0xf]
  %v1091 = vld [vmem:[%s14 + $0x10] sm:$0xf]
  %v1092 = vld [vmem:[%s14 + $0x14] sm:$0xf]
  %v1093 = vld [vmem:[%s14 + $0x18] sm:$0xf]
  %v1094 = vld [vmem:[%s14 + $0x1c] sm:$0xf]
  %v1095 = vld [vmem:[%s15] sm:$0x1]
  %v1097 = vlaneseq
  %v1098 = vshrl.u32 %v1097, 7
  %v1099 = vsub.s32 0, %v1098
  %v1100 = vrot.slane %v1095, %v1099
  %v1110 = vunpack.c.l.b16 %v1087
  %v1111 = vunpack.c.l.b16 %v1088
  %v1112 = vunpack.c.l.b16 %v1089
  %v1113 = vunpack.c.l.b16 %v1090
  %v1114 = vunpack.c.l.b16 %v1091
  %v1115 = vunpack.c.l.b16 %v1092
  %v1116 = vunpack.c.l.b16 %v1093
  %v1117 = vunpack.c.l.b16 %v1094
  %v1118 = vpack.c.b16 %v1111, %v1110
  %v1119 = vpack.c.b16 %v1113, %v1112
  %v1120 = vpack.c.b16 %v1115, %v1114
  %v1121 = vpack.c.b16 %v1117, %v1116
  %v1127 = vsel %vm78, %v1086, 0
  %1129 = vmatprep.subr.bf16.mxu0 0
  %1130 = vmatpush1.bf16.msra.mxu0 %v1118
  %1131 = vmatprep.subr.bf16.mxu0 0
  %1132 = vmatpush1.bf16.msra.mxu0 %v1119
  %1133 = vmatprep.subr.bf16.mxu0 0
  %1134 = vmatpush1.bf16.msra.mxu0 %v1120
  %1135 = vmatprep.subr.bf16.mxu0 0
  %1136 = vmatpush1.bf16.msra.mxu0 %v1121
  %1137 = vmatprep.subr.bf16.mxu0 0
  %1138 = vmatpush1.bf16.msra.mxu0 0
  %1139 = vmatprep.subr.bf16.mxu0 0
  %1140 = vmatpush1.bf16.msra.mxu0 0
  %1141 = vmatprep.subr.bf16.mxu0 0
  %1142 = vmatpush1.bf16.msra.mxu0 0
  %1143 = vmatprep.subr.bf16.mxu0 0
  %1144 = vmatpush1.bf16.msra.mxu0 0
  %1145 = vmatprep.subr.bf16.mxu0 0
  %1146 = vmatpush1.bf16.msra.mxu0 0
  %1147 = vmatprep.subr.bf16.mxu0 0
  %1148 = vmatpush1.bf16.msra.mxu0 0
  %1149 = vmatprep.subr.bf16.mxu0 0
  %1150 = vmatpush1.bf16.msra.mxu0 0
  %1151 = vmatprep.subr.bf16.mxu0 0
  %1152 = vmatpush1.bf16.msra.mxu0 0
  %1153 = vmatprep.subr.bf16.mxu0 0
  %1154 = vmatpush1.bf16.msra.mxu0 0
  %1155 = vmatprep.subr.bf16.mxu0 0
  %1156 = vmatpush1.bf16.msra.mxu0 0
  %1157 = vmatprep.subr.bf16.mxu0 0
  %1158 = vmatpush1.bf16.msra.mxu0 0
  %1159 = vmatprep.subr.bf16.mxu0 0
  %1160 = vmatpush1.bf16.msra.mxu0 0
  %1161 = vmatprep.mubr.bf16.mxu0 0
  %1162 = vmatmul.mubr.bf16.gmra.mrb[0].mxu0 %v1127
  %v1163 = vpop.f32.mrb[0].mxu0
  %v1164 = vadd.f32 %v1100, %v1163
  %v1165 = vpop.f32.mrb[0].mxu0
  %v1166 = vpop.f32.mrb[0].mxu0
  %v1167 = vpop.f32.mrb[0].mxu0
  %1168 = vdwg.mxu0
  %v1169 = vpack.c.bf16 %v1164, %v1164
  %s1170 = scalar_lea.vmem %s14, 32
  %v1171 = vld [vmem:[%s1170] sm:$0xf]
  %v1172 = vld [vmem:[%s1170 + $0x4] sm:$0xf]
  %v1173 = vld [vmem:[%s1170 + $0x8] sm:$0xf]
  %v1174 = vld [vmem:[%s1170 + $0xc] sm:$0xf]
  %v1175 = vld [vmem:[%s1170 + $0x10] sm:$0xf]
  %v1176 = vld [vmem:[%s1170 + $0x14] sm:$0xf]
  %v1177 = vld [vmem:[%s1170 + $0x18] sm:$0xf]
  %v1178 = vld [vmem:[%s1170 + $0x1c] sm:$0xf]
  %s1179 = scalar_lea.vmem %s15, 1
  %v1180 = vld [vmem:[%s1179] sm:$0x1]
  %v1182 = vlaneseq
  %v1183 = vshrl.u32 %v1182, 7
  %v1184 = vsub.s32 0, %v1183
  %v1185 = vrot.slane %v1180, %v1184
  %v1195 = vunpack.c.l.b16 %v1171
  %v1196 = vunpack.c.l.b16 %v1172
  %v1197 = vunpack.c.l.b16 %v1173
  %v1198 = vunpack.c.l.b16 %v1174
  %v1199 = vunpack.c.l.b16 %v1175
  %v1200 = vunpack.c.l.b16 %v1176
  %v1201 = vunpack.c.l.b16 %v1177
  %v1202 = vunpack.c.l.b16 %v1178
  %v1203 = vpack.c.b16 %v1196, %v1195
  %v1204 = vpack.c.b16 %v1198, %v1197
  %v1205 = vpack.c.b16 %v1200, %v1199
  %v1206 = vpack.c.b16 %v1202, %v1201
  %v1212 = vsel %vm78, %v1169, 0
  %1214 = vmatprep.subr.bf16.mxu0 0
  %1215 = vmatpush1.bf16.msra.mxu0 %v1203
  %1216 = vmatprep.subr.bf16.mxu0 0
  %1217 = vmatpush1.bf16.msra.mxu0 %v1204
  %1218 = vmatprep.subr.bf16.mxu0 0
  %1219 = vmatpush1.bf16.msra.mxu0 %v1205
  %1220 = vmatprep.subr.bf16.mxu0 0
  %1221 = vmatpush1.bf16.msra.mxu0 %v1206
  %1222 = vmatprep.subr.bf16.mxu0 0
  %1223 = vmatpush1.bf16.msra.mxu0 0
  %1224 = vmatprep.subr.bf16.mxu0 0
  %1225 = vmatpush1.bf16.msra.mxu0 0
  %1226 = vmatprep.subr.bf16.mxu0 0
  %1227 = vmatpush1.bf16.msra.mxu0 0
  %1228 = vmatprep.subr.bf16.mxu0 0
  %1229 = vmatpush1.bf16.msra.mxu0 0
  %1230 = vmatprep.subr.bf16.mxu0 0
  %1231 = vmatpush1.bf16.msra.mxu0 0
  %1232 = vmatprep.subr.bf16.mxu0 0
  %1233 = vmatpush1.bf16.msra.mxu0 0
  %1234 = vmatprep.subr.bf16.mxu0 0
  %1235 = vmatpush1.bf16.msra.mxu0 0
  %1236 = vmatprep.subr.bf16.mxu0 0
  %1237 = vmatpush1.bf16.msra.mxu0 0
  %1238 = vmatprep.subr.bf16.mxu0 0
  %1239 = vmatpush1.bf16.msra.mxu0 0
  %1240 = vmatprep.subr.bf16.mxu0 0
  %1241 = vmatpush1.bf16.msra.mxu0 0
  %1242 = vmatprep.subr.bf16.mxu0 0
  %1243 = vmatpush1.bf16.msra.mxu0 0
  %1244 = vmatprep.subr.bf16.mxu0 0
  %1245 = vmatpush1.bf16.msra.mxu0 0
  %1246 = vmatprep.mubr.bf16.mxu0 0
  %1247 = vmatmul.mubr.bf16.gmra.mrb[0].mxu0 %v1212
  %v1248 = vpop.f32.mrb[0].mxu0
  %v1249 = vadd.f32 %v1185, %v1248
  %v1250 = vpop.f32.mrb[0].mxu0
  %v1251 = vpop.f32.mrb[0].mxu0
  %v1252 = vpop.f32.mrb[0].mxu0
  %1253 = vdwg.mxu0
  %v1254 = vpack.c.bf16 %v1249, %v1249
  %v1255 = vld [vmem:[%s16] sm:$0xf]
  %v1256 = vld [vmem:[%s16 + $0x4] sm:$0xf]
  %v1257 = vld [vmem:[%s16 + $0x8] sm:$0xf]
  %v1258 = vld [vmem:[%s16 + $0xc] sm:$0xf]
  %v1259 = vld [vmem:[%s16 + $0x10] sm:$0xf]
  %v1260 = vld [vmem:[%s16 + $0x14] sm:$0xf]
  %v1261 = vld [vmem:[%s16 + $0x18] sm:$0xf]
  %v1262 = vld [vmem:[%s16 + $0x1c] sm:$0xf]
  %v1263 = vld [vmem:[%s17] sm:$0x1]
  %v1265 = vlaneseq
  %v1266 = vshrl.u32 %v1265, 7
  %v1267 = vsub.s32 0, %v1266
  %v1268 = vrot.slane %v1263, %v1267
  %v1278 = vunpack.c.l.b16 %v1255
  %v1279 = vunpack.c.l.b16 %v1256
  %v1280 = vunpack.c.l.b16 %v1257
  %v1281 = vunpack.c.l.b16 %v1258
  %v1282 = vunpack.c.l.b16 %v1259
  %v1283 = vunpack.c.l.b16 %v1260
  %v1284 = vunpack.c.l.b16 %v1261
  %v1285 = vunpack.c.l.b16 %v1262
  %v1286 = vpack.c.b16 %v1279, %v1278
  %v1287 = vpack.c.b16 %v1281, %v1280
  %v1288 = vpack.c.b16 %v1283, %v1282
  %v1289 = vpack.c.b16 %v1285, %v1284
  %v1295 = vsel %vm78, %v1254, 0
  %1297 = vmatprep.subr.bf16.mxu0 0
  %1298 = vmatpush1.bf16.msra.mxu0 %v1286
  %1299 = vmatprep.subr.bf16.mxu0 0
  %1300 = vmatpush1.bf16.msra.mxu0 %v1287
  %1301 = vmatprep.subr.bf16.mxu0 0
  %1302 = vmatpush1.bf16.msra.mxu0 %v1288
  %1303 = vmatprep.subr.bf16.mxu0 0
  %1304 = vmatpush1.bf16.msra.mxu0 %v1289
  %1305 = vmatprep.subr.bf16.mxu0 0
  %1306 = vmatpush1.bf16.msra.mxu0 0
  %1307 = vmatprep.subr.bf16.mxu0 0
  %1308 = vmatpush1.bf16.msra.mxu0 0
  %1309 = vmatprep.subr.bf16.mxu0 0
  %1310 = vmatpush1.bf16.msra.mxu0 0
  %1311 = vmatprep.subr.bf16.mxu0 0
  %1312 = vmatpush1.bf16.msra.mxu0 0
  %1313 = vmatprep.subr.bf16.mxu0 0
  %1314 = vmatpush1.bf16.msra.mxu0 0
  %1315 = vmatprep.subr.bf16.mxu0 0
  %1316 = vmatpush1.bf16.msra.mxu0 0
  %1317 = vmatprep.subr.bf16.mxu0 0
  %1318 = vmatpush1.bf16.msra.mxu0 0
  %1319 = vmatprep.subr.bf16.mxu0 0
  %1320 = vmatpush1.bf16.msra.mxu0 0
  %1321 = vmatprep.subr.bf16.mxu0 0
  %1322 = vmatpush1.bf16.msra.mxu0 0
  %1323 = vmatprep.subr.bf16.mxu0 0
  %1324 = vmatpush1.bf16.msra.mxu0 0
  %1325 = vmatprep.subr.bf16.mxu0 0
  %1326 = vmatpush1.bf16.msra.mxu0 0
  %1327 = vmatprep.subr.bf16.mxu0 0
  %1328 = vmatpush1.bf16.msra.mxu0 0
  %1329 = vmatprep.mubr.bf16.mxu0 0
  %1330 = vmatmul.mubr.bf16.gmra.mrb[0].mxu0 %v1295
  %v1331 = vpop.f32.mrb[0].mxu0
  %v1332 = vadd.f32 %v1268, %v1331
  %v1333 = vpop.f32.mrb[0].mxu0
  %v1334 = vpop.f32.mrb[0].mxu0
  %v1335 = vpop.f32.mrb[0].mxu0
  %1336 = vdwg.mxu0
  %v1337 = vld [vmem:[%s3] sm:$0xff]
  %v1338 = vld [vmem:[%s3 + $0x8] sm:$0xff]
  %v1339 = vld [vmem:[%s3 + $0x10] sm:$0x3]
  %s1340 = scalar_lea.vmem %s3, 24
  %v1341 = vld [vmem:[%s1340] sm:$0xff]
  %v1342 = vld [vmem:[%s1340 + $0x8] sm:$0xff]
  %v1343 = vld [vmem:[%s1340 + $0x10] sm:$0x3]
  %v1344 = vld [vmem:[%s4] sm:$0xff]
  %v1345 = vld [vmem:[%s4 + $0x8] sm:$0xff]
  %v1346 = vld [vmem:[%s4 + $0x10] sm:$0x3]
  %v1347 = vld [vmem:[%s5] sm:$0x1]
  %v1348 = vld [vmem:[%s5 + $0x1] sm:$0x1]
  %v1349 = vld [vmem:[%s5 + $0x2] sm:$0x1]
  %v1350 = vld [vmem:[%s5 + $0x3] sm:$0x1]
  %v1351 = vld [vmem:[%s1] sm:$0xff]
  %v1352 = vld [vmem:[%s1 + $0x8] sm:$0xff]
  %v1353 = vld [vmem:[%s1 + $0x10] sm:$0x3]
  %v1354 = vld [vmem:[%s7] sm:$0xff]
  %v1355 = vld [vmem:[%s7 + $0x8] sm:$0xff]
  %v1356 = vld [vmem:[%s7 + $0x10] sm:$0x3]
  %vm1357 = vcmask 15360
  %v1359 = vsel %vm1357, %v1354, 0
  %v1362 = vsel %vm1357, %v1355, 0
  %v1365 = vsel %vm1357, %v1356, 0
  %vm1367 = vcmask 1041408
  %v1369 = vsel %vm1367, %v1332, 0
  %1371 = vmatprep.subr.mxu0 0.0
  %1372 = vmatpush1.msra.mxu0 %v1369
  %1373 = vmatprep.subr.mxu0 0.0
  %1374 = vmatpush1.msra.mxu0 0.0
  %1375 = vmatprep.subr.mxu0 0.0
  %1376 = vmatpush1.msra.mxu0 0.0
  %1377 = vmatprep.subr.mxu0 0.0
  %1378 = vmatpush1.msra.mxu0 0.0
  %1379 = vmatprep.subr.mxu0 0.0
  %1380 = vmatpush1.msra.mxu0 0.0
  %1381 = vmatprep.subr.mxu0 0.0
  %1382 = vmatpush1.msra.mxu0 0.0
  %1383 = vmatprep.subr.mxu0 0.0
  %1384 = vmatpush1.msra.mxu0 0.0
  %1385 = vmatprep.subr.mxu0 0.0
  %1386 = vmatpush1.msra.mxu0 0.0
  %1387 = vmatprep.subr.mxu0 0.0
  %1388 = vmatpush1.msra.mxu0 0.0
  %1389 = vmatprep.subr.mxu0 0.0
  %1390 = vmatpush1.msra.mxu0 0.0
  %1391 = vmatprep.subr.mxu0 0.0
  %1392 = vmatpush1.msra.mxu0 0.0
  %1393 = vmatprep.subr.mxu0 0.0
  %1394 = vmatpush1.msra.mxu0 0.0
  %1395 = vmatprep.subr.mxu0 0.0
  %1396 = vmatpush1.msra.mxu0 0.0
  %1397 = vmatprep.subr.mxu0 0.0
  %1398 = vmatpush1.msra.mxu0 0.0
  %1399 = vmatprep.subr.mxu0 0.0
  %1400 = vmatpush1.msra.mxu0 0.0
  %1401 = vmatprep.subr.mxu0 0.0
  %1402 = vmatpush1.msra.mxu0 0.0
  %1403 = vmatprep.subr.mxu0 0.0
  %1404 = vmatpush1.msra.mxu0 0.0
  %1405 = vmatprep.subr.mxu0 0.0
  %1406 = vmatpush1.msra.mxu0 0.0
  %1407 = vmatprep.subr.mxu0 0.0
  %1408 = vmatpush1.msra.mxu0 0.0
  %1409 = vmatprep.subr.mxu0 0.0
  %1410 = vmatpush1.msra.mxu0 0.0
  %1411 = vmatprep.subr.mxu0 0.0
  %1412 = vmatpush1.msra.mxu0 0.0
  %1413 = vmatprep.subr.mxu0 0.0
  %1414 = vmatpush1.msra.mxu0 0.0
  %1415 = vmatprep.subr.mxu0 0.0
  %1416 = vmatpush1.msra.mxu0 0.0
  %1417 = vmatprep.subr.mxu0 0.0
  %1418 = vmatpush1.msra.mxu0 0.0
  %1419 = vmatprep.subr.mxu0 0.0
  %1420 = vmatpush1.msra.mxu0 0.0
  %1421 = vmatprep.subr.mxu0 0.0
  %1422 = vmatpush1.msra.mxu0 0.0
  %1423 = vmatprep.subr.mxu0 0.0
  %1424 = vmatpush1.msra.mxu0 0.0
  %1425 = vmatprep.subr.mxu0 0.0
  %1426 = vmatpush1.msra.mxu0 0.0
  %1427 = vmatprep.subr.mxu0 0.0
  %1428 = vmatpush1.msra.mxu0 0.0
  %1429 = vmatprep.subr.mxu0 0.0
  %1430 = vmatpush1.msra.mxu0 0.0
  %1431 = vmatprep.subr.mxu0 0.0
  %1432 = vmatpush1.msra.mxu0 0.0
  %1433 = vmatprep.subr.mxu0 0.0
  %1434 = vmatpush1.msra.mxu0 0.0
  %1435 = vmatprep.mubr.f32.mxu0 0.0
  %1436 = vmatmul.mubr.f32.gmra.mrb[0].mxu0 %v1359
  %v1437 = vpop.f32.mrb[0].mxu0
  %v1438 = vadd.f32 0.0, %v1437
  %v1439 = vpop.f32.mrb[0].mxu0
  %1440 = vmatprep.mubr.f32.mxu0 0.0
  %1441 = vmatmul.mubr.f32.gmra.mrb[0].mxu0 %v1362
  %v1442 = vpop.f32.mrb[0].mxu0
  %v1443 = vadd.f32 0.0, %v1442
  %v1444 = vpop.f32.mrb[0].mxu0
  %1445 = vmatprep.mubr.f32.mxu0 0.0
  %1446 = vmatmul.mubr.f32.gmra.mrb[0].mxu0 %v1365
  %v1447 = vpop.f32.mrb[0].mxu0
  %v1448 = vadd.f32 0.0, %v1447
  %v1449 = vpop.f32.mrb[0].mxu0
  %1450 = vdwg.mxu0
  %v1451 = vadd.f32 %v1351, %v1438
  %v1452 = vadd.f32 %v1352, %v1443
  %v1453 = vadd.f32 %v1353, %v1448
  %v1454 = vld [vmem:[%s19] sm:$0xf]
  %v1455 = vld [vmem:[%s19 + $0x4] sm:$0xf]
  %v1456 = vld [vmem:[%s19 + $0x8] sm:$0xf]
  %v1457 = vld [vmem:[%s19 + $0xc] sm:$0xf]
  %v1458 = vld [vmem:[%s19 + $0x10] sm:$0xf]
  %v1459 = vld [vmem:[%s19 + $0x14] sm:$0xf]
  %v1460 = vld [vmem:[%s19 + $0x18] sm:$0xf]
  %v1461 = vld [vmem:[%s19 + $0x1c] sm:$0xf]
  %v1462 = vld [vmem:[%s19 + $0x20] sm:$0xf]
  %v1463 = vld [vmem:[%s19 + $0x24] sm:$0xf]
  %v1464 = vld [vmem:[%s19 + $0x28] sm:$0xf]
  %v1465 = vld [vmem:[%s19 + $0x2c] sm:$0xf]
  %v1466 = vld [vmem:[%s19 + $0x30] sm:$0xf]
  %v1467 = vld [vmem:[%s19 + $0x34] sm:$0xf]
  %v1468 = vld [vmem:[%s19 + $0x38] sm:$0xf]
  %v1469 = vld [vmem:[%s19 + $0x3c] sm:$0xf]
  %v1470 = vld [vmem:[%s19 + $0x40] sm:$0xf]
  %v1471 = vld [vmem:[%s19 + $0x44] sm:$0xf]
  %v1472 = vld [vmem:[%s19 + $0x48] sm:$0xf]
  %v1473 = vld [vmem:[%s19 + $0x4c] sm:$0xf]
  %v1474 = vld [vmem:[%s19 + $0x50] sm:$0xf]
  %v1475 = vld [vmem:[%s19 + $0x54] sm:$0xf]
  %v1476 = vld [vmem:[%s19 + $0x58] sm:$0xf]
  %v1477 = vld [vmem:[%s19 + $0x5c] sm:$0xf]
  %v1478 = vld [vmem:[%s18] sm:$0x3]
  %v1479 = vmul.f32 %v1451, %v1451
  %v1480 = vmul.f32 %v1452, %v1452
  %v1481 = vmul.f32 %v1453, %v1453
  %vm1482 = vcmask 261120
  %v1483 = vsel %vm1482, %v1479, 0.0
  %1484 = vadd.xlane.f32.xlu0 %v1483
  %v1485 = vpop.xlane.xlu0 %1484
  %v1486 = vsel %vm1482, %v1480, 0.0
  %1487 = vadd.xlane.f32.xlu0 %v1486
  %v1488 = vpop.xlane.xlu0 %1487
  %vm1489 = vcmask 254976
  %v1490 = vsel %vm1489, %v1481, 0.0
  %1491 = vadd.xlane.f32.xlu0 %v1490
  %v1492 = vpop.xlane.xlu0 %1491
  %v1493 = vrcp.pop 32.0
  %v1494 = vmul.f32 %v1485, %v1493
  %v1495 = vmul.f32 %v1488, %v1493
  %v1496 = vmul.f32 %v1492, %v1493
  %v1497 = vadd.f32 %v1494, 1e-06
  %v1498 = vadd.f32 %v1495, 1e-06
  %v1499 = vadd.f32 %v1496, 1e-06
  %v1500 = vrsqrt.pop %v1497
  %v1501 = vrsqrt.pop %v1498
  %v1502 = vrsqrt.pop %v1499
  %v1503 = vmul.f32 %v1451, %v1500
  %v1504 = vmul.f32 %v1452, %v1501
  %v1505 = vmul.f32 %v1453, %v1502
  %v1506 = vlaneseq
  %v1507 = vshrl.u32 %v1506, 7
  %v1508 = vsub.s32 0, %v1507
  %v1509 = vrot.slane %v1478, %v1508
  %v1510 = vmul.f32 %v1503, %v1509
  %v1511 = vmul.f32 %v1504, %v1509
  %v1512 = vmul.f32 %v1505, %v1509
  %v1513 = vpack.c.bf16 %v1511, %v1510
  %v1514 = vpack.c.bf16 %v1512, %v1512
  %v1519 = vunpack.c.l.b16 %v1454
  %v1520 = vunpack.c.l.b16 %v1455
  %v1521 = vunpack.c.l.b16 %v1456
  %v1522 = vunpack.c.l.b16 %v1457
  %v1523 = vpack.c.b16 %v1520, %v1519
  %v1524 = vpack.c.b16 %v1522, %v1521
  %v1528 = vsel %vm1482, %v1513, 0
  %v1531 = vsel %vm1482, %v1514, 0
  %1533 = vmatprep.subr.bf16.mxu0 0
  %1534 = vmatpush1.bf16.msra.mxu0 %v1523
  %1535 = vmatprep.subr.bf16.mxu0 0
  %1536 = vmatpush1.bf16.msra.mxu0 %v1524
  %1537 = vmatprep.subr.bf16.mxu0 0
  %1538 = vmatpush1.bf16.msra.mxu0 0
  %1539 = vmatprep.subr.bf16.mxu0 0
  %1540 = vmatpush1.bf16.msra.mxu0 0
  %1541 = vmatprep.subr.bf16.mxu0 0
  %1542 = vmatpush1.bf16.msra.mxu0 0
  %1543 = vmatprep.subr.bf16.mxu0 0
  %1544 = vmatpush1.bf16.msra.mxu0 0
  %1545 = vmatprep.subr.bf16.mxu0 0
  %1546 = vmatpush1.bf16.msra.mxu0 0
  %1547 = vmatprep.subr.bf16.mxu0 0
  %1548 = vmatpush1.bf16.msra.mxu0 0
  %1549 = vmatprep.subr.bf16.mxu0 0
  %1550 = vmatpush1.bf16.msra.mxu0 0
  %1551 = vmatprep.subr.bf16.mxu0 0
  %1552 = vmatpush1.bf16.msra.mxu0 0
  %1553 = vmatprep.subr.bf16.mxu0 0
  %1554 = vmatpush1.bf16.msra.mxu0 0
  %1555 = vmatprep.subr.bf16.mxu0 0
  %1556 = vmatpush1.bf16.msra.mxu0 0
  %1557 = vmatprep.subr.bf16.mxu0 0
  %1558 = vmatpush1.bf16.msra.mxu0 0
  %1559 = vmatprep.subr.bf16.mxu0 0
  %1560 = vmatpush1.bf16.msra.mxu0 0
  %1561 = vmatprep.subr.bf16.mxu0 0
  %1562 = vmatpush1.bf16.msra.mxu0 0
  %1563 = vmatprep.subr.bf16.mxu0 0
  %1564 = vmatpush1.bf16.msra.mxu0 0
  %1565 = vmatprep.mubr.bf16.mxu0 0
  %1566 = vmatmul.mubr.bf16.gmra.mrb[0].mxu0 %v1528
  %v1567 = vpop.f32.mrb[0].mxu0
  %v1568 = vadd.f32 0.0, %v1567
  %v1569 = vpop.f32.mrb[0].mxu0
  %v1570 = vpop.f32.mrb[0].mxu0
  %v1571 = vadd.f32 0.0, %v1570
  %v1572 = vpop.f32.mrb[0].mxu0
  %1573 = vmatprep.mubr.bf16.mxu0 0
  %1574 = vmatmul.mubr.bf16.gmra.mrb[0].mxu0 %v1531
  %v1575 = vpop.f32.mrb[0].mxu0
  %v1576 = vadd.f32 0.0, %v1575
  %v1577 = vpop.f32.mrb[0].mxu0
  %v1578 = vpop.f32.mrb[0].mxu0
  %v1579 = vpop.f32.mrb[0].mxu0
  %1580 = vdwg.mxu0
  %v1585 = vunpack.c.l.b16 %v1458
  %v1586 = vunpack.c.l.b16 %v1459
  %v1587 = vunpack.c.l.b16 %v1460
  %v1588 = vunpack.c.l.b16 %v1461
  %v1589 = vpack.c.b16 %v1586, %v1585
  %v1590 = vpack.c.b16 %v1588, %v1587
  %1593 = vmatprep.subr.bf16.mxu0 0
  %1594 = vmatpush1.bf16.msra.mxu0 %v1589
  %1595 = vmatprep.subr.bf16.mxu0 0
  %1596 = vmatpush1.bf16.msra.mxu0 %v1590
  %1597 = vmatprep.subr.bf16.mxu0 0
  %1598 = vmatpush1.bf16.msra.mxu0 0
  %1599 = vmatprep.subr.bf16.mxu0 0
  %1600 = vmatpush1.bf16.msra.mxu0 0
  %1601 = vmatprep.subr.bf16.mxu0 0
  %1602 = vmatpush1.bf16.msra.mxu0 0
  %1603 = vmatprep.subr.bf16.mxu0 0
  %1604 = vmatpush1.bf16.msra.mxu0 0
  %1605 = vmatprep.subr.bf16.mxu0 0
  %1606 = vmatpush1.bf16.msra.mxu0 0
  %1607 = vmatprep.subr.bf16.mxu0 0
  %1608 = vmatpush1.bf16.msra.mxu0 0
  %1609 = vmatprep.subr.bf16.mxu0 0
  %1610 = vmatpush1.bf16.msra.mxu0 0
  %1611 = vmatprep.subr.bf16.mxu0 0
  %1612 = vmatpush1.bf16.msra.mxu0 0
  %1613 = vmatprep.subr.bf16.mxu0 0
  %1614 = vmatpush1.bf16.msra.mxu0 0
  %1615 = vmatprep.subr.bf16.mxu0 0
  %1616 = vmatpush1.bf16.msra.mxu0 0
  %1617 = vmatprep.subr.bf16.mxu0 0
  %1618 = vmatpush1.bf16.msra.mxu0 0
  %1619 = vmatprep.subr.bf16.mxu0 0
  %1620 = vmatpush1.bf16.msra.mxu0 0
  %1621 = vmatprep.subr.bf16.mxu0 0
  %1622 = vmatpush1.bf16.msra.mxu0 0
  %1623 = vmatprep.subr.bf16.mxu0 0
  %1624 = vmatpush1.bf16.msra.mxu0 0
  %1625 = vmatprep.mubr.bf16.mxu0 0
  %1626 = vmatmul.mubr.bf16.gmra.mrb[0].mxu0 %v1528
  %v1627 = vpop.f32.mrb[0].mxu0
  %v1628 = vadd.f32 0.0, %v1627
  %v1629 = vpop.f32.mrb[0].mxu0
  %v1630 = vpop.f32.mrb[0].mxu0
  %v1631 = vadd.f32 0.0, %v1630
  %v1632 = vpop.f32.mrb[0].mxu0
  %1633 = vmatprep.mubr.bf16.mxu0 0
  %1634 = vmatmul.mubr.bf16.gmra.mrb[0].mxu0 %v1531
  %v1635 = vpop.f32.mrb[0].mxu0
  %v1636 = vadd.f32 0.0, %v1635
  %v1637 = vpop.f32.mrb[0].mxu0
  %v1638 = vpop.f32.mrb[0].mxu0
  %v1639 = vpop.f32.mrb[0].mxu0
  %1640 = vdwg.mxu0
  %v1645 = vunpack.c.l.b16 %v1462
  %v1646 = vunpack.c.l.b16 %v1463
  %v1647 = vunpack.c.l.b16 %v1464
  %v1648 = vunpack.c.l.b16 %v1465
  %v1649 = vpack.c.b16 %v1646, %v1645
  %v1650 = vpack.c.b16 %v1648, %v1647
  %1653 = vmatprep.subr.bf16.mxu0 0
  %1654 = vmatpush1.bf16.msra.mxu0 %v1649
  %1655 = vmatprep.subr.bf16.mxu0 0
  %1656 = vmatpush1.bf16.msra.mxu0 %v1650
  %1657 = vmatprep.subr.bf16.mxu0 0
  %1658 = vmatpush1.bf16.msra.mxu0 0
  %1659 = vmatprep.subr.bf16.mxu0 0
  %1660 = vmatpush1.bf16.msra.mxu0 0
  %1661 = vmatprep.subr.bf16.mxu0 0
  %1662 = vmatpush1.bf16.msra.mxu0 0
  %1663 = vmatprep.subr.bf16.mxu0 0
  %1664 = vmatpush1.bf16.msra.mxu0 0
  %1665 = vmatprep.subr.bf16.mxu0 0
  %1666 = vmatpush1.bf16.msra.mxu0 0
  %1667 = vmatprep.subr.bf16.mxu0 0
  %1668 = vmatpush1.bf16.msra.mxu0 0
  %1669 = vmatprep.subr.bf16.mxu0 0
  %1670 = vmatpush1.bf16.msra.mxu0 0
  %1671 = vmatprep.subr.bf16.mxu0 0
  %1672 = vmatpush1.bf16.msra.mxu0 0
  %1673 = vmatprep.subr.bf16.mxu0 0
  %1674 = vmatpush1.bf16.msra.mxu0 0
  %1675 = vmatprep.subr.bf16.mxu0 0
  %1676 = vmatpush1.bf16.msra.mxu0 0
  %1677 = vmatprep.subr.bf16.mxu0 0
  %1678 = vmatpush1.bf16.msra.mxu0 0
  %1679 = vmatprep.subr.bf16.mxu0 0
  %1680 = vmatpush1.bf16.msra.mxu0 0
  %1681 = vmatprep.subr.bf16.mxu0 0
  %1682 = vmatpush1.bf16.msra.mxu0 0
  %1683 = vmatprep.subr.bf16.mxu0 0
  %1684 = vmatpush1.bf16.msra.mxu0 0
  %1685 = vmatprep.mubr.bf16.mxu0 0
  %1686 = vmatmul.mubr.bf16.gmra.mrb[0].mxu0 %v1528
  %v1687 = vpop.f32.mrb[0].mxu0
  %v1688 = vadd.f32 0.0, %v1687
  %v1689 = vpop.f32.mrb[0].mxu0
  %v1690 = vpop.f32.mrb[0].mxu0
  %v1691 = vadd.f32 0.0, %v1690
  %v1692 = vpop.f32.mrb[0].mxu0
  %1693 = vmatprep.mubr.bf16.mxu0 0
  %1694 = vmatmul.mubr.bf16.gmra.mrb[0].mxu0 %v1531
  %v1695 = vpop.f32.mrb[0].mxu0
  %v1696 = vadd.f32 0.0, %v1695
  %v1697 = vpop.f32.mrb[0].mxu0
  %v1698 = vpop.f32.mrb[0].mxu0
  %v1699 = vpop.f32.mrb[0].mxu0
  %1700 = vdwg.mxu0
  %v1705 = vunpack.c.l.b16 %v1466
  %v1706 = vunpack.c.l.b16 %v1467
  %v1707 = vunpack.c.l.b16 %v1468
  %v1708 = vunpack.c.l.b16 %v1469
  %v1709 = vpack.c.b16 %v1706, %v1705
  %v1710 = vpack.c.b16 %v1708, %v1707
  %1713 = vmatprep.subr.bf16.mxu0 0
  %1714 = vmatpush1.bf16.msra.mxu0 %v1709
  %1715 = vmatprep.subr.bf16.mxu0 0
  %1716 = vmatpush1.bf16.msra.mxu0 %v1710
  %1717 = vmatprep.subr.bf16.mxu0 0
  %1718 = vmatpush1.bf16.msra.mxu0 0
  %1719 = vmatprep.subr.bf16.mxu0 0
  %1720 = vmatpush1.bf16.msra.mxu0 0
  %1721 = vmatprep.subr.bf16.mxu0 0
  %1722 = vmatpush1.bf16.msra.mxu0 0
  %1723 = vmatprep.subr.bf16.mxu0 0
  %1724 = vmatpush1.bf16.msra.mxu0 0
  %1725 = vmatprep.subr.bf16.mxu0 0
  %1726 = vmatpush1.bf16.msra.mxu0 0
  %1727 = vmatprep.subr.bf16.mxu0 0
  %1728 = vmatpush1.bf16.msra.mxu0 0
  %1729 = vmatprep.subr.bf16.mxu0 0
  %1730 = vmatpush1.bf16.msra.mxu0 0
  %1731 = vmatprep.subr.bf16.mxu0 0
  %1732 = vmatpush1.bf16.msra.mxu0 0
  %1733 = vmatprep.subr.bf16.mxu0 0
  %1734 = vmatpush1.bf16.msra.mxu0 0
  %1735 = vmatprep.subr.bf16.mxu0 0
  %1736 = vmatpush1.bf16.msra.mxu0 0
  %1737 = vmatprep.subr.bf16.mxu0 0
  %1738 = vmatpush1.bf16.msra.mxu0 0
  %1739 = vmatprep.subr.bf16.mxu0 0
  %1740 = vmatpush1.bf16.msra.mxu0 0
  %1741 = vmatprep.subr.bf16.mxu0 0
  %1742 = vmatpush1.bf16.msra.mxu0 0
  %1743 = vmatprep.subr.bf16.mxu0 0
  %1744 = vmatpush1.bf16.msra.mxu0 0
  %1745 = vmatprep.mubr.bf16.mxu0 0
  %1746 = vmatmul.mubr.bf16.gmra.mrb[0].mxu0 %v1528
  %v1747 = vpop.f32.mrb[0].mxu0
  %v1748 = vadd.f32 0.0, %v1747
  %v1749 = vpop.f32.mrb[0].mxu0
  %v1750 = vpop.f32.mrb[0].mxu0
  %v1751 = vadd.f32 0.0, %v1750
  %v1752 = vpop.f32.mrb[0].mxu0
  %1753 = vmatprep.mubr.bf16.mxu0 0
  %1754 = vmatmul.mubr.bf16.gmra.mrb[0].mxu0 %v1531
  %v1755 = vpop.f32.mrb[0].mxu0
  %v1756 = vadd.f32 0.0, %v1755
  %v1757 = vpop.f32.mrb[0].mxu0
  %v1758 = vpop.f32.mrb[0].mxu0
  %v1759 = vpop.f32.mrb[0].mxu0
  %1760 = vdwg.mxu0
  %v1765 = vunpack.c.l.b16 %v1470
  %v1766 = vunpack.c.l.b16 %v1471
  %v1767 = vunpack.c.l.b16 %v1472
  %v1768 = vunpack.c.l.b16 %v1473
  %v1769 = vpack.c.b16 %v1766, %v1765
  %v1770 = vpack.c.b16 %v1768, %v1767
  %1773 = vmatprep.subr.bf16.mxu0 0
  %1774 = vmatpush1.bf16.msra.mxu0 %v1769
  %1775 = vmatprep.subr.bf16.mxu0 0
  %1776 = vmatpush1.bf16.msra.mxu0 %v1770
  %1777 = vmatprep.subr.bf16.mxu0 0
  %1778 = vmatpush1.bf16.msra.mxu0 0
  %1779 = vmatprep.subr.bf16.mxu0 0
  %1780 = vmatpush1.bf16.msra.mxu0 0
  %1781 = vmatprep.subr.bf16.mxu0 0
  %1782 = vmatpush1.bf16.msra.mxu0 0
  %1783 = vmatprep.subr.bf16.mxu0 0
  %1784 = vmatpush1.bf16.msra.mxu0 0
  %1785 = vmatprep.subr.bf16.mxu0 0
  %1786 = vmatpush1.bf16.msra.mxu0 0
  %1787 = vmatprep.subr.bf16.mxu0 0
  %1788 = vmatpush1.bf16.msra.mxu0 0
  %1789 = vmatprep.subr.bf16.mxu0 0
  %1790 = vmatpush1.bf16.msra.mxu0 0
  %1791 = vmatprep.subr.bf16.mxu0 0
  %1792 = vmatpush1.bf16.msra.mxu0 0
  %1793 = vmatprep.subr.bf16.mxu0 0
  %1794 = vmatpush1.bf16.msra.mxu0 0
  %1795 = vmatprep.subr.bf16.mxu0 0
  %1796 = vmatpush1.bf16.msra.mxu0 0
  %1797 = vmatprep.subr.bf16.mxu0 0
  %1798 = vmatpush1.bf16.msra.mxu0 0
  %1799 = vmatprep.subr.bf16.mxu0 0
  %1800 = vmatpush1.bf16.msra.mxu0 0
  %1801 = vmatprep.subr.bf16.mxu0 0
  %1802 = vmatpush1.bf16.msra.mxu0 0
  %1803 = vmatprep.subr.bf16.mxu0 0
  %1804 = vmatpush1.bf16.msra.mxu0 0
  %1805 = vmatprep.mubr.bf16.mxu0 0
  %1806 = vmatmul.mubr.bf16.gmra.mrb[0].mxu0 %v1528
  %v1807 = vpop.f32.mrb[0].mxu0
  %v1808 = vadd.f32 0.0, %v1807
  %v1809 = vpop.f32.mrb[0].mxu0
  %v1810 = vpop.f32.mrb[0].mxu0
  %v1811 = vadd.f32 0.0, %v1810
  %v1812 = vpop.f32.mrb[0].mxu0
  %1813 = vmatprep.mubr.bf16.mxu0 0
  %1814 = vmatmul.mubr.bf16.gmra.mrb[0].mxu0 %v1531
  %v1815 = vpop.f32.mrb[0].mxu0
  %v1816 = vadd.f32 0.0, %v1815
  %v1817 = vpop.f32.mrb[0].mxu0
  %v1818 = vpop.f32.mrb[0].mxu0
  %v1819 = vpop.f32.mrb[0].mxu0
  %1820 = vdwg.mxu0
  %v1821 = vmul.f32 %v1568, %v1337
  %v1822 = vmul.f32 %v1571, %v1338
  %v1823 = vmul.f32 %v1576, %v1339
  %v1824 = vmul.f32 %v1628, %v1341
  %v1825 = vmul.f32 %v1631, %v1342
  %v1826 = vmul.f32 %v1636, %v1343
  %v1827 = vadd.f32 %v1821, %v1824
  %v1828 = vadd.f32 %v1822, %v1825
  %v1829 = vadd.f32 %v1823, %v1826
  %v1830 = vmul.f32 %v1688, %v1337
  %v1831 = vmul.f32 %v1691, %v1338
  %v1832 = vmul.f32 %v1696, %v1339
  %v1833 = vmul.f32 %v1748, %v1341
  %v1834 = vmul.f32 %v1751, %v1342
  %v1835 = vmul.f32 %v1756, %v1343
  %v1836 = vadd.f32 %v1830, %v1833
  %v1837 = vadd.f32 %v1831, %v1834
  %v1838 = vadd.f32 %v1832, %v1835
  %v1843 = vlaneseq
  %v1844 = vshrl.u32 %v1843, 7
  %v1845 = vsub.s32 0, %v1844
  %v1846 = vrot.slane %v1347, %v1845
  %v1847 = vlaneseq
  %v1848 = vshrl.u32 %v1847, 7
  %v1849 = vsub.s32 0, %v1848
  %v1850 = vrot.slane %v1348, %v1849
  %v1851 = vlaneseq
  %v1852 = vshrl.u32 %v1851, 7
  %v1853 = vsub.s32 0, %v1852
  %v1854 = vrot.slane %v1349, %v1853
  %v1855 = vlaneseq
  %v1856 = vshrl.u32 %v1855, 7
  %v1857 = vsub.s32 0, %v1856
  %v1858 = vrot.slane %v1350, %v1857
  %v1863 = vmul.f32 %v1827, %v1846
  %v1864 = vmul.f32 %v1828, %v1846
  %v1865 = vmul.f32 %v1829, %v1846
  %v1866 = vmul.f32 %v1827, %v1850
  %v1867 = vmul.f32 %v1828, %v1850
  %v1868 = vmul.f32 %v1829, %v1850
  %v1869 = vmul.f32 %v1827, %v1854
  %v1870 = vmul.f32 %v1828, %v1854
  %v1871 = vmul.f32 %v1829, %v1854
  %v1872 = vmul.f32 %v1827, %v1858
  %v1873 = vmul.f32 %v1828, %v1858
  %v1874 = vmul.f32 %v1829, %v1858
  %v1875 = vpack.c.bf16 %v1864, %v1863
  %v1876 = vpack.c.bf16 %v1865, %v1865
  %v1877 = vpack.c.bf16 %v1867, %v1866
  %v1878 = vpack.c.bf16 %v1868, %v1868
  %v1879 = vpack.c.bf16 %v1870, %v1869
  %v1880 = vpack.c.bf16 %v1871, %v1871
  %v1881 = vpack.c.bf16 %v1873, %v1872
  %v1882 = vpack.c.bf16 %v1874, %v1874
  %v1883 = vpack.c.bf16 %v1837, %v1836
  %v1884 = vpack.c.bf16 %v1838, %v1838
  %v1886 = vsel %vm1482, %v1875, 0
  %v1889 = vsel %vm1482, %v1876, 0
  %v1892 = vsel %vm1482, %v1883, 0
  %v1895 = vsel %vm1482, %v1884, 0
  %1897 = vmatprep.subr.bf16.mxu0 0
  %1898 = vmatpush1.bf16.xpose.msra.mxu0 %v1892
  %1899 = vmatprep.subr.bf16.mxu0 0
  %1900 = vmatpush1.bf16.xpose.msra.mxu0 %v1895
  %1901 = vmatprep.subr.bf16.mxu0 0
  %1902 = vmatpush1.bf16.xpose.msra.mxu0 0
  %1903 = vmatprep.subr.bf16.mxu0 0
  %1904 = vmatpush1.bf16.xpose.msra.mxu0 0
  %1905 = vmatprep.subr.bf16.mxu0 0
  %1906 = vmatpush1.bf16.xpose.msra.mxu0 0
  %1907 = vmatprep.subr.bf16.mxu0 0
  %1908 = vmatpush1.bf16.xpose.msra.mxu0 0
  %1909 = vmatprep.subr.bf16.mxu0 0
  %1910 = vmatpush1.bf16.xpose.msra.mxu0 0
  %1911 = vmatprep.subr.bf16.mxu0 0
  %1912 = vmatpush1.bf16.xpose.msra.mxu0 0
  %1913 = vmatprep.subr.bf16.mxu0 0
  %1914 = vmatpush1.bf16.xpose.msra.mxu0 0
  %1915 = vmatprep.subr.bf16.mxu0 0
  %1916 = vmatpush1.bf16.xpose.msra.mxu0 0
  %1917 = vmatprep.subr.bf16.mxu0 0
  %1918 = vmatpush1.bf16.xpose.msra.mxu0 0
  %1919 = vmatprep.subr.bf16.mxu0 0
  %1920 = vmatpush1.bf16.xpose.msra.mxu0 0
  %1921 = vmatprep.subr.bf16.mxu0 0
  %1922 = vmatpush1.bf16.xpose.msra.mxu0 0
  %1923 = vmatprep.subr.bf16.mxu0 0
  %1924 = vmatpush1.bf16.xpose.msra.mxu0 0
  %1925 = vmatprep.subr.bf16.mxu0 0
  %1926 = vmatpush1.bf16.xpose.msra.mxu0 0
  %1927 = vmatprep.subr.bf16.mxu0 0
  %1928 = vmatpush1.bf16.xpose.msra.mxu0 0
  %1929 = vmatprep.mubr.bf16.mxu0 0
  %1930 = vmatmul.mubr.bf16.gmra.mrb[0].mxu0 %v1886
  %v1931 = vpop.f32.mrb[0].mxu0
  %v1932 = vadd.f32 %v1344, %v1931
  %v1933 = vpop.f32.mrb[0].mxu0
  %v1934 = vpop.f32.mrb[0].mxu0
  %v1935 = vadd.f32 %v1345, %v1934
  %v1936 = vpop.f32.mrb[0].mxu0
  %1937 = vmatprep.mubr.bf16.mxu0 0
  %1938 = vmatmul.mubr.bf16.gmra.mrb[0].mxu0 %v1889
  %v1939 = vpop.f32.mrb[0].mxu0
  %v1940 = vadd.f32 %v1346, %v1939
  %v1941 = vpop.f32.mrb[0].mxu0
  %v1942 = vpop.f32.mrb[0].mxu0
  %v1943 = vpop.f32.mrb[0].mxu0
  %1944 = vdwg.mxu0
  %v1946 = vsel %vm1482, %v1877, 0
  %v1949 = vsel %vm1482, %v1878, 0
  %1951 = vmatprep.subr.bf16.mxu0 0
  %1952 = vmatpush1.bf16.xpose.msra.mxu0 %v1892
  %1953 = vmatprep.subr.bf16.mxu0 0
  %1954 = vmatpush1.bf16.xpose.msra.mxu0 %v1895
  %1955 = vmatprep.subr.bf16.mxu0 0
  %1956 = vmatpush1.bf16.xpose.msra.mxu0 0
  %1957 = vmatprep.subr.bf16.mxu0 0
  %1958 = vmatpush1.bf16.xpose.msra.mxu0 0
  %1959 = vmatprep.subr.bf16.mxu0 0
  %1960 = vmatpush1.bf16.xpose.msra.mxu0 0
  %1961 = vmatprep.subr.bf16.mxu0 0
  %1962 = vmatpush1.bf16.xpose.msra.mxu0 0
  %1963 = vmatprep.subr.bf16.mxu0 0
  %1964 = vmatpush1.bf16.xpose.msra.mxu0 0
  %1965 = vmatprep.subr.bf16.mxu0 0
  %1966 = vmatpush1.bf16.xpose.msra.mxu0 0
  %1967 = vmatprep.subr.bf16.mxu0 0
  %1968 = vmatpush1.bf16.xpose.msra.mxu0 0
  %1969 = vmatprep.subr.bf16.mxu0 0
  %1970 = vmatpush1.bf16.xpose.msra.mxu0 0
  %1971 = vmatprep.subr.bf16.mxu0 0
  %1972 = vmatpush1.bf16.xpose.msra.mxu0 0
  %1973 = vmatprep.subr.bf16.mxu0 0
  %1974 = vmatpush1.bf16.xpose.msra.mxu0 0
  %1975 = vmatprep.subr.bf16.mxu0 0
  %1976 = vmatpush1.bf16.xpose.msra.mxu0 0
  %1977 = vmatprep.subr.bf16.mxu0 0
  %1978 = vmatpush1.bf16.xpose.msra.mxu0 0
  %1979 = vmatprep.subr.bf16.mxu0 0
  %1980 = vmatpush1.bf16.xpose.msra.mxu0 0
  %1981 = vmatprep.subr.bf16.mxu0 0
  %1982 = vmatpush1.bf16.xpose.msra.mxu0 0
  %1983 = vmatprep.mubr.bf16.mxu0 0
  %1984 = vmatmul.mubr.bf16.gmra.mrb[0].mxu0 %v1946
  %v1985 = vpop.f32.mrb[0].mxu0
  %v1986 = vadd.f32 %v1344, %v1985
  %v1987 = vpop.f32.mrb[0].mxu0
  %v1988 = vpop.f32.mrb[0].mxu0
  %v1989 = vadd.f32 %v1345, %v1988
  %v1990 = vpop.f32.mrb[0].mxu0
  %1991 = vmatprep.mubr.bf16.mxu0 0
  %1992 = vmatmul.mubr.bf16.gmra.mrb[0].mxu0 %v1949
  %v1993 = vpop.f32.mrb[0].mxu0
  %v1994 = vadd.f32 %v1346, %v1993
  %v1995 = vpop.f32.mrb[0].mxu0
  %v1996 = vpop.f32.mrb[0].mxu0
  %v1997 = vpop.f32.mrb[0].mxu0
  %1998 = vdwg.mxu0
  %v2000 = vsel %vm1482, %v1879, 0
  %v2003 = vsel %vm1482, %v1880, 0
  %2005 = vmatprep.subr.bf16.mxu0 0
  %2006 = vmatpush1.bf16.xpose.msra.mxu0 %v1892
  %2007 = vmatprep.subr.bf16.mxu0 0
  %2008 = vmatpush1.bf16.xpose.msra.mxu0 %v1895
  %2009 = vmatprep.subr.bf16.mxu0 0
  %2010 = vmatpush1.bf16.xpose.msra.mxu0 0
  %2011 = vmatprep.subr.bf16.mxu0 0
  %2012 = vmatpush1.bf16.xpose.msra.mxu0 0
  %2013 = vmatprep.subr.bf16.mxu0 0
  %2014 = vmatpush1.bf16.xpose.msra.mxu0 0
  %2015 = vmatprep.subr.bf16.mxu0 0
  %2016 = vmatpush1.bf16.xpose.msra.mxu0 0
  %2017 = vmatprep.subr.bf16.mxu0 0
  %2018 = vmatpush1.bf16.xpose.msra.mxu0 0
  %2019 = vmatprep.subr.bf16.mxu0 0
  %2020 = vmatpush1.bf16.xpose.msra.mxu0 0
  %2021 = vmatprep.subr.bf16.mxu0 0
  %2022 = vmatpush1.bf16.xpose.msra.mxu0 0
  %2023 = vmatprep.subr.bf16.mxu0 0
  %2024 = vmatpush1.bf16.xpose.msra.mxu0 0
  %2025 = vmatprep.subr.bf16.mxu0 0
  %2026 = vmatpush1.bf16.xpose.msra.mxu0 0
  %2027 = vmatprep.subr.bf16.mxu0 0
  %2028 = vmatpush1.bf16.xpose.msra.mxu0 0
  %2029 = vmatprep.subr.bf16.mxu0 0
  %2030 = vmatpush1.bf16.xpose.msra.mxu0 0
  %2031 = vmatprep.subr.bf16.mxu0 0
  %2032 = vmatpush1.bf16.xpose.msra.mxu0 0
  %2033 = vmatprep.subr.bf16.mxu0 0
  %2034 = vmatpush1.bf16.xpose.msra.mxu0 0
  %2035 = vmatprep.subr.bf16.mxu0 0
  %2036 = vmatpush1.bf16.xpose.msra.mxu0 0
  %2037 = vmatprep.mubr.bf16.mxu0 0
  %2038 = vmatmul.mubr.bf16.gmra.mrb[0].mxu0 %v2000
  %v2039 = vpop.f32.mrb[0].mxu0
  %v2040 = vadd.f32 %v1344, %v2039
  %v2041 = vpop.f32.mrb[0].mxu0
  %v2042 = vpop.f32.mrb[0].mxu0
  %v2043 = vadd.f32 %v1345, %v2042
  %v2044 = vpop.f32.mrb[0].mxu0
  %2045 = vmatprep.mubr.bf16.mxu0 0
  %2046 = vmatmul.mubr.bf16.gmra.mrb[0].mxu0 %v2003
  %v2047 = vpop.f32.mrb[0].mxu0
  %v2048 = vadd.f32 %v1346, %v2047
  %v2049 = vpop.f32.mrb[0].mxu0
  %v2050 = vpop.f32.mrb[0].mxu0
  %v2051 = vpop.f32.mrb[0].mxu0
  %2052 = vdwg.mxu0
  %v2054 = vsel %vm1482, %v1881, 0
  %v2057 = vsel %vm1482, %v1882, 0
  %2059 = vmatprep.subr.bf16.mxu0 0
  %2060 = vmatpush1.bf16.xpose.msra.mxu0 %v1892
  %2061 = vmatprep.subr.bf16.mxu0 0
  %2062 = vmatpush1.bf16.xpose.msra.mxu0 %v1895
  %2063 = vmatprep.subr.bf16.mxu0 0
  %2064 = vmatpush1.bf16.xpose.msra.mxu0 0
  %2065 = vmatprep.subr.bf16.mxu0 0
  %2066 = vmatpush1.bf16.xpose.msra.mxu0 0
  %2067 = vmatprep.subr.bf16.mxu0 0
  %2068 = vmatpush1.bf16.xpose.msra.mxu0 0
  %2069 = vmatprep.subr.bf16.mxu0 0
  %2070 = vmatpush1.bf16.xpose.msra.mxu0 0
  %2071 = vmatprep.subr.bf16.mxu0 0
  %2072 = vmatpush1.bf16.xpose.msra.mxu0 0
  %2073 = vmatprep.subr.bf16.mxu0 0
  %2074 = vmatpush1.bf16.xpose.msra.mxu0 0
  %2075 = vmatprep.subr.bf16.mxu0 0
  %2076 = vmatpush1.bf16.xpose.msra.mxu0 0
  %2077 = vmatprep.subr.bf16.mxu0 0
  %2078 = vmatpush1.bf16.xpose.msra.mxu0 0
  %2079 = vmatprep.subr.bf16.mxu0 0
  %2080 = vmatpush1.bf16.xpose.msra.mxu0 0
  %2081 = vmatprep.subr.bf16.mxu0 0
  %2082 = vmatpush1.bf16.xpose.msra.mxu0 0
  %2083 = vmatprep.subr.bf16.mxu0 0
  %2084 = vmatpush1.bf16.xpose.msra.mxu0 0
  %2085 = vmatprep.subr.bf16.mxu0 0
  %2086 = vmatpush1.bf16.xpose.msra.mxu0 0
  %2087 = vmatprep.subr.bf16.mxu0 0
  %2088 = vmatpush1.bf16.xpose.msra.mxu0 0
  %2089 = vmatprep.subr.bf16.mxu0 0
  %2090 = vmatpush1.bf16.xpose.msra.mxu0 0
  %2091 = vmatprep.mubr.bf16.mxu0 0
  %2092 = vmatmul.mubr.bf16.gmra.mrb[0].mxu0 %v2054
  %v2093 = vpop.f32.mrb[0].mxu0
  %v2094 = vadd.f32 %v1344, %v2093
  %v2095 = vpop.f32.mrb[0].mxu0
  %v2096 = vpop.f32.mrb[0].mxu0
  %v2097 = vadd.f32 %v1345, %v2096
  %v2098 = vpop.f32.mrb[0].mxu0
  %2099 = vmatprep.mubr.bf16.mxu0 0
  %2100 = vmatmul.mubr.bf16.gmra.mrb[0].mxu0 %v2057
  %v2101 = vpop.f32.mrb[0].mxu0
  %v2102 = vadd.f32 %v1346, %v2101
  %v2103 = vpop.f32.mrb[0].mxu0
  %v2104 = vpop.f32.mrb[0].mxu0
  %v2105 = vpop.f32.mrb[0].mxu0
  %2106 = vdwg.mxu0
  %vm2107 = vcmask 146432
  %v2108 = vsel %vm2107, %v1932, -inf
  %2109 = vmax.xlane.f32.xlu0 %v2108
  %v2110 = vpop.xlane.xlu0 %2109
  %v2111 = vsel %vm2107, %v1935, -inf
  %2112 = vmax.xlane.f32.xlu0 %v2111
  %v2113 = vpop.xlane.xlu0 %2112
  %vm2114 = vcmask 140288
  %v2115 = vsel %vm2114, %v1940, -inf
  %2116 = vmax.xlane.f32.xlu0 %v2115
  %v2117 = vpop.xlane.xlu0 %2116
  %v2118 = vsel %vm2107, %v1986, -inf
  %2119 = vmax.xlane.f32.xlu0 %v2118
  %v2120 = vpop.xlane.xlu0 %2119
  %v2121 = vsel %vm2107, %v1989, -inf
  %2122 = vmax.xlane.f32.xlu0 %v2121
  %v2123 = vpop.xlane.xlu0 %2122
  %v2124 = vsel %vm2114, %v1994, -inf
  %2125 = vmax.xlane.f32.xlu0 %v2124
  %v2126 = vpop.xlane.xlu0 %2125
  %v2127 = vsel %vm2107, %v2040, -inf
  %2128 = vmax.xlane.f32.xlu0 %v2127
  %v2129 = vpop.xlane.xlu0 %2128
  %v2130 = vsel %vm2107, %v2043, -inf
  %2131 = vmax.xlane.f32.xlu0 %v2130
  %v2132 = vpop.xlane.xlu0 %2131
  %v2133 = vsel %vm2114, %v2048, -inf
  %2134 = vmax.xlane.f32.xlu0 %v2133
  %v2135 = vpop.xlane.xlu0 %2134
  %v2136 = vsel %vm2107, %v2094, -inf
  %2137 = vmax.xlane.f32.xlu0 %v2136
  %v2138 = vpop.xlane.xlu0 %2137
  %v2139 = vsel %vm2107, %v2097, -inf
  %2140 = vmax.xlane.f32.xlu0 %v2139
  %v2141 = vpop.xlane.xlu0 %2140
  %v2142 = vsel %vm2114, %v2102, -inf
  %2143 = vmax.xlane.f32.xlu0 %v2142
  %v2144 = vpop.xlane.xlu0 %2143
  %v2145 = vsub.f32 %v1932, %v2110
  %v2146 = vsub.f32 %v1935, %v2113
  %v2147 = vsub.f32 %v1940, %v2117
  %v2148 = vsub.f32 %v1986, %v2120
  %v2149 = vsub.f32 %v1989, %v2123
  %v2150 = vsub.f32 %v1994, %v2126
  %v2151 = vsub.f32 %v2040, %v2129
  %v2152 = vsub.f32 %v2043, %v2132
  %v2153 = vsub.f32 %v2048, %v2135
  %v2154 = vsub.f32 %v2094, %v2138
  %v2155 = vsub.f32 %v2097, %v2141
  %v2156 = vsub.f32 %v2102, %v2144
  %v2157 = vmul.f32 %v2145, 1.442695
  %v2158 = vpow.pop %v2157
  %v2159 = vmul.f32 %v2146, 1.442695
  %v2160 = vpow.pop %v2159
  %v2161 = vmul.f32 %v2147, 1.442695
  %v2162 = vpow.pop %v2161
  %v2163 = vmul.f32 %v2148, 1.442695
  %v2164 = vpow.pop %v2163
  %v2165 = vmul.f32 %v2149, 1.442695
  %v2166 = vpow.pop %v2165
  %v2167 = vmul.f32 %v2150, 1.442695
  %v2168 = vpow.pop %v2167
  %v2169 = vmul.f32 %v2151, 1.442695
  %v2170 = vpow.pop %v2169
  %v2171 = vmul.f32 %v2152, 1.442695
  %v2172 = vpow.pop %v2171
  %v2173 = vmul.f32 %v2153, 1.442695
  %v2174 = vpow.pop %v2173
  %v2175 = vmul.f32 %v2154, 1.442695
  %v2176 = vpow.pop %v2175
  %v2177 = vmul.f32 %v2155, 1.442695
  %v2178 = vpow.pop %v2177
  %v2179 = vmul.f32 %v2156, 1.442695
  %v2180 = vpow.pop %v2179
  %v2181 = vsel %vm2107, %v2158, 0.0
  %2182 = vadd.xlane.f32.xlu0 %v2181
  %v2183 = vpop.xlane.xlu0 %2182
  %v2184 = vsel %vm2107, %v2160, 0.0
  %2185 = vadd.xlane.f32.xlu0 %v2184
  %v2186 = vpop.xlane.xlu0 %2185
  %v2187 = vsel %vm2114, %v2162, 0.0
  %2188 = vadd.xlane.f32.xlu0 %v2187
  %v2189 = vpop.xlane.xlu0 %2188
  %v2190 = vsel %vm2107, %v2164, 0.0
  %2191 = vadd.xlane.f32.xlu0 %v2190
  %v2192 = vpop.xlane.xlu0 %2191
  %v2193 = vsel %vm2107, %v2166, 0.0
  %2194 = vadd.xlane.f32.xlu0 %v2193
  %v2195 = vpop.xlane.xlu0 %2194
  %v2196 = vsel %vm2114, %v2168, 0.0
  %2197 = vadd.xlane.f32.xlu0 %v2196
  %v2198 = vpop.xlane.xlu0 %2197
  %v2199 = vsel %vm2107, %v2170, 0.0
  %2200 = vadd.xlane.f32.xlu0 %v2199
  %v2201 = vpop.xlane.xlu0 %2200
  %v2202 = vsel %vm2107, %v2172, 0.0
  %2203 = vadd.xlane.f32.xlu0 %v2202
  %v2204 = vpop.xlane.xlu0 %2203
  %v2205 = vsel %vm2114, %v2174, 0.0
  %2206 = vadd.xlane.f32.xlu0 %v2205
  %v2207 = vpop.xlane.xlu0 %2206
  %v2208 = vsel %vm2107, %v2176, 0.0
  %2209 = vadd.xlane.f32.xlu0 %v2208
  %v2210 = vpop.xlane.xlu0 %2209
  %v2211 = vsel %vm2107, %v2178, 0.0
  %2212 = vadd.xlane.f32.xlu0 %v2211
  %v2213 = vpop.xlane.xlu0 %2212
  %v2214 = vsel %vm2114, %v2180, 0.0
  %2215 = vadd.xlane.f32.xlu0 %v2214
  %v2216 = vpop.xlane.xlu0 %2215
  %v2217 = vrcp.pop %v2183
  %v2218 = vrcp.pop %v2186
  %v2219 = vrcp.pop %v2189
  %v2220 = vrcp.pop %v2192
  %v2221 = vrcp.pop %v2195
  %v2222 = vrcp.pop %v2198
  %v2223 = vrcp.pop %v2201
  %v2224 = vrcp.pop %v2204
  %v2225 = vrcp.pop %v2207
  %v2226 = vrcp.pop %v2210
  %v2227 = vrcp.pop %v2213
  %v2228 = vrcp.pop %v2216
  %v2229 = vmul.f32 %v2158, %v2217
  %v2230 = vmul.f32 %v2160, %v2218
  %v2231 = vmul.f32 %v2162, %v2219
  %v2232 = vmul.f32 %v2164, %v2220
  %v2233 = vmul.f32 %v2166, %v2221
  %v2234 = vmul.f32 %v2168, %v2222
  %v2235 = vmul.f32 %v2170, %v2223
  %v2236 = vmul.f32 %v2172, %v2224
  %v2237 = vmul.f32 %v2174, %v2225
  %v2238 = vmul.f32 %v2176, %v2226
  %v2239 = vmul.f32 %v2178, %v2227
  %v2240 = vmul.f32 %v2180, %v2228
  %v2241 = vmul.f32 %v1808, %v1846
  %v2242 = vmul.f32 %v1811, %v1846
  %v2243 = vmul.f32 %v1816, %v1846
  %v2244 = vmul.f32 %v1808, %v1850
  %v2245 = vmul.f32 %v1811, %v1850
  %v2246 = vmul.f32 %v1816, %v1850
  %v2247 = vmul.f32 %v1808, %v1854
  %v2248 = vmul.f32 %v1811, %v1854
  %v2249 = vmul.f32 %v1816, %v1854
  %v2250 = vmul.f32 %v1808, %v1858
  %v2251 = vmul.f32 %v1811, %v1858
  %v2252 = vmul.f32 %v1816, %v1858
  %v2253 = vpack.c.bf16 %v2242, %v2241
  %v2254 = vpack.c.bf16 %v2243, %v2243
  %v2255 = vpack.c.bf16 %v2245, %v2244
  %v2256 = vpack.c.bf16 %v2246, %v2246
  %v2257 = vpack.c.bf16 %v2248, %v2247
  %v2258 = vpack.c.bf16 %v2249, %v2249
  %v2259 = vpack.c.bf16 %v2251, %v2250
  %v2260 = vpack.c.bf16 %v2252, %v2252
  %v2261 = vpack.c.bf16 %v2230, %v2229
  %v2262 = vpack.c.bf16 %v2231, %v2231
  %v2263 = vpack.c.bf16 %v2233, %v2232
  %v2264 = vpack.c.bf16 %v2234, %v2234
  %v2265 = vpack.c.bf16 %v2236, %v2235
  %v2266 = vpack.c.bf16 %v2237, %v2237
  %v2267 = vpack.c.bf16 %v2239, %v2238
  %v2268 = vpack.c.bf16 %v2240, %v2240
  %v2270 = vsel %vm2107, %v2261, 0
  %v2273 = vsel %vm2107, %v2262, 0
  %vm2275 = vcmask 1040384
  %v2277 = vsel %vm2275, %v2254, 0
  %2279 = vmatprep.subr.bf16.mxu0 0
  %2280 = vmatpush1.bf16.msra.mxu0 %v2253
  %2281 = vmatprep.subr.bf16.mxu0 0
  %2282 = vmatpush1.bf16.msra.mxu0 %v2277
  %2283 = vmatprep.subr.bf16.mxu0 0
  %2284 = vmatpush1.bf16.msra.mxu0 0
  %2285 = vmatprep.subr.bf16.mxu0 0
  %2286 = vmatpush1.bf16.msra.mxu0 0
  %2287 = vmatprep.subr.bf16.mxu0 0
  %2288 = vmatpush1.bf16.msra.mxu0 0
  %2289 = vmatprep.subr.bf16.mxu0 0
  %2290 = vmatpush1.bf16.msra.mxu0 0
  %2291 = vmatprep.subr.bf16.mxu0 0
  %2292 = vmatpush1.bf16.msra.mxu0 0
  %2293 = vmatprep.subr.bf16.mxu0 0
  %2294 = vmatpush1.bf16.msra.mxu0 0
  %2295 = vmatprep.subr.bf16.mxu0 0
  %2296 = vmatpush1.bf16.msra.mxu0 0
  %2297 = vmatprep.subr.bf16.mxu0 0
  %2298 = vmatpush1.bf16.msra.mxu0 0
  %2299 = vmatprep.subr.bf16.mxu0 0
  %2300 = vmatpush1.bf16.msra.mxu0 0
  %2301 = vmatprep.subr.bf16.mxu0 0
  %2302 = vmatpush1.bf16.msra.mxu0 0
  %2303 = vmatprep.subr.bf16.mxu0 0
  %2304 = vmatpush1.bf16.msra.mxu0 0
  %2305 = vmatprep.subr.bf16.mxu0 0
  %2306 = vmatpush1.bf16.msra.mxu0 0
  %2307 = vmatprep.subr.bf16.mxu0 0
  %2308 = vmatpush1.bf16.msra.mxu0 0
  %2309 = vmatprep.subr.bf16.mxu0 0
  %2310 = vmatpush1.bf16.msra.mxu0 0
  %2311 = vmatprep.mubr.bf16.mxu0 0
  %2312 = vmatmul.mubr.bf16.gmra.mrb[0].mxu0 %v2270
  %v2313 = vpop.f32.mrb[0].mxu0
  %v2314 = vadd.f32 0.0, %v2313
  %v2315 = vpop.f32.mrb[0].mxu0
  %v2316 = vpop.f32.mrb[0].mxu0
  %v2317 = vadd.f32 0.0, %v2316
  %v2318 = vpop.f32.mrb[0].mxu0
  %2319 = vmatprep.mubr.bf16.mxu0 0
  %2320 = vmatmul.mubr.bf16.gmra.mrb[0].mxu0 %v2273
  %v2321 = vpop.f32.mrb[0].mxu0
  %v2322 = vadd.f32 0.0, %v2321
  %v2323 = vpop.f32.mrb[0].mxu0
  %v2324 = vpop.f32.mrb[0].mxu0
  %v2325 = vpop.f32.mrb[0].mxu0
  %2326 = vdwg.mxu0
  %v2328 = vsel %vm2107, %v2263, 0
  %v2331 = vsel %vm2107, %v2264, 0
  %v2334 = vsel %vm2275, %v2256, 0
  %2336 = vmatprep.subr.bf16.mxu0 0
  %2337 = vmatpush1.bf16.msra.mxu0 %v2255
  %2338 = vmatprep.subr.bf16.mxu0 0
  %2339 = vmatpush1.bf16.msra.mxu0 %v2334
  %2340 = vmatprep.subr.bf16.mxu0 0
  %2341 = vmatpush1.bf16.msra.mxu0 0
  %2342 = vmatprep.subr.bf16.mxu0 0
  %2343 = vmatpush1.bf16.msra.mxu0 0
  %2344 = vmatprep.subr.bf16.mxu0 0
  %2345 = vmatpush1.bf16.msra.mxu0 0
  %2346 = vmatprep.subr.bf16.mxu0 0
  %2347 = vmatpush1.bf16.msra.mxu0 0
  %2348 = vmatprep.subr.bf16.mxu0 0
  %2349 = vmatpush1.bf16.msra.mxu0 0
  %2350 = vmatprep.subr.bf16.mxu0 0
  %2351 = vmatpush1.bf16.msra.mxu0 0
  %2352 = vmatprep.subr.bf16.mxu0 0
  %2353 = vmatpush1.bf16.msra.mxu0 0
  %2354 = vmatprep.subr.bf16.mxu0 0
  %2355 = vmatpush1.bf16.msra.mxu0 0
  %2356 = vmatprep.subr.bf16.mxu0 0
  %2357 = vmatpush1.bf16.msra.mxu0 0
  %2358 = vmatprep.subr.bf16.mxu0 0
  %2359 = vmatpush1.bf16.msra.mxu0 0
  %2360 = vmatprep.subr.bf16.mxu0 0
  %2361 = vmatpush1.bf16.msra.mxu0 0
  %2362 = vmatprep.subr.bf16.mxu0 0
  %2363 = vmatpush1.bf16.msra.mxu0 0
  %2364 = vmatprep.subr.bf16.mxu0 0
  %2365 = vmatpush1.bf16.msra.mxu0 0
  %2366 = vmatprep.subr.bf16.mxu0 0
  %2367 = vmatpush1.bf16.msra.mxu0 0
  %2368 = vmatprep.mubr.bf16.mxu0 0
  %2369 = vmatmul.mubr.bf16.gmra.mrb[0].mxu0 %v2328
  %v2370 = vpop.f32.mrb[0].mxu0
  %v2371 = vadd.f32 0.0, %v2370
  %v2372 = vpop.f32.mrb[0].mxu0
  %v2373 = vpop.f32.mrb[0].mxu0
  %v2374 = vadd.f32 0.0, %v2373
  %v2375 = vpop.f32.mrb[0].mxu0
  %2376 = vmatprep.mubr.bf16.mxu0 0
  %2377 = vmatmul.mubr.bf16.gmra.mrb[0].mxu0 %v2331
  %v2378 = vpop.f32.mrb[0].mxu0
  %v2379 = vadd.f32 0.0, %v2378
  %v2380 = vpop.f32.mrb[0].mxu0
  %v2381 = vpop.f32.mrb[0].mxu0
  %v2382 = vpop.f32.mrb[0].mxu0
  %2383 = vdwg.mxu0
  %v2385 = vsel %vm2107, %v2265, 0
  %v2388 = vsel %vm2107, %v2266, 0
  %v2391 = vsel %vm2275, %v2258, 0
  %2393 = vmatprep.subr.bf16.mxu0 0
  %2394 = vmatpush1.bf16.msra.mxu0 %v2257
  %2395 = vmatprep.subr.bf16.mxu0 0
  %2396 = vmatpush1.bf16.msra.mxu0 %v2391
  %2397 = vmatprep.subr.bf16.mxu0 0
  %2398 = vmatpush1.bf16.msra.mxu0 0
  %2399 = vmatprep.subr.bf16.mxu0 0
  %2400 = vmatpush1.bf16.msra.mxu0 0
  %2401 = vmatprep.subr.bf16.mxu0 0
  %2402 = vmatpush1.bf16.msra.mxu0 0
  %2403 = vmatprep.subr.bf16.mxu0 0
  %2404 = vmatpush1.bf16.msra.mxu0 0
  %2405 = vmatprep.subr.bf16.mxu0 0
  %2406 = vmatpush1.bf16.msra.mxu0 0
  %2407 = vmatprep.subr.bf16.mxu0 0
  %2408 = vmatpush1.bf16.msra.mxu0 0
  %2409 = vmatprep.subr.bf16.mxu0 0
  %2410 = vmatpush1.bf16.msra.mxu0 0
  %2411 = vmatprep.subr.bf16.mxu0 0
  %2412 = vmatpush1.bf16.msra.mxu0 0
  %2413 = vmatprep.subr.bf16.mxu0 0
  %2414 = vmatpush1.bf16.msra.mxu0 0
  %2415 = vmatprep.subr.bf16.mxu0 0
  %2416 = vmatpush1.bf16.msra.mxu0 0
  %2417 = vmatprep.subr.bf16.mxu0 0
  %2418 = vmatpush1.bf16.msra.mxu0 0
  %2419 = vmatprep.subr.bf16.mxu0 0
  %2420 = vmatpush1.bf16.msra.mxu0 0
  %2421 = vmatprep.subr.bf16.mxu0 0
  %2422 = vmatpush1.bf16.msra.mxu0 0
  %2423 = vmatprep.subr.bf16.mxu0 0
  %2424 = vmatpush1.bf16.msra.mxu0 0
  %2425 = vmatprep.mubr.bf16.mxu0 0
  %2426 = vmatmul.mubr.bf16.gmra.mrb[0].mxu0 %v2385
  %v2427 = vpop.f32.mrb[0].mxu0
  %v2428 = vadd.f32 0.0, %v2427
  %v2429 = vpop.f32.mrb[0].mxu0
  %v2430 = vpop.f32.mrb[0].mxu0
  %v2431 = vadd.f32 0.0, %v2430
  %v2432 = vpop.f32.mrb[0].mxu0
  %2433 = vmatprep.mubr.bf16.mxu0 0
  %2434 = vmatmul.mubr.bf16.gmra.mrb[0].mxu0 %v2388
  %v2435 = vpop.f32.mrb[0].mxu0
  %v2436 = vadd.f32 0.0, %v2435
  %v2437 = vpop.f32.mrb[0].mxu0
  %v2438 = vpop.f32.mrb[0].mxu0
  %v2439 = vpop.f32.mrb[0].mxu0
  %2440 = vdwg.mxu0
  %v2442 = vsel %vm2107, %v2267, 0
  %v2445 = vsel %vm2107, %v2268, 0
  %v2448 = vsel %vm2275, %v2260, 0
  %2450 = vmatprep.subr.bf16.mxu0 0
  %2451 = vmatpush1.bf16.msra.mxu0 %v2259
  %2452 = vmatprep.subr.bf16.mxu0 0
  %2453 = vmatpush1.bf16.msra.mxu0 %v2448
  %2454 = vmatprep.subr.bf16.mxu0 0
  %2455 = vmatpush1.bf16.msra.mxu0 0
  %2456 = vmatprep.subr.bf16.mxu0 0
  %2457 = vmatpush1.bf16.msra.mxu0 0
  %2458 = vmatprep.subr.bf16.mxu0 0
  %2459 = vmatpush1.bf16.msra.mxu0 0
  %2460 = vmatprep.subr.bf16.mxu0 0
  %2461 = vmatpush1.bf16.msra.mxu0 0
  %2462 = vmatprep.subr.bf16.mxu0 0
  %2463 = vmatpush1.bf16.msra.mxu0 0
  %2464 = vmatprep.subr.bf16.mxu0 0
  %2465 = vmatpush1.bf16.msra.mxu0 0
  %2466 = vmatprep.subr.bf16.mxu0 0
  %2467 = vmatpush1.bf16.msra.mxu0 0
  %2468 = vmatprep.subr.bf16.mxu0 0
  %2469 = vmatpush1.bf16.msra.mxu0 0
  %2470 = vmatprep.subr.bf16.mxu0 0
  %2471 = vmatpush1.bf16.msra.mxu0 0
  %2472 = vmatprep.subr.bf16.mxu0 0
  %2473 = vmatpush1.bf16.msra.mxu0 0
  %2474 = vmatprep.subr.bf16.mxu0 0
  %2475 = vmatpush1.bf16.msra.mxu0 0
  %2476 = vmatprep.subr.bf16.mxu0 0
  %2477 = vmatpush1.bf16.msra.mxu0 0
  %2478 = vmatprep.subr.bf16.mxu0 0
  %2479 = vmatpush1.bf16.msra.mxu0 0
  %2480 = vmatprep.subr.bf16.mxu0 0
  %2481 = vmatpush1.bf16.msra.mxu0 0
  %2482 = vmatprep.mubr.bf16.mxu0 0
  %2483 = vmatmul.mubr.bf16.gmra.mrb[0].mxu0 %v2442
  %v2484 = vpop.f32.mrb[0].mxu0
  %v2485 = vadd.f32 0.0, %v2484
  %v2486 = vpop.f32.mrb[0].mxu0
  %v2487 = vpop.f32.mrb[0].mxu0
  %v2488 = vadd.f32 0.0, %v2487
  %v2489 = vpop.f32.mrb[0].mxu0
  %2490 = vmatprep.mubr.bf16.mxu0 0
  %2491 = vmatmul.mubr.bf16.gmra.mrb[0].mxu0 %v2445
  %v2492 = vpop.f32.mrb[0].mxu0
  %v2493 = vadd.f32 0.0, %v2492
  %v2494 = vpop.f32.mrb[0].mxu0
  %v2495 = vpop.f32.mrb[0].mxu0
  %v2496 = vpop.f32.mrb[0].mxu0
  %2497 = vdwg.mxu0
  %v2498 = vsel %vm1482, %v2314, 0.0
  %v2499 = vsel %vm1482, %v2371, 0.0
  %v2500 = vadd.f32 %v2498, %v2499
  %v2501 = vsel %vm1482, %v2428, 0.0
  %v2502 = vadd.f32 %v2500, %v2501
  %v2503 = vsel %vm1482, %v2485, 0.0
  %v2504 = vadd.f32 %v2502, %v2503
  %v2505 = vsel %vm1482, %v2317, 0.0
  %v2506 = vsel %vm1482, %v2374, 0.0
  %v2507 = vadd.f32 %v2505, %v2506
  %v2508 = vsel %vm1482, %v2431, 0.0
  %v2509 = vadd.f32 %v2507, %v2508
  %v2510 = vsel %vm1482, %v2488, 0.0
  %v2511 = vadd.f32 %v2509, %v2510
  %v2512 = vsel %vm1489, %v2322, 0.0
  %v2513 = vsel %vm1489, %v2379, 0.0
  %v2514 = vadd.f32 %v2512, %v2513
  %v2515 = vsel %vm1489, %v2436, 0.0
  %v2516 = vadd.f32 %v2514, %v2515
  %v2517 = vsel %vm1489, %v2493, 0.0
  %v2518 = vadd.f32 %v2516, %v2517
  %v2519 = vpack.c.bf16 %v2511, %v2504
  %v2520 = vpack.c.bf16 %v2518, %v2518
  %v2525 = vunpack.c.l.b16 %v1474
  %v2526 = vunpack.c.l.b16 %v1475
  %v2527 = vunpack.c.l.b16 %v1476
  %v2528 = vunpack.c.l.b16 %v1477
  %v2529 = vpack.c.b16 %v2526, %v2525
  %v2530 = vpack.c.b16 %v2528, %v2527
  %v2534 = vsel %vm1482, %v2519, 0
  %v2537 = vsel %vm1482, %v2520, 0
  %2539 = vmatprep.subr.bf16.mxu0 0
  %2540 = vmatpush1.bf16.msra.mxu0 %v2529
  %2541 = vmatprep.subr.bf16.mxu0 0
  %2542 = vmatpush1.bf16.msra.mxu0 %v2530
  %2543 = vmatprep.subr.bf16.mxu0 0
  %2544 = vmatpush1.bf16.msra.mxu0 0
  %2545 = vmatprep.subr.bf16.mxu0 0
  %2546 = vmatpush1.bf16.msra.mxu0 0
  %2547 = vmatprep.subr.bf16.mxu0 0
  %2548 = vmatpush1.bf16.msra.mxu0 0
  %2549 = vmatprep.subr.bf16.mxu0 0
  %2550 = vmatpush1.bf16.msra.mxu0 0
  %2551 = vmatprep.subr.bf16.mxu0 0
  %2552 = vmatpush1.bf16.msra.mxu0 0
  %2553 = vmatprep.subr.bf16.mxu0 0
  %2554 = vmatpush1.bf16.msra.mxu0 0
  %2555 = vmatprep.subr.bf16.mxu0 0
  %2556 = vmatpush1.bf16.msra.mxu0 0
  %2557 = vmatprep.subr.bf16.mxu0 0
  %2558 = vmatpush1.bf16.msra.mxu0 0
  %2559 = vmatprep.subr.bf16.mxu0 0
  %2560 = vmatpush1.bf16.msra.mxu0 0
  %2561 = vmatprep.subr.bf16.mxu0 0
  %2562 = vmatpush1.bf16.msra.mxu0 0
  %2563 = vmatprep.subr.bf16.mxu0 0
  %2564 = vmatpush1.bf16.msra.mxu0 0
  %2565 = vmatprep.subr.bf16.mxu0 0
  %2566 = vmatpush1.bf16.msra.mxu0 0
  %2567 = vmatprep.subr.bf16.mxu0 0
  %2568 = vmatpush1.bf16.msra.mxu0 0
  %2569 = vmatprep.subr.bf16.mxu0 0
  %2570 = vmatpush1.bf16.msra.mxu0 0
  %2571 = vmatprep.mubr.bf16.mxu0 0
  %2572 = vmatmul.mubr.bf16.gmra.mrb[0].mxu0 %v2534
  %v2573 = vpop.f32.mrb[0].mxu0
  %v2574 = vadd.f32 0.0, %v2573
  %v2575 = vpop.f32.mrb[0].mxu0
  %v2576 = vpop.f32.mrb[0].mxu0
  %v2577 = vadd.f32 0.0, %v2576
  %v2578 = vpop.f32.mrb[0].mxu0
  %2579 = vmatprep.mubr.bf16.mxu0 0
  %2580 = vmatmul.mubr.bf16.gmra.mrb[0].mxu0 %v2537
  %v2581 = vpop.f32.mrb[0].mxu0
  %v2582 = vadd.f32 0.0, %v2581
  %v2583 = vpop.f32.mrb[0].mxu0
  %v2584 = vpop.f32.mrb[0].mxu0
  %v2585 = vpop.f32.mrb[0].mxu0
  %2586 = vdwg.mxu0
  %v2587 = vadd.f32 %v1451, %v2574
  %v2588 = vadd.f32 %v1452, %v2577
  %v2589 = vadd.f32 %v1453, %v2582
  %v2590 = vmul.f32 %v2587, %v2587
  %v2591 = vmul.f32 %v2588, %v2588
  %v2592 = vmul.f32 %v2589, %v2589
  %v2593 = vsel %vm1482, %v2590, 0.0
  %2594 = vadd.xlane.f32.xlu0 %v2593
  %v2595 = vpop.xlane.xlu0 %2594
  %v2596 = vsel %vm1482, %v2591, 0.0
  %2597 = vadd.xlane.f32.xlu0 %v2596
  %v2598 = vpop.xlane.xlu0 %2597
  %v2599 = vsel %vm1489, %v2592, 0.0
  %2600 = vadd.xlane.f32.xlu0 %v2599
  %v2601 = vpop.xlane.xlu0 %2600
  %v2602 = vmul.f32 %v2595, %v1493
  %v2603 = vmul.f32 %v2598, %v1493
  %v2604 = vmul.f32 %v2601, %v1493
  %v2605 = vadd.f32 %v2602, 1e-06
  %v2606 = vadd.f32 %v2603, 1e-06
  %v2607 = vadd.f32 %v2604, 1e-06
  %v2608 = vrsqrt.pop %v2605
  %v2609 = vrsqrt.pop %v2606
  %v2610 = vrsqrt.pop %v2607
  %v2611 = vmul.f32 %v2587, %v2608
  %v2612 = vmul.f32 %v2588, %v2609
  %v2613 = vmul.f32 %v2589, %v2610
  %v2614 = vlaneseq
  %v2615 = vshrl.u32 %v2614, 7
  %v2616 = vsub.s32 1, %v2615
  %v2617 = vrot.slane %v1478, %v2616
  %v2618 = vmul.f32 %v2611, %v2617
  %v2619 = vmul.f32 %v2612, %v2617
  %v2620 = vmul.f32 %v2613, %v2617
  %v2621 = vpack.c.bf16 %v2619, %v2618
  %v2622 = vpack.c.bf16 %v2620, %v2620
  %v2623 = vld [vmem:[%s20] sm:$0xff]
  %v2624 = vld [vmem:[%s20 + $0x8] sm:$0xff]
  %v2625 = vld [vmem:[%s20 + $0x10] sm:$0xff]
  %v2626 = vld [vmem:[%s20 + $0x18] sm:$0xff]
  %v2631 = vunpack.c.l.b16 %v2623
  %v2632 = vunpack.c.h.b16 %v2623
  %v2633 = vunpack.c.l.b16 %v2624
  %v2634 = vunpack.c.h.b16 %v2624
  %v2635 = vunpack.c.l.b16 %v2625
  %v2636 = vunpack.c.h.b16 %v2625
  %v2637 = vunpack.c.l.b16 %v2626
  %v2638 = vunpack.c.h.b16 %v2626
  %v2639 = vpack.c.b16 %v2633, %v2631
  %v2640 = vpack.c.b16 %v2634, %v2632
  %v2641 = vpack.c.b16 %v2637, %v2635
  %v2642 = vpack.c.b16 %v2638, %v2636
  %v2648 = vsel %vm1482, %v2621, 0
  %v2651 = vsel %vm1482, %v2622, 0
  %2653 = vmatprep.subr.bf16.mxu0 %v2640
  %2654 = vmatpush1.bf16.msra.mxu0 %v2639
  %2655 = vmatprep.subr.bf16.mxu0 %v2642
  %2656 = vmatpush1.bf16.msra.mxu0 %v2641
  %2657 = vmatprep.subr.bf16.mxu0 0
  %2658 = vmatpush1.bf16.msra.mxu0 0
  %2659 = vmatprep.subr.bf16.mxu0 0
  %2660 = vmatpush1.bf16.msra.mxu0 0
  %2661 = vmatprep.subr.bf16.mxu0 0
  %2662 = vmatpush1.bf16.msra.mxu0 0
  %2663 = vmatprep.subr.bf16.mxu0 0
  %2664 = vmatpush1.bf16.msra.mxu0 0
  %2665 = vmatprep.subr.bf16.mxu0 0
  %2666 = vmatpush1.bf16.msra.mxu0 0
  %2667 = vmatprep.subr.bf16.mxu0 0
  %2668 = vmatpush1.bf16.msra.mxu0 0
  %2669 = vmatprep.subr.bf16.mxu0 0
  %2670 = vmatpush1.bf16.msra.mxu0 0
  %2671 = vmatprep.subr.bf16.mxu0 0
  %2672 = vmatpush1.bf16.msra.mxu0 0
  %2673 = vmatprep.subr.bf16.mxu0 0
  %2674 = vmatpush1.bf16.msra.mxu0 0
  %2675 = vmatprep.subr.bf16.mxu0 0
  %2676 = vmatpush1.bf16.msra.mxu0 0
  %2677 = vmatprep.subr.bf16.mxu0 0
  %2678 = vmatpush1.bf16.msra.mxu0 0
  %2679 = vmatprep.subr.bf16.mxu0 0
  %2680 = vmatpush1.bf16.msra.mxu0 0
  %2681 = vmatprep.subr.bf16.mxu0 0
  %2682 = vmatpush1.bf16.msra.mxu0 0
  %2683 = vmatprep.subr.bf16.mxu0 0
  %2684 = vmatpush1.bf16.msra.mxu0 0
  %2685 = vmatprep.mubr.bf16.mxu0 0
  %2686 = vmatmul.mubr.bf16.gmra.mrb[0].mxu0 %v2648
  %v2687 = vpop.f32.mrb[0].mxu0
  %v2688 = vadd.f32 0.0, %v2687
  %v2689 = vpop.f32.mrb[0].mxu0
  %v2690 = vadd.f32 0.0, %v2689
  %v2691 = vpop.f32.mrb[0].mxu0
  %v2692 = vadd.f32 0.0, %v2691
  %v2693 = vpop.f32.mrb[0].mxu0
  %v2694 = vadd.f32 0.0, %v2693
  %2695 = vmatprep.mubr.bf16.mxu0 0
  %2696 = vmatmul.mubr.bf16.gmra.mrb[0].mxu0 %v2651
  %v2697 = vpop.f32.mrb[0].mxu0
  %v2698 = vadd.f32 0.0, %v2697
  %v2699 = vpop.f32.mrb[0].mxu0
  %v2700 = vadd.f32 0.0, %v2699
  %v2701 = vpop.f32.mrb[0].mxu0
  %v2702 = vpop.f32.mrb[0].mxu0
  %2703 = vdwg.mxu0
  %v2704 = vxor.u32 %v2688, 2147483648
  %v2705 = vxor.u32 %v2692, 2147483648
  %v2706 = vxor.u32 %v2698, 2147483648
  %v2707 = vmul.f32 %v2704, 1.442695
  %v2708 = vpow.pop %v2707
  %v2709 = vmul.f32 %v2705, 1.442695
  %v2710 = vpow.pop %v2709
  %v2711 = vmul.f32 %v2706, 1.442695
  %v2712 = vpow.pop %v2711
  %v2713 = vadd.f32 %v2708, 1.0
  %v2714 = vadd.f32 %v2710, 1.0
  %v2715 = vadd.f32 %v2712, 1.0
  %v2716 = vrcp.pop %v2713
  %v2717 = vmul.f32 1.0, %v2716
  %v2718 = vrcp.pop %v2714
  %v2719 = vmul.f32 1.0, %v2718
  %v2720 = vrcp.pop %v2715
  %v2721 = vmul.f32 1.0, %v2720
  %v2722 = vmul.f32 %v2688, %v2717
  %v2723 = vmul.f32 %v2692, %v2719
  %v2724 = vmul.f32 %v2698, %v2721
  %v2725 = vmul.f32 %v2722, %v2690
  %v2726 = vmul.f32 %v2723, %v2694
  %v2727 = vmul.f32 %v2724, %v2700
  %v2728 = vpack.c.bf16 %v2726, %v2725
  %v2729 = vpack.c.bf16 %v2727, %v2727
  %v2730 = vld [vmem:[%s21] sm:$0xf]
  %v2731 = vld [vmem:[%s21 + $0x4] sm:$0xf]
  %v2732 = vld [vmem:[%s21 + $0x8] sm:$0xf]
  %v2733 = vld [vmem:[%s21 + $0xc] sm:$0xf]
  %v2734 = vld [vmem:[%s21 + $0x10] sm:$0xf]
  %v2735 = vld [vmem:[%s21 + $0x14] sm:$0xf]
  %v2736 = vld [vmem:[%s21 + $0x18] sm:$0xf]
  %v2737 = vld [vmem:[%s21 + $0x1c] sm:$0xf]
  %v2738 = vld [vmem:[%s21 + $0x20] sm:$0xf]
  %v2739 = vld [vmem:[%s21 + $0x24] sm:$0xf]
  %v2740 = vld [vmem:[%s21 + $0x28] sm:$0xf]
  %v2741 = vld [vmem:[%s21 + $0x2c] sm:$0xf]
  %v2742 = vld [vmem:[%s21 + $0x30] sm:$0xf]
  %v2743 = vld [vmem:[%s21 + $0x34] sm:$0xf]
  %v2744 = vld [vmem:[%s21 + $0x38] sm:$0xf]
  %v2745 = vld [vmem:[%s21 + $0x3c] sm:$0xf]
  %v2762 = vunpack.c.l.b16 %v2730
  %v2763 = vunpack.c.l.b16 %v2731
  %v2764 = vunpack.c.l.b16 %v2732
  %v2765 = vunpack.c.l.b16 %v2733
  %v2766 = vunpack.c.l.b16 %v2734
  %v2767 = vunpack.c.l.b16 %v2735
  %v2768 = vunpack.c.l.b16 %v2736
  %v2769 = vunpack.c.l.b16 %v2737
  %v2770 = vunpack.c.l.b16 %v2738
  %v2771 = vunpack.c.l.b16 %v2739
  %v2772 = vunpack.c.l.b16 %v2740
  %v2773 = vunpack.c.l.b16 %v2741
  %v2774 = vunpack.c.l.b16 %v2742
  %v2775 = vunpack.c.l.b16 %v2743
  %v2776 = vunpack.c.l.b16 %v2744
  %v2777 = vunpack.c.l.b16 %v2745
  %v2778 = vpack.c.b16 %v2763, %v2762
  %v2779 = vpack.c.b16 %v2765, %v2764
  %v2780 = vpack.c.b16 %v2767, %v2766
  %v2781 = vpack.c.b16 %v2769, %v2768
  %v2782 = vpack.c.b16 %v2771, %v2770
  %v2783 = vpack.c.b16 %v2773, %v2772
  %v2784 = vpack.c.b16 %v2775, %v2774
  %v2785 = vpack.c.b16 %v2777, %v2776
  %2794 = vmatprep.subr.bf16.mxu0 0
  %2795 = vmatpush1.bf16.msra.mxu0 %v2778
  %2796 = vmatprep.subr.bf16.mxu0 0
  %2797 = vmatpush1.bf16.msra.mxu0 %v2779
  %2798 = vmatprep.subr.bf16.mxu0 0
  %2799 = vmatpush1.bf16.msra.mxu0 %v2780
  %2800 = vmatprep.subr.bf16.mxu0 0
  %2801 = vmatpush1.bf16.msra.mxu0 %v2781
  %2802 = vmatprep.subr.bf16.mxu0 0
  %2803 = vmatpush1.bf16.msra.mxu0 %v2782
  %2804 = vmatprep.subr.bf16.mxu0 0
  %2805 = vmatpush1.bf16.msra.mxu0 %v2783
  %2806 = vmatprep.subr.bf16.mxu0 0
  %2807 = vmatpush1.bf16.msra.mxu0 %v2784
  %2808 = vmatprep.subr.bf16.mxu0 0
  %2809 = vmatpush1.bf16.msra.mxu0 %v2785
  %2810 = vmatprep.subr.bf16.mxu0 0
  %2811 = vmatpush1.bf16.msra.mxu0 0
  %2812 = vmatprep.subr.bf16.mxu0 0
  %2813 = vmatpush1.bf16.msra.mxu0 0
  %2814 = vmatprep.subr.bf16.mxu0 0
  %2815 = vmatpush1.bf16.msra.mxu0 0
  %2816 = vmatprep.subr.bf16.mxu0 0
  %2817 = vmatpush1.bf16.msra.mxu0 0
  %2818 = vmatprep.subr.bf16.mxu0 0
  %2819 = vmatpush1.bf16.msra.mxu0 0
  %2820 = vmatprep.subr.bf16.mxu0 0
  %2821 = vmatpush1.bf16.msra.mxu0 0
  %2822 = vmatprep.subr.bf16.mxu0 0
  %2823 = vmatpush1.bf16.msra.mxu0 0
  %2824 = vmatprep.subr.bf16.mxu0 0
  %2825 = vmatpush1.bf16.msra.mxu0 0
  %2826 = vmatprep.mubr.bf16.mxu0 0
  %2827 = vmatmul.mubr.bf16.gmra.mrb[0].mxu0 %v2728
  %v2828 = vpop.f32.mrb[0].mxu0
  %v2829 = vadd.f32 0.0, %v2828
  %v2830 = vpop.f32.mrb[0].mxu0
  %v2831 = vpop.f32.mrb[0].mxu0
  %v2832 = vadd.f32 0.0, %v2831
  %v2833 = vpop.f32.mrb[0].mxu0
  %2834 = vmatprep.mubr.bf16.mxu0 0
  %2835 = vmatmul.mubr.bf16.gmra.mrb[0].mxu0 %v2729
  %v2836 = vpop.f32.mrb[0].mxu0
  %v2837 = vadd.f32 0.0, %v2836
  %v2838 = vpop.f32.mrb[0].mxu0
  %v2839 = vpop.f32.mrb[0].mxu0
  %v2840 = vpop.f32.mrb[0].mxu0
  %2841 = vdwg.mxu0
  %v2842 = vadd.f32 %v2587, %v2829
  %v2843 = vadd.f32 %v2588, %v2832
  %v2844 = vadd.f32 %v2589, %v2837
  %s2845 = scalar_lea.vmem %s19, 96
  %v2846 = vld [vmem:[%s2845] sm:$0xf]
  %v2847 = vld [vmem:[%s2845 + $0x4] sm:$0xf]
  %v2848 = vld [vmem:[%s2845 + $0x8] sm:$0xf]
  %v2849 = vld [vmem:[%s2845 + $0xc] sm:$0xf]
  %v2850 = vld [vmem:[%s2845 + $0x10] sm:$0xf]
  %v2851 = vld [vmem:[%s2845 + $0x14] sm:$0xf]
  %v2852 = vld [vmem:[%s2845 + $0x18] sm:$0xf]
  %v2853 = vld [vmem:[%s2845 + $0x1c] sm:$0xf]
  %v2854 = vld [vmem:[%s2845 + $0x20] sm:$0xf]
  %v2855 = vld [vmem:[%s2845 + $0x24] sm:$0xf]
  %v2856 = vld [vmem:[%s2845 + $0x28] sm:$0xf]
  %v2857 = vld [vmem:[%s2845 + $0x2c] sm:$0xf]
  %v2858 = vld [vmem:[%s2845 + $0x30] sm:$0xf]
  %v2859 = vld [vmem:[%s2845 + $0x34] sm:$0xf]
  %v2860 = vld [vmem:[%s2845 + $0x38] sm:$0xf]
  %v2861 = vld [vmem:[%s2845 + $0x3c] sm:$0xf]
  %v2862 = vld [vmem:[%s2845 + $0x40] sm:$0xf]
  %v2863 = vld [vmem:[%s2845 + $0x44] sm:$0xf]
  %v2864 = vld [vmem:[%s2845 + $0x48] sm:$0xf]
  %v2865 = vld [vmem:[%s2845 + $0x4c] sm:$0xf]
  %v2866 = vld [vmem:[%s2845 + $0x50] sm:$0xf]
  %v2867 = vld [vmem:[%s2845 + $0x54] sm:$0xf]
  %v2868 = vld [vmem:[%s2845 + $0x58] sm:$0xf]
  %v2869 = vld [vmem:[%s2845 + $0x5c] sm:$0xf]
  %s2870 = scalar_lea.vmem %s18, 2
  %v2871 = vld [vmem:[%s2870] sm:$0x3]
  %v2872 = vmul.f32 %v2842, %v2842
  %v2873 = vmul.f32 %v2843, %v2843
  %v2874 = vmul.f32 %v2844, %v2844
  %v2875 = vsel %vm1482, %v2872, 0.0
  %2876 = vadd.xlane.f32.xlu0 %v2875
  %v2877 = vpop.xlane.xlu0 %2876
  %v2878 = vsel %vm1482, %v2873, 0.0
  %2879 = vadd.xlane.f32.xlu0 %v2878
  %v2880 = vpop.xlane.xlu0 %2879
  %v2881 = vsel %vm1489, %v2874, 0.0
  %2882 = vadd.xlane.f32.xlu0 %v2881
  %v2883 = vpop.xlane.xlu0 %2882
  %v2884 = vmul.f32 %v2877, %v1493
  %v2885 = vmul.f32 %v2880, %v1493
  %v2886 = vmul.f32 %v2883, %v1493
  %v2887 = vadd.f32 %v2884, 1e-06
  %v2888 = vadd.f32 %v2885, 1e-06
  %v2889 = vadd.f32 %v2886, 1e-06
  %v2890 = vrsqrt.pop %v2887
  %v2891 = vrsqrt.pop %v2888
  %v2892 = vrsqrt.pop %v2889
  %v2893 = vmul.f32 %v2842, %v2890
  %v2894 = vmul.f32 %v2843, %v2891
  %v2895 = vmul.f32 %v2844, %v2892
  %v2896 = vlaneseq
  %v2897 = vshrl.u32 %v2896, 7
  %v2898 = vsub.s32 0, %v2897
  %v2899 = vrot.slane %v2871, %v2898
  %v2900 = vmul.f32 %v2893, %v2899
  %v2901 = vmul.f32 %v2894, %v2899
  %v2902 = vmul.f32 %v2895, %v2899
  %v2903 = vpack.c.bf16 %v2901, %v2900
  %v2904 = vpack.c.bf16 %v2902, %v2902
  %v2909 = vunpack.c.l.b16 %v2846
  %v2910 = vunpack.c.l.b16 %v2847
  %v2911 = vunpack.c.l.b16 %v2848
  %v2912 = vunpack.c.l.b16 %v2849
  %v2913 = vpack.c.b16 %v2910, %v2909
  %v2914 = vpack.c.b16 %v2912, %v2911
  %v2918 = vsel %vm1482, %v2903, 0
  %v2921 = vsel %vm1482, %v2904, 0
  %2923 = vmatprep.subr.bf16.mxu0 0
  %2924 = vmatpush1.bf16.msra.mxu0 %v2913
  %2925 = vmatprep.subr.bf16.mxu0 0
  %2926 = vmatpush1.bf16.msra.mxu0 %v2914
  %2927 = vmatprep.subr.bf16.mxu0 0
  %2928 = vmatpush1.bf16.msra.mxu0 0
  %2929 = vmatprep.subr.bf16.mxu0 0
  %2930 = vmatpush1.bf16.msra.mxu0 0
  %2931 = vmatprep.subr.bf16.mxu0 0
  %2932 = vmatpush1.bf16.msra.mxu0 0
  %2933 = vmatprep.subr.bf16.mxu0 0
  %2934 = vmatpush1.bf16.msra.mxu0 0
  %2935 = vmatprep.subr.bf16.mxu0 0
  %2936 = vmatpush1.bf16.msra.mxu0 0
  %2937 = vmatprep.subr.bf16.mxu0 0
  %2938 = vmatpush1.bf16.msra.mxu0 0
  %2939 = vmatprep.subr.bf16.mxu0 0
  %2940 = vmatpush1.bf16.msra.mxu0 0
  %2941 = vmatprep.subr.bf16.mxu0 0
  %2942 = vmatpush1.bf16.msra.mxu0 0
  %2943 = vmatprep.subr.bf16.mxu0 0
  %2944 = vmatpush1.bf16.msra.mxu0 0
  %2945 = vmatprep.subr.bf16.mxu0 0
  %2946 = vmatpush1.bf16.msra.mxu0 0
  %2947 = vmatprep.subr.bf16.mxu0 0
  %2948 = vmatpush1.bf16.msra.mxu0 0
  %2949 = vmatprep.subr.bf16.mxu0 0
  %2950 = vmatpush1.bf16.msra.mxu0 0
  %2951 = vmatprep.subr.bf16.mxu0 0
  %2952 = vmatpush1.bf16.msra.mxu0 0
  %2953 = vmatprep.subr.bf16.mxu0 0
  %2954 = vmatpush1.bf16.msra.mxu0 0
  %2955 = vmatprep.mubr.bf16.mxu0 0
  %2956 = vmatmul.mubr.bf16.gmra.mrb[0].mxu0 %v2918
  %v2957 = vpop.f32.mrb[0].mxu0
  %v2958 = vadd.f32 0.0, %v2957
  %v2959 = vpop.f32.mrb[0].mxu0
  %v2960 = vpop.f32.mrb[0].mxu0
  %v2961 = vadd.f32 0.0, %v2960
  %v2962 = vpop.f32.mrb[0].mxu0
  %2963 = vmatprep.mubr.bf16.mxu0 0
  %2964 = vmatmul.mubr.bf16.gmra.mrb[0].mxu0 %v2921
  %v2965 = vpop.f32.mrb[0].mxu0
  %v2966 = vadd.f32 0.0, %v2965
  %v2967 = vpop.f32.mrb[0].mxu0
  %v2968 = vpop.f32.mrb[0].mxu0
  %v2969 = vpop.f32.mrb[0].mxu0
  %2970 = vdwg.mxu0
  %v2975 = vunpack.c.l.b16 %v2850
  %v2976 = vunpack.c.l.b16 %v2851
  %v2977 = vunpack.c.l.b16 %v2852
  %v2978 = vunpack.c.l.b16 %v2853
  %v2979 = vpack.c.b16 %v2976, %v2975
  %v2980 = vpack.c.b16 %v2978, %v2977
  %2983 = vmatprep.subr.bf16.mxu0 0
  %2984 = vmatpush1.bf16.msra.mxu0 %v2979
  %2985 = vmatprep.subr.bf16.mxu0 0
  %2986 = vmatpush1.bf16.msra.mxu0 %v2980
  %2987 = vmatprep.subr.bf16.mxu0 0
  %2988 = vmatpush1.bf16.msra.mxu0 0
  %2989 = vmatprep.subr.bf16.mxu0 0
  %2990 = vmatpush1.bf16.msra.mxu0 0
  %2991 = vmatprep.subr.bf16.mxu0 0
  %2992 = vmatpush1.bf16.msra.mxu0 0
  %2993 = vmatprep.subr.bf16.mxu0 0
  %2994 = vmatpush1.bf16.msra.mxu0 0
  %2995 = vmatprep.subr.bf16.mxu0 0
  %2996 = vmatpush1.bf16.msra.mxu0 0
  %2997 = vmatprep.subr.bf16.mxu0 0
  %2998 = vmatpush1.bf16.msra.mxu0 0
  %2999 = vmatprep.subr.bf16.mxu0 0
  %3000 = vmatpush1.bf16.msra.mxu0 0
  %3001 = vmatprep.subr.bf16.mxu0 0
  %3002 = vmatpush1.bf16.msra.mxu0 0
  %3003 = vmatprep.subr.bf16.mxu0 0
  %3004 = vmatpush1.bf16.msra.mxu0 0
  %3005 = vmatprep.subr.bf16.mxu0 0
  %3006 = vmatpush1.bf16.msra.mxu0 0
  %3007 = vmatprep.subr.bf16.mxu0 0
  %3008 = vmatpush1.bf16.msra.mxu0 0
  %3009 = vmatprep.subr.bf16.mxu0 0
  %3010 = vmatpush1.bf16.msra.mxu0 0
  %3011 = vmatprep.subr.bf16.mxu0 0
  %3012 = vmatpush1.bf16.msra.mxu0 0
  %3013 = vmatprep.subr.bf16.mxu0 0
  %3014 = vmatpush1.bf16.msra.mxu0 0
  %3015 = vmatprep.mubr.bf16.mxu0 0
  %3016 = vmatmul.mubr.bf16.gmra.mrb[0].mxu0 %v2918
  %v3017 = vpop.f32.mrb[0].mxu0
  %v3018 = vadd.f32 0.0, %v3017
  %v3019 = vpop.f32.mrb[0].mxu0
  %v3020 = vpop.f32.mrb[0].mxu0
  %v3021 = vadd.f32 0.0, %v3020
  %v3022 = vpop.f32.mrb[0].mxu0
  %3023 = vmatprep.mubr.bf16.mxu0 0
  %3024 = vmatmul.mubr.bf16.gmra.mrb[0].mxu0 %v2921
  %v3025 = vpop.f32.mrb[0].mxu0
  %v3026 = vadd.f32 0.0, %v3025
  %v3027 = vpop.f32.mrb[0].mxu0
  %v3028 = vpop.f32.mrb[0].mxu0
  %v3029 = vpop.f32.mrb[0].mxu0
  %3030 = vdwg.mxu0
  %v3035 = vunpack.c.l.b16 %v2854
  %v3036 = vunpack.c.l.b16 %v2855
  %v3037 = vunpack.c.l.b16 %v2856
  %v3038 = vunpack.c.l.b16 %v2857
  %v3039 = vpack.c.b16 %v3036, %v3035
  %v3040 = vpack.c.b16 %v3038, %v3037
  %3043 = vmatprep.subr.bf16.mxu0 0
  %3044 = vmatpush1.bf16.msra.mxu0 %v3039
  %3045 = vmatprep.subr.bf16.mxu0 0
  %3046 = vmatpush1.bf16.msra.mxu0 %v3040
  %3047 = vmatprep.subr.bf16.mxu0 0
  %3048 = vmatpush1.bf16.msra.mxu0 0
  %3049 = vmatprep.subr.bf16.mxu0 0
  %3050 = vmatpush1.bf16.msra.mxu0 0
  %3051 = vmatprep.subr.bf16.mxu0 0
  %3052 = vmatpush1.bf16.msra.mxu0 0
  %3053 = vmatprep.subr.bf16.mxu0 0
  %3054 = vmatpush1.bf16.msra.mxu0 0
  %3055 = vmatprep.subr.bf16.mxu0 0
  %3056 = vmatpush1.bf16.msra.mxu0 0
  %3057 = vmatprep.subr.bf16.mxu0 0
  %3058 = vmatpush1.bf16.msra.mxu0 0
  %3059 = vmatprep.subr.bf16.mxu0 0
  %3060 = vmatpush1.bf16.msra.mxu0 0
  %3061 = vmatprep.subr.bf16.mxu0 0
  %3062 = vmatpush1.bf16.msra.mxu0 0
  %3063 = vmatprep.subr.bf16.mxu0 0
  %3064 = vmatpush1.bf16.msra.mxu0 0
  %3065 = vmatprep.subr.bf16.mxu0 0
  %3066 = vmatpush1.bf16.msra.mxu0 0
  %3067 = vmatprep.subr.bf16.mxu0 0
  %3068 = vmatpush1.bf16.msra.mxu0 0
  %3069 = vmatprep.subr.bf16.mxu0 0
  %3070 = vmatpush1.bf16.msra.mxu0 0
  %3071 = vmatprep.subr.bf16.mxu0 0
  %3072 = vmatpush1.bf16.msra.mxu0 0
  %3073 = vmatprep.subr.bf16.mxu0 0
  %3074 = vmatpush1.bf16.msra.mxu0 0
  %3075 = vmatprep.mubr.bf16.mxu0 0
  %3076 = vmatmul.mubr.bf16.gmra.mrb[0].mxu0 %v2918
  %v3077 = vpop.f32.mrb[0].mxu0
  %v3078 = vadd.f32 0.0, %v3077
  %v3079 = vpop.f32.mrb[0].mxu0
  %v3080 = vpop.f32.mrb[0].mxu0
  %v3081 = vadd.f32 0.0, %v3080
  %v3082 = vpop.f32.mrb[0].mxu0
  %3083 = vmatprep.mubr.bf16.mxu0 0
  %3084 = vmatmul.mubr.bf16.gmra.mrb[0].mxu0 %v2921
  %v3085 = vpop.f32.mrb[0].mxu0
  %v3086 = vadd.f32 0.0, %v3085
  %v3087 = vpop.f32.mrb[0].mxu0
  %v3088 = vpop.f32.mrb[0].mxu0
  %v3089 = vpop.f32.mrb[0].mxu0
  %3090 = vdwg.mxu0
  %v3095 = vunpack.c.l.b16 %v2858
  %v3096 = vunpack.c.l.b16 %v2859
  %v3097 = vunpack.c.l.b16 %v2860
  %v3098 = vunpack.c.l.b16 %v2861
  %v3099 = vpack.c.b16 %v3096, %v3095
  %v3100 = vpack.c.b16 %v3098, %v3097
  %3103 = vmatprep.subr.bf16.mxu0 0
  %3104 = vmatpush1.bf16.msra.mxu0 %v3099
  %3105 = vmatprep.subr.bf16.mxu0 0
  %3106 = vmatpush1.bf16.msra.mxu0 %v3100
  %3107 = vmatprep.subr.bf16.mxu0 0
  %3108 = vmatpush1.bf16.msra.mxu0 0
  %3109 = vmatprep.subr.bf16.mxu0 0
  %3110 = vmatpush1.bf16.msra.mxu0 0
  %3111 = vmatprep.subr.bf16.mxu0 0
  %3112 = vmatpush1.bf16.msra.mxu0 0
  %3113 = vmatprep.subr.bf16.mxu0 0
  %3114 = vmatpush1.bf16.msra.mxu0 0
  %3115 = vmatprep.subr.bf16.mxu0 0
  %3116 = vmatpush1.bf16.msra.mxu0 0
  %3117 = vmatprep.subr.bf16.mxu0 0
  %3118 = vmatpush1.bf16.msra.mxu0 0
  %3119 = vmatprep.subr.bf16.mxu0 0
  %3120 = vmatpush1.bf16.msra.mxu0 0
  %3121 = vmatprep.subr.bf16.mxu0 0
  %3122 = vmatpush1.bf16.msra.mxu0 0
  %3123 = vmatprep.subr.bf16.mxu0 0
  %3124 = vmatpush1.bf16.msra.mxu0 0
  %3125 = vmatprep.subr.bf16.mxu0 0
  %3126 = vmatpush1.bf16.msra.mxu0 0
  %3127 = vmatprep.subr.bf16.mxu0 0
  %3128 = vmatpush1.bf16.msra.mxu0 0
  %3129 = vmatprep.subr.bf16.mxu0 0
  %3130 = vmatpush1.bf16.msra.mxu0 0
  %3131 = vmatprep.subr.bf16.mxu0 0
  %3132 = vmatpush1.bf16.msra.mxu0 0
  %3133 = vmatprep.subr.bf16.mxu0 0
  %3134 = vmatpush1.bf16.msra.mxu0 0
  %3135 = vmatprep.mubr.bf16.mxu0 0
  %3136 = vmatmul.mubr.bf16.gmra.mrb[0].mxu0 %v2918
  %v3137 = vpop.f32.mrb[0].mxu0
  %v3138 = vadd.f32 0.0, %v3137
  %v3139 = vpop.f32.mrb[0].mxu0
  %v3140 = vpop.f32.mrb[0].mxu0
  %v3141 = vadd.f32 0.0, %v3140
  %v3142 = vpop.f32.mrb[0].mxu0
  %3143 = vmatprep.mubr.bf16.mxu0 0
  %3144 = vmatmul.mubr.bf16.gmra.mrb[0].mxu0 %v2921
  %v3145 = vpop.f32.mrb[0].mxu0
  %v3146 = vadd.f32 0.0, %v3145
  %v3147 = vpop.f32.mrb[0].mxu0
  %v3148 = vpop.f32.mrb[0].mxu0
  %v3149 = vpop.f32.mrb[0].mxu0
  %3150 = vdwg.mxu0
  %v3155 = vunpack.c.l.b16 %v2862
  %v3156 = vunpack.c.l.b16 %v2863
  %v3157 = vunpack.c.l.b16 %v2864
  %v3158 = vunpack.c.l.b16 %v2865
  %v3159 = vpack.c.b16 %v3156, %v3155
  %v3160 = vpack.c.b16 %v3158, %v3157
  %3163 = vmatprep.subr.bf16.mxu0 0
  %3164 = vmatpush1.bf16.msra.mxu0 %v3159
  %3165 = vmatprep.subr.bf16.mxu0 0
  %3166 = vmatpush1.bf16.msra.mxu0 %v3160
  %3167 = vmatprep.subr.bf16.mxu0 0
  %3168 = vmatpush1.bf16.msra.mxu0 0
  %3169 = vmatprep.subr.bf16.mxu0 0
  %3170 = vmatpush1.bf16.msra.mxu0 0
  %3171 = vmatprep.subr.bf16.mxu0 0
  %3172 = vmatpush1.bf16.msra.mxu0 0
  %3173 = vmatprep.subr.bf16.mxu0 0
  %3174 = vmatpush1.bf16.msra.mxu0 0
  %3175 = vmatprep.subr.bf16.mxu0 0
  %3176 = vmatpush1.bf16.msra.mxu0 0
  %3177 = vmatprep.subr.bf16.mxu0 0
  %3178 = vmatpush1.bf16.msra.mxu0 0
  %3179 = vmatprep.subr.bf16.mxu0 0
  %3180 = vmatpush1.bf16.msra.mxu0 0
  %3181 = vmatprep.subr.bf16.mxu0 0
  %3182 = vmatpush1.bf16.msra.mxu0 0
  %3183 = vmatprep.subr.bf16.mxu0 0
  %3184 = vmatpush1.bf16.msra.mxu0 0
  %3185 = vmatprep.subr.bf16.mxu0 0
  %3186 = vmatpush1.bf16.msra.mxu0 0
  %3187 = vmatprep.subr.bf16.mxu0 0
  %3188 = vmatpush1.bf16.msra.mxu0 0
  %3189 = vmatprep.subr.bf16.mxu0 0
  %3190 = vmatpush1.bf16.msra.mxu0 0
  %3191 = vmatprep.subr.bf16.mxu0 0
  %3192 = vmatpush1.bf16.msra.mxu0 0
  %3193 = vmatprep.subr.bf16.mxu0 0
  %3194 = vmatpush1.bf16.msra.mxu0 0
  %3195 = vmatprep.mubr.bf16.mxu0 0
  %3196 = vmatmul.mubr.bf16.gmra.mrb[0].mxu0 %v2918
  %v3197 = vpop.f32.mrb[0].mxu0
  %v3198 = vadd.f32 0.0, %v3197
  %v3199 = vpop.f32.mrb[0].mxu0
  %v3200 = vpop.f32.mrb[0].mxu0
  %v3201 = vadd.f32 0.0, %v3200
  %v3202 = vpop.f32.mrb[0].mxu0
  %3203 = vmatprep.mubr.bf16.mxu0 0
  %3204 = vmatmul.mubr.bf16.gmra.mrb[0].mxu0 %v2921
  %v3205 = vpop.f32.mrb[0].mxu0
  %v3206 = vadd.f32 0.0, %v3205
  %v3207 = vpop.f32.mrb[0].mxu0
  %v3208 = vpop.f32.mrb[0].mxu0
  %v3209 = vpop.f32.mrb[0].mxu0
  %3210 = vdwg.mxu0
  %v3211 = vmul.f32 %v2958, %v1337
  %v3212 = vmul.f32 %v2961, %v1338
  %v3213 = vmul.f32 %v2966, %v1339
  %v3214 = vmul.f32 %v3018, %v1341
  %v3215 = vmul.f32 %v3021, %v1342
  %v3216 = vmul.f32 %v3026, %v1343
  %v3217 = vadd.f32 %v3211, %v3214
  %v3218 = vadd.f32 %v3212, %v3215
  %v3219 = vadd.f32 %v3213, %v3216
  %v3220 = vmul.f32 %v3078, %v1337
  %v3221 = vmul.f32 %v3081, %v1338
  %v3222 = vmul.f32 %v3086, %v1339
  %v3223 = vmul.f32 %v3138, %v1341
  %v3224 = vmul.f32 %v3141, %v1342
  %v3225 = vmul.f32 %v3146, %v1343
  %v3226 = vadd.f32 %v3220, %v3223
  %v3227 = vadd.f32 %v3221, %v3224
  %v3228 = vadd.f32 %v3222, %v3225
  %v3229 = vmul.f32 %v3217, %v1846
  %v3230 = vmul.f32 %v3218, %v1846
  %v3231 = vmul.f32 %v3219, %v1846
  %v3232 = vmul.f32 %v3217, %v1850
  %v3233 = vmul.f32 %v3218, %v1850
  %v3234 = vmul.f32 %v3219, %v1850
  %v3235 = vmul.f32 %v3217, %v1854
  %v3236 = vmul.f32 %v3218, %v1854
  %v3237 = vmul.f32 %v3219, %v1854
  %v3238 = vmul.f32 %v3217, %v1858
  %v3239 = vmul.f32 %v3218, %v1858
  %v3240 = vmul.f32 %v3219, %v1858
  %v3241 = vpack.c.bf16 %v3230, %v3229
  %v3242 = vpack.c.bf16 %v3231, %v3231
  %v3243 = vpack.c.bf16 %v3233, %v3232
  %v3244 = vpack.c.bf16 %v3234, %v3234
  %v3245 = vpack.c.bf16 %v3236, %v3235
  %v3246 = vpack.c.bf16 %v3237, %v3237
  %v3247 = vpack.c.bf16 %v3239, %v3238
  %v3248 = vpack.c.bf16 %v3240, %v3240
  %v3249 = vpack.c.bf16 %v3227, %v3226
  %v3250 = vpack.c.bf16 %v3228, %v3228
  %v3252 = vsel %vm1482, %v3241, 0
  %v3255 = vsel %vm1482, %v3242, 0
  %v3258 = vsel %vm1482, %v3249, 0
  %v3261 = vsel %vm1482, %v3250, 0
  %3263 = vmatprep.subr.bf16.mxu0 0
  %3264 = vmatpush1.bf16.xpose.msra.mxu0 %v3258
  %3265 = vmatprep.subr.bf16.mxu0 0
  %3266 = vmatpush1.bf16.xpose.msra.mxu0 %v3261
  %3267 = vmatprep.subr.bf16.mxu0 0
  %3268 = vmatpush1.bf16.xpose.msra.mxu0 0
  %3269 = vmatprep.subr.bf16.mxu0 0
  %3270 = vmatpush1.bf16.xpose.msra.mxu0 0
  %3271 = vmatprep.subr.bf16.mxu0 0
  %3272 = vmatpush1.bf16.xpose.msra.mxu0 0
  %3273 = vmatprep.subr.bf16.mxu0 0
  %3274 = vmatpush1.bf16.xpose.msra.mxu0 0
  %3275 = vmatprep.subr.bf16.mxu0 0
  %3276 = vmatpush1.bf16.xpose.msra.mxu0 0
  %3277 = vmatprep.subr.bf16.mxu0 0
  %3278 = vmatpush1.bf16.xpose.msra.mxu0 0
  %3279 = vmatprep.subr.bf16.mxu0 0
  %3280 = vmatpush1.bf16.xpose.msra.mxu0 0
  %3281 = vmatprep.subr.bf16.mxu0 0
  %3282 = vmatpush1.bf16.xpose.msra.mxu0 0
  %3283 = vmatprep.subr.bf16.mxu0 0
  %3284 = vmatpush1.bf16.xpose.msra.mxu0 0
  %3285 = vmatprep.subr.bf16.mxu0 0
  %3286 = vmatpush1.bf16.xpose.msra.mxu0 0
  %3287 = vmatprep.subr.bf16.mxu0 0
  %3288 = vmatpush1.bf16.xpose.msra.mxu0 0
  %3289 = vmatprep.subr.bf16.mxu0 0
  %3290 = vmatpush1.bf16.xpose.msra.mxu0 0
  %3291 = vmatprep.subr.bf16.mxu0 0
  %3292 = vmatpush1.bf16.xpose.msra.mxu0 0
  %3293 = vmatprep.subr.bf16.mxu0 0
  %3294 = vmatpush1.bf16.xpose.msra.mxu0 0
  %3295 = vmatprep.mubr.bf16.mxu0 0
  %3296 = vmatmul.mubr.bf16.gmra.mrb[0].mxu0 %v3252
  %v3297 = vpop.f32.mrb[0].mxu0
  %v3298 = vadd.f32 %v1344, %v3297
  %v3299 = vpop.f32.mrb[0].mxu0
  %v3300 = vpop.f32.mrb[0].mxu0
  %v3301 = vadd.f32 %v1345, %v3300
  %v3302 = vpop.f32.mrb[0].mxu0
  %3303 = vmatprep.mubr.bf16.mxu0 0
  %3304 = vmatmul.mubr.bf16.gmra.mrb[0].mxu0 %v3255
  %v3305 = vpop.f32.mrb[0].mxu0
  %v3306 = vadd.f32 %v1346, %v3305
  %v3307 = vpop.f32.mrb[0].mxu0
  %v3308 = vpop.f32.mrb[0].mxu0
  %v3309 = vpop.f32.mrb[0].mxu0
  %3310 = vdwg.mxu0
  %v3312 = vsel %vm1482, %v3243, 0
  %v3315 = vsel %vm1482, %v3244, 0
  %3317 = vmatprep.subr.bf16.mxu0 0
  %3318 = vmatpush1.bf16.xpose.msra.mxu0 %v3258
  %3319 = vmatprep.subr.bf16.mxu0 0
  %3320 = vmatpush1.bf16.xpose.msra.mxu0 %v3261
  %3321 = vmatprep.subr.bf16.mxu0 0
  %3322 = vmatpush1.bf16.xpose.msra.mxu0 0
  %3323 = vmatprep.subr.bf16.mxu0 0
  %3324 = vmatpush1.bf16.xpose.msra.mxu0 0
  %3325 = vmatprep.subr.bf16.mxu0 0
  %3326 = vmatpush1.bf16.xpose.msra.mxu0 0
  %3327 = vmatprep.subr.bf16.mxu0 0
  %3328 = vmatpush1.bf16.xpose.msra.mxu0 0
  %3329 = vmatprep.subr.bf16.mxu0 0
  %3330 = vmatpush1.bf16.xpose.msra.mxu0 0
  %3331 = vmatprep.subr.bf16.mxu0 0
  %3332 = vmatpush1.bf16.xpose.msra.mxu0 0
  %3333 = vmatprep.subr.bf16.mxu0 0
  %3334 = vmatpush1.bf16.xpose.msra.mxu0 0
  %3335 = vmatprep.subr.bf16.mxu0 0
  %3336 = vmatpush1.bf16.xpose.msra.mxu0 0
  %3337 = vmatprep.subr.bf16.mxu0 0
  %3338 = vmatpush1.bf16.xpose.msra.mxu0 0
  %3339 = vmatprep.subr.bf16.mxu0 0
  %3340 = vmatpush1.bf16.xpose.msra.mxu0 0
  %3341 = vmatprep.subr.bf16.mxu0 0
  %3342 = vmatpush1.bf16.xpose.msra.mxu0 0
  %3343 = vmatprep.subr.bf16.mxu0 0
  %3344 = vmatpush1.bf16.xpose.msra.mxu0 0
  %3345 = vmatprep.subr.bf16.mxu0 0
  %3346 = vmatpush1.bf16.xpose.msra.mxu0 0
  %3347 = vmatprep.subr.bf16.mxu0 0
  %3348 = vmatpush1.bf16.xpose.msra.mxu0 0
  %3349 = vmatprep.mubr.bf16.mxu0 0
  %3350 = vmatmul.mubr.bf16.gmra.mrb[0].mxu0 %v3312
  %v3351 = vpop.f32.mrb[0].mxu0
  %v3352 = vadd.f32 %v1344, %v3351
  %v3353 = vpop.f32.mrb[0].mxu0
  %v3354 = vpop.f32.mrb[0].mxu0
  %v3355 = vadd.f32 %v1345, %v3354
  %v3356 = vpop.f32.mrb[0].mxu0
  %3357 = vmatprep.mubr.bf16.mxu0 0
  %3358 = vmatmul.mubr.bf16.gmra.mrb[0].mxu0 %v3315
  %v3359 = vpop.f32.mrb[0].mxu0
  %v3360 = vadd.f32 %v1346, %v3359
  %v3361 = vpop.f32.mrb[0].mxu0
  %v3362 = vpop.f32.mrb[0].mxu0
  %v3363 = vpop.f32.mrb[0].mxu0
  %3364 = vdwg.mxu0
  %v3366 = vsel %vm1482, %v3245, 0
  %v3369 = vsel %vm1482, %v3246, 0
  %3371 = vmatprep.subr.bf16.mxu0 0
  %3372 = vmatpush1.bf16.xpose.msra.mxu0 %v3258
  %3373 = vmatprep.subr.bf16.mxu0 0
  %3374 = vmatpush1.bf16.xpose.msra.mxu0 %v3261
  %3375 = vmatprep.subr.bf16.mxu0 0
  %3376 = vmatpush1.bf16.xpose.msra.mxu0 0
  %3377 = vmatprep.subr.bf16.mxu0 0
  %3378 = vmatpush1.bf16.xpose.msra.mxu0 0
  %3379 = vmatprep.subr.bf16.mxu0 0
  %3380 = vmatpush1.bf16.xpose.msra.mxu0 0
  %3381 = vmatprep.subr.bf16.mxu0 0
  %3382 = vmatpush1.bf16.xpose.msra.mxu0 0
  %3383 = vmatprep.subr.bf16.mxu0 0
  %3384 = vmatpush1.bf16.xpose.msra.mxu0 0
  %3385 = vmatprep.subr.bf16.mxu0 0
  %3386 = vmatpush1.bf16.xpose.msra.mxu0 0
  %3387 = vmatprep.subr.bf16.mxu0 0
  %3388 = vmatpush1.bf16.xpose.msra.mxu0 0
  %3389 = vmatprep.subr.bf16.mxu0 0
  %3390 = vmatpush1.bf16.xpose.msra.mxu0 0
  %3391 = vmatprep.subr.bf16.mxu0 0
  %3392 = vmatpush1.bf16.xpose.msra.mxu0 0
  %3393 = vmatprep.subr.bf16.mxu0 0
  %3394 = vmatpush1.bf16.xpose.msra.mxu0 0
  %3395 = vmatprep.subr.bf16.mxu0 0
  %3396 = vmatpush1.bf16.xpose.msra.mxu0 0
  %3397 = vmatprep.subr.bf16.mxu0 0
  %3398 = vmatpush1.bf16.xpose.msra.mxu0 0
  %3399 = vmatprep.subr.bf16.mxu0 0
  %3400 = vmatpush1.bf16.xpose.msra.mxu0 0
  %3401 = vmatprep.subr.bf16.mxu0 0
  %3402 = vmatpush1.bf16.xpose.msra.mxu0 0
  %3403 = vmatprep.mubr.bf16.mxu0 0
  %3404 = vmatmul.mubr.bf16.gmra.mrb[0].mxu0 %v3366
  %v3405 = vpop.f32.mrb[0].mxu0
  %v3406 = vadd.f32 %v1344, %v3405
  %v3407 = vpop.f32.mrb[0].mxu0
  %v3408 = vpop.f32.mrb[0].mxu0
  %v3409 = vadd.f32 %v1345, %v3408
  %v3410 = vpop.f32.mrb[0].mxu0
  %3411 = vmatprep.mubr.bf16.mxu0 0
  %3412 = vmatmul.mubr.bf16.gmra.mrb[0].mxu0 %v3369
  %v3413 = vpop.f32.mrb[0].mxu0
  %v3414 = vadd.f32 %v1346, %v3413
  %v3415 = vpop.f32.mrb[0].mxu0
  %v3416 = vpop.f32.mrb[0].mxu0
  %v3417 = vpop.f32.mrb[0].mxu0
  %3418 = vdwg.mxu0
  %v3420 = vsel %vm1482, %v3247, 0
  %v3423 = vsel %vm1482, %v3248, 0
  %3425 = vmatprep.subr.bf16.mxu0 0
  %3426 = vmatpush1.bf16.xpose.msra.mxu0 %v3258
  %3427 = vmatprep.subr.bf16.mxu0 0
  %3428 = vmatpush1.bf16.xpose.msra.mxu0 %v3261
  %3429 = vmatprep.subr.bf16.mxu0 0
  %3430 = vmatpush1.bf16.xpose.msra.mxu0 0
  %3431 = vmatprep.subr.bf16.mxu0 0
  %3432 = vmatpush1.bf16.xpose.msra.mxu0 0
  %3433 = vmatprep.subr.bf16.mxu0 0
  %3434 = vmatpush1.bf16.xpose.msra.mxu0 0
  %3435 = vmatprep.subr.bf16.mxu0 0
  %3436 = vmatpush1.bf16.xpose.msra.mxu0 0
  %3437 = vmatprep.subr.bf16.mxu0 0
  %3438 = vmatpush1.bf16.xpose.msra.mxu0 0
  %3439 = vmatprep.subr.bf16.mxu0 0
  %3440 = vmatpush1.bf16.xpose.msra.mxu0 0
  %3441 = vmatprep.subr.bf16.mxu0 0
  %3442 = vmatpush1.bf16.xpose.msra.mxu0 0
  %3443 = vmatprep.subr.bf16.mxu0 0
  %3444 = vmatpush1.bf16.xpose.msra.mxu0 0
  %3445 = vmatprep.subr.bf16.mxu0 0
  %3446 = vmatpush1.bf16.xpose.msra.mxu0 0
  %3447 = vmatprep.subr.bf16.mxu0 0
  %3448 = vmatpush1.bf16.xpose.msra.mxu0 0
  %3449 = vmatprep.subr.bf16.mxu0 0
  %3450 = vmatpush1.bf16.xpose.msra.mxu0 0
  %3451 = vmatprep.subr.bf16.mxu0 0
  %3452 = vmatpush1.bf16.xpose.msra.mxu0 0
  %3453 = vmatprep.subr.bf16.mxu0 0
  %3454 = vmatpush1.bf16.xpose.msra.mxu0 0
  %3455 = vmatprep.subr.bf16.mxu0 0
  %3456 = vmatpush1.bf16.xpose.msra.mxu0 0
  %3457 = vmatprep.mubr.bf16.mxu0 0
  %3458 = vmatmul.mubr.bf16.gmra.mrb[0].mxu0 %v3420
  %v3459 = vpop.f32.mrb[0].mxu0
  %v3460 = vadd.f32 %v1344, %v3459
  %v3461 = vpop.f32.mrb[0].mxu0
  %v3462 = vpop.f32.mrb[0].mxu0
  %v3463 = vadd.f32 %v1345, %v3462
  %v3464 = vpop.f32.mrb[0].mxu0
  %3465 = vmatprep.mubr.bf16.mxu0 0
  %3466 = vmatmul.mubr.bf16.gmra.mrb[0].mxu0 %v3423
  %v3467 = vpop.f32.mrb[0].mxu0
  %v3468 = vadd.f32 %v1346, %v3467
  %v3469 = vpop.f32.mrb[0].mxu0
  %v3470 = vpop.f32.mrb[0].mxu0
  %v3471 = vpop.f32.mrb[0].mxu0
  %3472 = vdwg.mxu0
  %v3473 = vsel %vm2107, %v3298, -inf
  %3474 = vmax.xlane.f32.xlu0 %v3473
  %v3475 = vpop.xlane.xlu0 %3474
  %v3476 = vsel %vm2107, %v3301, -inf
  %3477 = vmax.xlane.f32.xlu0 %v3476
  %v3478 = vpop.xlane.xlu0 %3477
  %v3479 = vsel %vm2114, %v3306, -inf
  %3480 = vmax.xlane.f32.xlu0 %v3479
  %v3481 = vpop.xlane.xlu0 %3480
  %v3482 = vsel %vm2107, %v3352, -inf
  %3483 = vmax.xlane.f32.xlu0 %v3482
  %v3484 = vpop.xlane.xlu0 %3483
  %v3485 = vsel %vm2107, %v3355, -inf
  %3486 = vmax.xlane.f32.xlu0 %v3485
  %v3487 = vpop.xlane.xlu0 %3486
  %v3488 = vsel %vm2114, %v3360, -inf
  %3489 = vmax.xlane.f32.xlu0 %v3488
  %v3490 = vpop.xlane.xlu0 %3489
  %v3491 = vsel %vm2107, %v3406, -inf
  %3492 = vmax.xlane.f32.xlu0 %v3491
  %v3493 = vpop.xlane.xlu0 %3492
  %v3494 = vsel %vm2107, %v3409, -inf
  %3495 = vmax.xlane.f32.xlu0 %v3494
  %v3496 = vpop.xlane.xlu0 %3495
  %v3497 = vsel %vm2114, %v3414, -inf
  %3498 = vmax.xlane.f32.xlu0 %v3497
  %v3499 = vpop.xlane.xlu0 %3498
  %v3500 = vsel %vm2107, %v3460, -inf
  %3501 = vmax.xlane.f32.xlu0 %v3500
  %v3502 = vpop.xlane.xlu0 %3501
  %v3503 = vsel %vm2107, %v3463, -inf
  %3504 = vmax.xlane.f32.xlu0 %v3503
  %v3505 = vpop.xlane.xlu0 %3504
  %v3506 = vsel %vm2114, %v3468, -inf
  %3507 = vmax.xlane.f32.xlu0 %v3506
  %v3508 = vpop.xlane.xlu0 %3507
  %v3509 = vsub.f32 %v3298, %v3475
  %v3510 = vsub.f32 %v3301, %v3478
  %v3511 = vsub.f32 %v3306, %v3481
  %v3512 = vsub.f32 %v3352, %v3484
  %v3513 = vsub.f32 %v3355, %v3487
  %v3514 = vsub.f32 %v3360, %v3490
  %v3515 = vsub.f32 %v3406, %v3493
  %v3516 = vsub.f32 %v3409, %v3496
  %v3517 = vsub.f32 %v3414, %v3499
  %v3518 = vsub.f32 %v3460, %v3502
  %v3519 = vsub.f32 %v3463, %v3505
  %v3520 = vsub.f32 %v3468, %v3508
  %v3521 = vmul.f32 %v3509, 1.442695
  %v3522 = vpow.pop %v3521
  %v3523 = vmul.f32 %v3510, 1.442695
  %v3524 = vpow.pop %v3523
  %v3525 = vmul.f32 %v3511, 1.442695
  %v3526 = vpow.pop %v3525
  %v3527 = vmul.f32 %v3512, 1.442695
  %v3528 = vpow.pop %v3527
  %v3529 = vmul.f32 %v3513, 1.442695
  %v3530 = vpow.pop %v3529
  %v3531 = vmul.f32 %v3514, 1.442695
  %v3532 = vpow.pop %v3531
  %v3533 = vmul.f32 %v3515, 1.442695
  %v3534 = vpow.pop %v3533
  %v3535 = vmul.f32 %v3516, 1.442695
  %v3536 = vpow.pop %v3535
  %v3537 = vmul.f32 %v3517, 1.442695
  %v3538 = vpow.pop %v3537
  %v3539 = vmul.f32 %v3518, 1.442695
  %v3540 = vpow.pop %v3539
  %v3541 = vmul.f32 %v3519, 1.442695
  %v3542 = vpow.pop %v3541
  %v3543 = vmul.f32 %v3520, 1.442695
  %v3544 = vpow.pop %v3543
  %v3545 = vsel %vm2107, %v3522, 0.0
  %3546 = vadd.xlane.f32.xlu0 %v3545
  %v3547 = vpop.xlane.xlu0 %3546
  %v3548 = vsel %vm2107, %v3524, 0.0
  %3549 = vadd.xlane.f32.xlu0 %v3548
  %v3550 = vpop.xlane.xlu0 %3549
  %v3551 = vsel %vm2114, %v3526, 0.0
  %3552 = vadd.xlane.f32.xlu0 %v3551
  %v3553 = vpop.xlane.xlu0 %3552
  %v3554 = vsel %vm2107, %v3528, 0.0
  %3555 = vadd.xlane.f32.xlu0 %v3554
  %v3556 = vpop.xlane.xlu0 %3555
  %v3557 = vsel %vm2107, %v3530, 0.0
  %3558 = vadd.xlane.f32.xlu0 %v3557
  %v3559 = vpop.xlane.xlu0 %3558
  %v3560 = vsel %vm2114, %v3532, 0.0
  %3561 = vadd.xlane.f32.xlu0 %v3560
  %v3562 = vpop.xlane.xlu0 %3561
  %v3563 = vsel %vm2107, %v3534, 0.0
  %3564 = vadd.xlane.f32.xlu0 %v3563
  %v3565 = vpop.xlane.xlu0 %3564
  %v3566 = vsel %vm2107, %v3536, 0.0
  %3567 = vadd.xlane.f32.xlu0 %v3566
  %v3568 = vpop.xlane.xlu0 %3567
  %v3569 = vsel %vm2114, %v3538, 0.0
  %3570 = vadd.xlane.f32.xlu0 %v3569
  %v3571 = vpop.xlane.xlu0 %3570
  %v3572 = vsel %vm2107, %v3540, 0.0
  %3573 = vadd.xlane.f32.xlu0 %v3572
  %v3574 = vpop.xlane.xlu0 %3573
  %v3575 = vsel %vm2107, %v3542, 0.0
  %3576 = vadd.xlane.f32.xlu0 %v3575
  %v3577 = vpop.xlane.xlu0 %3576
  %v3578 = vsel %vm2114, %v3544, 0.0
  %3579 = vadd.xlane.f32.xlu0 %v3578
  %v3580 = vpop.xlane.xlu0 %3579
  %v3581 = vrcp.pop %v3547
  %v3582 = vrcp.pop %v3550
  %v3583 = vrcp.pop %v3553
  %v3584 = vrcp.pop %v3556
  %v3585 = vrcp.pop %v3559
  %v3586 = vrcp.pop %v3562
  %v3587 = vrcp.pop %v3565
  %v3588 = vrcp.pop %v3568
  %v3589 = vrcp.pop %v3571
  %v3590 = vrcp.pop %v3574
  %v3591 = vrcp.pop %v3577
  %v3592 = vrcp.pop %v3580
  %v3593 = vmul.f32 %v3522, %v3581
  %v3594 = vmul.f32 %v3524, %v3582
  %v3595 = vmul.f32 %v3526, %v3583
  %v3596 = vmul.f32 %v3528, %v3584
  %v3597 = vmul.f32 %v3530, %v3585
  %v3598 = vmul.f32 %v3532, %v3586
  %v3599 = vmul.f32 %v3534, %v3587
  %v3600 = vmul.f32 %v3536, %v3588
  %v3601 = vmul.f32 %v3538, %v3589
  %v3602 = vmul.f32 %v3540, %v3590
  %v3603 = vmul.f32 %v3542, %v3591
  %v3604 = vmul.f32 %v3544, %v3592
  %v3605 = vmul.f32 %v3198, %v1846
  %v3606 = vmul.f32 %v3201, %v1846
  %v3607 = vmul.f32 %v3206, %v1846
  %v3608 = vmul.f32 %v3198, %v1850
  %v3609 = vmul.f32 %v3201, %v1850
  %v3610 = vmul.f32 %v3206, %v1850
  %v3611 = vmul.f32 %v3198, %v1854
  %v3612 = vmul.f32 %v3201, %v1854
  %v3613 = vmul.f32 %v3206, %v1854
  %v3614 = vmul.f32 %v3198, %v1858
  %v3615 = vmul.f32 %v3201, %v1858
  %v3616 = vmul.f32 %v3206, %v1858
  %v3617 = vpack.c.bf16 %v3606, %v3605
  %v3618 = vpack.c.bf16 %v3607, %v3607
  %v3619 = vpack.c.bf16 %v3609, %v3608
  %v3620 = vpack.c.bf16 %v3610, %v3610
  %v3621 = vpack.c.bf16 %v3612, %v3611
  %v3622 = vpack.c.bf16 %v3613, %v3613
  %v3623 = vpack.c.bf16 %v3615, %v3614
  %v3624 = vpack.c.bf16 %v3616, %v3616
  %v3625 = vpack.c.bf16 %v3594, %v3593
  %v3626 = vpack.c.bf16 %v3595, %v3595
  %v3627 = vpack.c.bf16 %v3597, %v3596
  %v3628 = vpack.c.bf16 %v3598, %v3598
  %v3629 = vpack.c.bf16 %v3600, %v3599
  %v3630 = vpack.c.bf16 %v3601, %v3601
  %v3631 = vpack.c.bf16 %v3603, %v3602
  %v3632 = vpack.c.bf16 %v3604, %v3604
  %v3634 = vsel %vm2107, %v3625, 0
  %v3637 = vsel %vm2107, %v3626, 0
  %v3640 = vsel %vm2275, %v3618, 0
  %3642 = vmatprep.subr.bf16.mxu0 0
  %3643 = vmatpush1.bf16.msra.mxu0 %v3617
  %3644 = vmatprep.subr.bf16.mxu0 0
  %3645 = vmatpush1.bf16.msra.mxu0 %v3640
  %3646 = vmatprep.subr.bf16.mxu0 0
  %3647 = vmatpush1.bf16.msra.mxu0 0
  %3648 = vmatprep.subr.bf16.mxu0 0
  %3649 = vmatpush1.bf16.msra.mxu0 0
  %3650 = vmatprep.subr.bf16.mxu0 0
  %3651 = vmatpush1.bf16.msra.mxu0 0
  %3652 = vmatprep.subr.bf16.mxu0 0
  %3653 = vmatpush1.bf16.msra.mxu0 0
  %3654 = vmatprep.subr.bf16.mxu0 0
  %3655 = vmatpush1.bf16.msra.mxu0 0
  %3656 = vmatprep.subr.bf16.mxu0 0
  %3657 = vmatpush1.bf16.msra.mxu0 0
  %3658 = vmatprep.subr.bf16.mxu0 0
  %3659 = vmatpush1.bf16.msra.mxu0 0
  %3660 = vmatprep.subr.bf16.mxu0 0
  %3661 = vmatpush1.bf16.msra.mxu0 0
  %3662 = vmatprep.subr.bf16.mxu0 0
  %3663 = vmatpush1.bf16.msra.mxu0 0
  %3664 = vmatprep.subr.bf16.mxu0 0
  %3665 = vmatpush1.bf16.msra.mxu0 0
  %3666 = vmatprep.subr.bf16.mxu0 0
  %3667 = vmatpush1.bf16.msra.mxu0 0
  %3668 = vmatprep.subr.bf16.mxu0 0
  %3669 = vmatpush1.bf16.msra.mxu0 0
  %3670 = vmatprep.subr.bf16.mxu0 0
  %3671 = vmatpush1.bf16.msra.mxu0 0
  %3672 = vmatprep.subr.bf16.mxu0 0
  %3673 = vmatpush1.bf16.msra.mxu0 0
  %3674 = vmatprep.mubr.bf16.mxu0 0
  %3675 = vmatmul.mubr.bf16.gmra.mrb[0].mxu0 %v3634
  %v3676 = vpop.f32.mrb[0].mxu0
  %v3677 = vadd.f32 0.0, %v3676
  %v3678 = vpop.f32.mrb[0].mxu0
  %v3679 = vpop.f32.mrb[0].mxu0
  %v3680 = vadd.f32 0.0, %v3679
  %v3681 = vpop.f32.mrb[0].mxu0
  %3682 = vmatprep.mubr.bf16.mxu0 0
  %3683 = vmatmul.mubr.bf16.gmra.mrb[0].mxu0 %v3637
  %v3684 = vpop.f32.mrb[0].mxu0
  %v3685 = vadd.f32 0.0, %v3684
  %v3686 = vpop.f32.mrb[0].mxu0
  %v3687 = vpop.f32.mrb[0].mxu0
  %v3688 = vpop.f32.mrb[0].mxu0
  %3689 = vdwg.mxu0
  %v3691 = vsel %vm2107, %v3627, 0
  %v3694 = vsel %vm2107, %v3628, 0
  %v3697 = vsel %vm2275, %v3620, 0
  %3699 = vmatprep.subr.bf16.mxu0 0
  %3700 = vmatpush1.bf16.msra.mxu0 %v3619
  %3701 = vmatprep.subr.bf16.mxu0 0
  %3702 = vmatpush1.bf16.msra.mxu0 %v3697
  %3703 = vmatprep.subr.bf16.mxu0 0
  %3704 = vmatpush1.bf16.msra.mxu0 0
  %3705 = vmatprep.subr.bf16.mxu0 0
  %3706 = vmatpush1.bf16.msra.mxu0 0
  %3707 = vmatprep.subr.bf16.mxu0 0
  %3708 = vmatpush1.bf16.msra.mxu0 0
  %3709 = vmatprep.subr.bf16.mxu0 0
  %3710 = vmatpush1.bf16.msra.mxu0 0
  %3711 = vmatprep.subr.bf16.mxu0 0
  %3712 = vmatpush1.bf16.msra.mxu0 0
  %3713 = vmatprep.subr.bf16.mxu0 0
  %3714 = vmatpush1.bf16.msra.mxu0 0
  %3715 = vmatprep.subr.bf16.mxu0 0
  %3716 = vmatpush1.bf16.msra.mxu0 0
  %3717 = vmatprep.subr.bf16.mxu0 0
  %3718 = vmatpush1.bf16.msra.mxu0 0
  %3719 = vmatprep.subr.bf16.mxu0 0
  %3720 = vmatpush1.bf16.msra.mxu0 0
  %3721 = vmatprep.subr.bf16.mxu0 0
  %3722 = vmatpush1.bf16.msra.mxu0 0
  %3723 = vmatprep.subr.bf16.mxu0 0
  %3724 = vmatpush1.bf16.msra.mxu0 0
  %3725 = vmatprep.subr.bf16.mxu0 0
  %3726 = vmatpush1.bf16.msra.mxu0 0
  %3727 = vmatprep.subr.bf16.mxu0 0
  %3728 = vmatpush1.bf16.msra.mxu0 0
  %3729 = vmatprep.subr.bf16.mxu0 0
  %3730 = vmatpush1.bf16.msra.mxu0 0
  %3731 = vmatprep.mubr.bf16.mxu0 0
  %3732 = vmatmul.mubr.bf16.gmra.mrb[0].mxu0 %v3691
  %v3733 = vpop.f32.mrb[0].mxu0
  %v3734 = vadd.f32 0.0, %v3733
  %v3735 = vpop.f32.mrb[0].mxu0
  %v3736 = vpop.f32.mrb[0].mxu0
  %v3737 = vadd.f32 0.0, %v3736
  %v3738 = vpop.f32.mrb[0].mxu0
  %3739 = vmatprep.mubr.bf16.mxu0 0
  %3740 = vmatmul.mubr.bf16.gmra.mrb[0].mxu0 %v3694
  %v3741 = vpop.f32.mrb[0].mxu0
  %v3742 = vadd.f32 0.0, %v3741
  %v3743 = vpop.f32.mrb[0].mxu0
  %v3744 = vpop.f32.mrb[0].mxu0
  %v3745 = vpop.f32.mrb[0].mxu0
  %3746 = vdwg.mxu0
  %v3748 = vsel %vm2107, %v3629, 0
  %v3751 = vsel %vm2107, %v3630, 0
  %v3754 = vsel %vm2275, %v3622, 0
  %3756 = vmatprep.subr.bf16.mxu0 0
  %3757 = vmatpush1.bf16.msra.mxu0 %v3621
  %3758 = vmatprep.subr.bf16.mxu0 0
  %3759 = vmatpush1.bf16.msra.mxu0 %v3754
  %3760 = vmatprep.subr.bf16.mxu0 0
  %3761 = vmatpush1.bf16.msra.mxu0 0
  %3762 = vmatprep.subr.bf16.mxu0 0
  %3763 = vmatpush1.bf16.msra.mxu0 0
  %3764 = vmatprep.subr.bf16.mxu0 0
  %3765 = vmatpush1.bf16.msra.mxu0 0
  %3766 = vmatprep.subr.bf16.mxu0 0
  %3767 = vmatpush1.bf16.msra.mxu0 0
  %3768 = vmatprep.subr.bf16.mxu0 0
  %3769 = vmatpush1.bf16.msra.mxu0 0
  %3770 = vmatprep.subr.bf16.mxu0 0
  %3771 = vmatpush1.bf16.msra.mxu0 0
  %3772 = vmatprep.subr.bf16.mxu0 0
  %3773 = vmatpush1.bf16.msra.mxu0 0
  %3774 = vmatprep.subr.bf16.mxu0 0
  %3775 = vmatpush1.bf16.msra.mxu0 0
  %3776 = vmatprep.subr.bf16.mxu0 0
  %3777 = vmatpush1.bf16.msra.mxu0 0
  %3778 = vmatprep.subr.bf16.mxu0 0
  %3779 = vmatpush1.bf16.msra.mxu0 0
  %3780 = vmatprep.subr.bf16.mxu0 0
  %3781 = vmatpush1.bf16.msra.mxu0 0
  %3782 = vmatprep.subr.bf16.mxu0 0
  %3783 = vmatpush1.bf16.msra.mxu0 0
  %3784 = vmatprep.subr.bf16.mxu0 0
  %3785 = vmatpush1.bf16.msra.mxu0 0
  %3786 = vmatprep.subr.bf16.mxu0 0
  %3787 = vmatpush1.bf16.msra.mxu0 0
  %3788 = vmatprep.mubr.bf16.mxu0 0
  %3789 = vmatmul.mubr.bf16.gmra.mrb[0].mxu0 %v3748
  %v3790 = vpop.f32.mrb[0].mxu0
  %v3791 = vadd.f32 0.0, %v3790
  %v3792 = vpop.f32.mrb[0].mxu0
  %v3793 = vpop.f32.mrb[0].mxu0
  %v3794 = vadd.f32 0.0, %v3793
  %v3795 = vpop.f32.mrb[0].mxu0
  %3796 = vmatprep.mubr.bf16.mxu0 0
  %3797 = vmatmul.mubr.bf16.gmra.mrb[0].mxu0 %v3751
  %v3798 = vpop.f32.mrb[0].mxu0
  %v3799 = vadd.f32 0.0, %v3798
  %v3800 = vpop.f32.mrb[0].mxu0
  %v3801 = vpop.f32.mrb[0].mxu0
  %v3802 = vpop.f32.mrb[0].mxu0
  %3803 = vdwg.mxu0
  %v3805 = vsel %vm2107, %v3631, 0
  %v3808 = vsel %vm2107, %v3632, 0
  %v3811 = vsel %vm2275, %v3624, 0
  %3813 = vmatprep.subr.bf16.mxu0 0
  %3814 = vmatpush1.bf16.msra.mxu0 %v3623
  %3815 = vmatprep.subr.bf16.mxu0 0
  %3816 = vmatpush1.bf16.msra.mxu0 %v3811
  %3817 = vmatprep.subr.bf16.mxu0 0
  %3818 = vmatpush1.bf16.msra.mxu0 0
  %3819 = vmatprep.subr.bf16.mxu0 0
  %3820 = vmatpush1.bf16.msra.mxu0 0
  %3821 = vmatprep.subr.bf16.mxu0 0
  %3822 = vmatpush1.bf16.msra.mxu0 0
  %3823 = vmatprep.subr.bf16.mxu0 0
  %3824 = vmatpush1.bf16.msra.mxu0 0
  %3825 = vmatprep.subr.bf16.mxu0 0
  %3826 = vmatpush1.bf16.msra.mxu0 0
  %3827 = vmatprep.subr.bf16.mxu0 0
  %3828 = vmatpush1.bf16.msra.mxu0 0
  %3829 = vmatprep.subr.bf16.mxu0 0
  %3830 = vmatpush1.bf16.msra.mxu0 0
  %3831 = vmatprep.subr.bf16.mxu0 0
  %3832 = vmatpush1.bf16.msra.mxu0 0
  %3833 = vmatprep.subr.bf16.mxu0 0
  %3834 = vmatpush1.bf16.msra.mxu0 0
  %3835 = vmatprep.subr.bf16.mxu0 0
  %3836 = vmatpush1.bf16.msra.mxu0 0
  %3837 = vmatprep.subr.bf16.mxu0 0
  %3838 = vmatpush1.bf16.msra.mxu0 0
  %3839 = vmatprep.subr.bf16.mxu0 0
  %3840 = vmatpush1.bf16.msra.mxu0 0
  %3841 = vmatprep.subr.bf16.mxu0 0
  %3842 = vmatpush1.bf16.msra.mxu0 0
  %3843 = vmatprep.subr.bf16.mxu0 0
  %3844 = vmatpush1.bf16.msra.mxu0 0
  %3845 = vmatprep.mubr.bf16.mxu0 0
  %3846 = vmatmul.mubr.bf16.gmra.mrb[0].mxu0 %v3805
  %v3847 = vpop.f32.mrb[0].mxu0
  %v3848 = vadd.f32 0.0, %v3847
  %v3849 = vpop.f32.mrb[0].mxu0
  %v3850 = vpop.f32.mrb[0].mxu0
  %v3851 = vadd.f32 0.0, %v3850
  %v3852 = vpop.f32.mrb[0].mxu0
  %3853 = vmatprep.mubr.bf16.mxu0 0
  %3854 = vmatmul.mubr.bf16.gmra.mrb[0].mxu0 %v3808
  %v3855 = vpop.f32.mrb[0].mxu0
  %v3856 = vadd.f32 0.0, %v3855
  %v3857 = vpop.f32.mrb[0].mxu0
  %v3858 = vpop.f32.mrb[0].mxu0
  %v3859 = vpop.f32.mrb[0].mxu0
  %3860 = vdwg.mxu0
  %v3861 = vsel %vm1482, %v3677, 0.0
  %v3862 = vsel %vm1482, %v3734, 0.0
  %v3863 = vadd.f32 %v3861, %v3862
  %v3864 = vsel %vm1482, %v3791, 0.0
  %v3865 = vadd.f32 %v3863, %v3864
  %v3866 = vsel %vm1482, %v3848, 0.0
  %v3867 = vadd.f32 %v3865, %v3866
  %v3868 = vsel %vm1482, %v3680, 0.0
  %v3869 = vsel %vm1482, %v3737, 0.0
  %v3870 = vadd.f32 %v3868, %v3869
  %v3871 = vsel %vm1482, %v3794, 0.0
  %v3872 = vadd.f32 %v3870, %v3871
  %v3873 = vsel %vm1482, %v3851, 0.0
  %v3874 = vadd.f32 %v3872, %v3873
  %v3875 = vsel %vm1489, %v3685, 0.0
  %v3876 = vsel %vm1489, %v3742, 0.0
  %v3877 = vadd.f32 %v3875, %v3876
  %v3878 = vsel %vm1489, %v3799, 0.0
  %v3879 = vadd.f32 %v3877, %v3878
  %v3880 = vsel %vm1489, %v3856, 0.0
  %v3881 = vadd.f32 %v3879, %v3880
  %v3882 = vpack.c.bf16 %v3874, %v3867
  %v3883 = vpack.c.bf16 %v3881, %v3881
  %v3888 = vunpack.c.l.b16 %v2866
  %v3889 = vunpack.c.l.b16 %v2867
  %v3890 = vunpack.c.l.b16 %v2868
  %v3891 = vunpack.c.l.b16 %v2869
  %v3892 = vpack.c.b16 %v3889, %v3888
  %v3893 = vpack.c.b16 %v3891, %v3890
  %v3897 = vsel %vm1482, %v3882, 0
  %v3900 = vsel %vm1482, %v3883, 0
  %3902 = vmatprep.subr.bf16.mxu0 0
  %3903 = vmatpush1.bf16.msra.mxu0 %v3892
  %3904 = vmatprep.subr.bf16.mxu0 0
  %3905 = vmatpush1.bf16.msra.mxu0 %v3893
  %3906 = vmatprep.subr.bf16.mxu0 0
  %3907 = vmatpush1.bf16.msra.mxu0 0
  %3908 = vmatprep.subr.bf16.mxu0 0
  %3909 = vmatpush1.bf16.msra.mxu0 0
  %3910 = vmatprep.subr.bf16.mxu0 0
  %3911 = vmatpush1.bf16.msra.mxu0 0
  %3912 = vmatprep.subr.bf16.mxu0 0
  %3913 = vmatpush1.bf16.msra.mxu0 0
  %3914 = vmatprep.subr.bf16.mxu0 0
  %3915 = vmatpush1.bf16.msra.mxu0 0
  %3916 = vmatprep.subr.bf16.mxu0 0
  %3917 = vmatpush1.bf16.msra.mxu0 0
  %3918 = vmatprep.subr.bf16.mxu0 0
  %3919 = vmatpush1.bf16.msra.mxu0 0
  %3920 = vmatprep.subr.bf16.mxu0 0
  %3921 = vmatpush1.bf16.msra.mxu0 0
  %3922 = vmatprep.subr.bf16.mxu0 0
  %3923 = vmatpush1.bf16.msra.mxu0 0
  %3924 = vmatprep.subr.bf16.mxu0 0
  %3925 = vmatpush1.bf16.msra.mxu0 0
  %3926 = vmatprep.subr.bf16.mxu0 0
  %3927 = vmatpush1.bf16.msra.mxu0 0
  %3928 = vmatprep.subr.bf16.mxu0 0
  %3929 = vmatpush1.bf16.msra.mxu0 0
  %3930 = vmatprep.subr.bf16.mxu0 0
  %3931 = vmatpush1.bf16.msra.mxu0 0
  %3932 = vmatprep.subr.bf16.mxu0 0
  %3933 = vmatpush1.bf16.msra.mxu0 0
  %3934 = vmatprep.mubr.bf16.mxu0 0
  %3935 = vmatmul.mubr.bf16.gmra.mrb[0].mxu0 %v3897
  %v3936 = vpop.f32.mrb[0].mxu0
  %v3937 = vadd.f32 0.0, %v3936
  %v3938 = vpop.f32.mrb[0].mxu0
  %v3939 = vpop.f32.mrb[0].mxu0
  %v3940 = vadd.f32 0.0, %v3939
  %v3941 = vpop.f32.mrb[0].mxu0
  %3942 = vmatprep.mubr.bf16.mxu0 0
  %3943 = vmatmul.mubr.bf16.gmra.mrb[0].mxu0 %v3900
  %v3944 = vpop.f32.mrb[0].mxu0
  %v3945 = vadd.f32 0.0, %v3944
  %v3946 = vpop.f32.mrb[0].mxu0
  %v3947 = vpop.f32.mrb[0].mxu0
  %v3948 = vpop.f32.mrb[0].mxu0
  %3949 = vdwg.mxu0
  %v3950 = vadd.f32 %v2842, %v3937
  %v3951 = vadd.f32 %v2843, %v3940
  %v3952 = vadd.f32 %v2844, %v3945
  %v3953 = vmul.f32 %v3950, %v3950
  %v3954 = vmul.f32 %v3951, %v3951
  %v3955 = vmul.f32 %v3952, %v3952
  %v3956 = vsel %vm1482, %v3953, 0.0
  %3957 = vadd.xlane.f32.xlu0 %v3956
  %v3958 = vpop.xlane.xlu0 %3957
  %v3959 = vsel %vm1482, %v3954, 0.0
  %3960 = vadd.xlane.f32.xlu0 %v3959
  %v3961 = vpop.xlane.xlu0 %3960
  %v3962 = vsel %vm1489, %v3955, 0.0
  %3963 = vadd.xlane.f32.xlu0 %v3962
  %v3964 = vpop.xlane.xlu0 %3963
  %v3965 = vmul.f32 %v3958, %v1493
  %v3966 = vmul.f32 %v3961, %v1493
  %v3967 = vmul.f32 %v3964, %v1493
  %v3968 = vadd.f32 %v3965, 1e-06
  %v3969 = vadd.f32 %v3966, 1e-06
  %v3970 = vadd.f32 %v3967, 1e-06
  %v3971 = vrsqrt.pop %v3968
  %v3972 = vrsqrt.pop %v3969
  %v3973 = vrsqrt.pop %v3970
  %v3974 = vmul.f32 %v3950, %v3971
  %v3975 = vmul.f32 %v3951, %v3972
  %v3976 = vmul.f32 %v3952, %v3973
  %v3977 = vlaneseq
  %v3978 = vshrl.u32 %v3977, 7
  %v3979 = vsub.s32 1, %v3978
  %v3980 = vrot.slane %v2871, %v3979
  %v3981 = vmul.f32 %v3974, %v3980
  %v3982 = vmul.f32 %v3975, %v3980
  %v3983 = vmul.f32 %v3976, %v3980
  %v3984 = vpack.c.bf16 %v3982, %v3981
  %v3985 = vpack.c.bf16 %v3983, %v3983
  %s3986 = scalar_lea.vmem %s20, 32
  %v3987 = vld [vmem:[%s3986] sm:$0xff]
  %v3988 = vld [vmem:[%s3986 + $0x8] sm:$0xff]
  %v3989 = vld [vmem:[%s3986 + $0x10] sm:$0xff]
  %v3990 = vld [vmem:[%s3986 + $0x18] sm:$0xff]
  %v3995 = vunpack.c.l.b16 %v3987
  %v3996 = vunpack.c.h.b16 %v3987
  %v3997 = vunpack.c.l.b16 %v3988
  %v3998 = vunpack.c.h.b16 %v3988
  %v3999 = vunpack.c.l.b16 %v3989
  %v4000 = vunpack.c.h.b16 %v3989
  %v4001 = vunpack.c.l.b16 %v3990
  %v4002 = vunpack.c.h.b16 %v3990
  %v4003 = vpack.c.b16 %v3997, %v3995
  %v4004 = vpack.c.b16 %v3998, %v3996
  %v4005 = vpack.c.b16 %v4001, %v3999
  %v4006 = vpack.c.b16 %v4002, %v4000
  %v4012 = vsel %vm1482, %v3984, 0
  %v4015 = vsel %vm1482, %v3985, 0
  %4017 = vmatprep.subr.bf16.mxu0 %v4004
  %4018 = vmatpush1.bf16.msra.mxu0 %v4003
  %4019 = vmatprep.subr.bf16.mxu0 %v4006
  %4020 = vmatpush1.bf16.msra.mxu0 %v4005
  %4021 = vmatprep.subr.bf16.mxu0 0
  %4022 = vmatpush1.bf16.msra.mxu0 0
  %4023 = vmatprep.subr.bf16.mxu0 0
  %4024 = vmatpush1.bf16.msra.mxu0 0
  %4025 = vmatprep.subr.bf16.mxu0 0
  %4026 = vmatpush1.bf16.msra.mxu0 0
  %4027 = vmatprep.subr.bf16.mxu0 0
  %4028 = vmatpush1.bf16.msra.mxu0 0
  %4029 = vmatprep.subr.bf16.mxu0 0
  %4030 = vmatpush1.bf16.msra.mxu0 0
  %4031 = vmatprep.subr.bf16.mxu0 0
  %4032 = vmatpush1.bf16.msra.mxu0 0
  %4033 = vmatprep.subr.bf16.mxu0 0
  %4034 = vmatpush1.bf16.msra.mxu0 0
  %4035 = vmatprep.subr.bf16.mxu0 0
  %4036 = vmatpush1.bf16.msra.mxu0 0
  %4037 = vmatprep.subr.bf16.mxu0 0
  %4038 = vmatpush1.bf16.msra.mxu0 0
  %4039 = vmatprep.subr.bf16.mxu0 0
  %4040 = vmatpush1.bf16.msra.mxu0 0
  %4041 = vmatprep.subr.bf16.mxu0 0
  %4042 = vmatpush1.bf16.msra.mxu0 0
  %4043 = vmatprep.subr.bf16.mxu0 0
  %4044 = vmatpush1.bf16.msra.mxu0 0
  %4045 = vmatprep.subr.bf16.mxu0 0
  %4046 = vmatpush1.bf16.msra.mxu0 0
  %4047 = vmatprep.subr.bf16.mxu0 0
  %4048 = vmatpush1.bf16.msra.mxu0 0
  %4049 = vmatprep.mubr.bf16.mxu0 0
  %4050 = vmatmul.mubr.bf16.gmra.mrb[0].mxu0 %v4012
  %v4051 = vpop.f32.mrb[0].mxu0
  %v4052 = vadd.f32 0.0, %v4051
  %v4053 = vpop.f32.mrb[0].mxu0
  %v4054 = vadd.f32 0.0, %v4053
  %v4055 = vpop.f32.mrb[0].mxu0
  %v4056 = vadd.f32 0.0, %v4055
  %v4057 = vpop.f32.mrb[0].mxu0
  %v4058 = vadd.f32 0.0, %v4057
  %4059 = vmatprep.mubr.bf16.mxu0 0
  %4060 = vmatmul.mubr.bf16.gmra.mrb[0].mxu0 %v4015
  %v4061 = vpop.f32.mrb[0].mxu0
  %v4062 = vadd.f32 0.0, %v4061
  %v4063 = vpop.f32.mrb[0].mxu0
  %v4064 = vadd.f32 0.0, %v4063
  %v4065 = vpop.f32.mrb[0].mxu0
  %v4066 = vpop.f32.mrb[0].mxu0
  %4067 = vdwg.mxu0
  %v4068 = vxor.u32 %v4052, 2147483648
  %v4069 = vxor.u32 %v4056, 2147483648
  %v4070 = vxor.u32 %v4062, 2147483648
  %v4071 = vmul.f32 %v4068, 1.442695
  %v4072 = vpow.pop %v4071
  %v4073 = vmul.f32 %v4069, 1.442695
  %v4074 = vpow.pop %v4073
  %v4075 = vmul.f32 %v4070, 1.442695
  %v4076 = vpow.pop %v4075
  %v4077 = vadd.f32 %v4072, 1.0
  %v4078 = vadd.f32 %v4074, 1.0
  %v4079 = vadd.f32 %v4076, 1.0
  %v4080 = vrcp.pop %v4077
  %v4081 = vmul.f32 1.0, %v4080
  %v4082 = vrcp.pop %v4078
  %v4083 = vmul.f32 1.0, %v4082
  %v4084 = vrcp.pop %v4079
  %v4085 = vmul.f32 1.0, %v4084
  %v4086 = vmul.f32 %v4052, %v4081
  %v4087 = vmul.f32 %v4056, %v4083
  %v4088 = vmul.f32 %v4062, %v4085
  %v4089 = vmul.f32 %v4086, %v4054
  %v4090 = vmul.f32 %v4087, %v4058
  %v4091 = vmul.f32 %v4088, %v4064
  %v4092 = vpack.c.bf16 %v4090, %v4089
  %v4093 = vpack.c.bf16 %v4091, %v4091
  %s4094 = scalar_lea.vmem %s21, 64
  %v4095 = vld [vmem:[%s4094] sm:$0xf]
  %v4096 = vld [vmem:[%s4094 + $0x4] sm:$0xf]
  %v4097 = vld [vmem:[%s4094 + $0x8] sm:$0xf]
  %v4098 = vld [vmem:[%s4094 + $0xc] sm:$0xf]
  %v4099 = vld [vmem:[%s4094 + $0x10] sm:$0xf]
  %v4100 = vld [vmem:[%s4094 + $0x14] sm:$0xf]
  %v4101 = vld [vmem:[%s4094 + $0x18] sm:$0xf]
  %v4102 = vld [vmem:[%s4094 + $0x1c] sm:$0xf]
  %v4103 = vld [vmem:[%s4094 + $0x20] sm:$0xf]
  %v4104 = vld [vmem:[%s4094 + $0x24] sm:$0xf]
  %v4105 = vld [vmem:[%s4094 + $0x28] sm:$0xf]
  %v4106 = vld [vmem:[%s4094 + $0x2c] sm:$0xf]
  %v4107 = vld [vmem:[%s4094 + $0x30] sm:$0xf]
  %v4108 = vld [vmem:[%s4094 + $0x34] sm:$0xf]
  %v4109 = vld [vmem:[%s4094 + $0x38] sm:$0xf]
  %v4110 = vld [vmem:[%s4094 + $0x3c] sm:$0xf]
  %v4127 = vunpack.c.l.b16 %v4095
  %v4128 = vunpack.c.l.b16 %v4096
  %v4129 = vunpack.c.l.b16 %v4097
  %v4130 = vunpack.c.l.b16 %v4098
  %v4131 = vunpack.c.l.b16 %v4099
  %v4132 = vunpack.c.l.b16 %v4100
  %v4133 = vunpack.c.l.b16 %v4101
  %v4134 = vunpack.c.l.b16 %v4102
  %v4135 = vunpack.c.l.b16 %v4103
  %v4136 = vunpack.c.l.b16 %v4104
  %v4137 = vunpack.c.l.b16 %v4105
  %v4138 = vunpack.c.l.b16 %v4106
  %v4139 = vunpack.c.l.b16 %v4107
  %v4140 = vunpack.c.l.b16 %v4108
  %v4141 = vunpack.c.l.b16 %v4109
  %v4142 = vunpack.c.l.b16 %v4110
  %v4143 = vpack.c.b16 %v4128, %v4127
  %v4144 = vpack.c.b16 %v4130, %v4129
  %v4145 = vpack.c.b16 %v4132, %v4131
  %v4146 = vpack.c.b16 %v4134, %v4133
  %v4147 = vpack.c.b16 %v4136, %v4135
  %v4148 = vpack.c.b16 %v4138, %v4137
  %v4149 = vpack.c.b16 %v4140, %v4139
  %v4150 = vpack.c.b16 %v4142, %v4141
  %4159 = vmatprep.subr.bf16.mxu0 0
  %4160 = vmatpush1.bf16.msra.mxu0 %v4143
  %4161 = vmatprep.subr.bf16.mxu0 0
  %4162 = vmatpush1.bf16.msra.mxu0 %v4144
  %4163 = vmatprep.subr.bf16.mxu0 0
  %4164 = vmatpush1.bf16.msra.mxu0 %v4145
  %4165 = vmatprep.subr.bf16.mxu0 0
  %4166 = vmatpush1.bf16.msra.mxu0 %v4146
  %4167 = vmatprep.subr.bf16.mxu0 0
  %4168 = vmatpush1.bf16.msra.mxu0 %v4147
  %4169 = vmatprep.subr.bf16.mxu0 0
  %4170 = vmatpush1.bf16.msra.mxu0 %v4148
  %4171 = vmatprep.subr.bf16.mxu0 0
  %4172 = vmatpush1.bf16.msra.mxu0 %v4149
  %4173 = vmatprep.subr.bf16.mxu0 0
  %4174 = vmatpush1.bf16.msra.mxu0 %v4150
  %4175 = vmatprep.subr.bf16.mxu0 0
  %4176 = vmatpush1.bf16.msra.mxu0 0
  %4177 = vmatprep.subr.bf16.mxu0 0
  %4178 = vmatpush1.bf16.msra.mxu0 0
  %4179 = vmatprep.subr.bf16.mxu0 0
  %4180 = vmatpush1.bf16.msra.mxu0 0
  %4181 = vmatprep.subr.bf16.mxu0 0
  %4182 = vmatpush1.bf16.msra.mxu0 0
  %4183 = vmatprep.subr.bf16.mxu0 0
  %4184 = vmatpush1.bf16.msra.mxu0 0
  %4185 = vmatprep.subr.bf16.mxu0 0
  %4186 = vmatpush1.bf16.msra.mxu0 0
  %4187 = vmatprep.subr.bf16.mxu0 0
  %4188 = vmatpush1.bf16.msra.mxu0 0
  %4189 = vmatprep.subr.bf16.mxu0 0
  %4190 = vmatpush1.bf16.msra.mxu0 0
  %4191 = vmatprep.mubr.bf16.mxu0 0
  %4192 = vmatmul.mubr.bf16.gmra.mrb[0].mxu0 %v4092
  %v4193 = vpop.f32.mrb[0].mxu0
  %v4194 = vadd.f32 0.0, %v4193
  %v4195 = vpop.f32.mrb[0].mxu0
  %v4196 = vpop.f32.mrb[0].mxu0
  %v4197 = vadd.f32 0.0, %v4196
  %v4198 = vpop.f32.mrb[0].mxu0
  %4199 = vmatprep.mubr.bf16.mxu0 0
  %4200 = vmatmul.mubr.bf16.gmra.mrb[0].mxu0 %v4093
  %v4201 = vpop.f32.mrb[0].mxu0
  %v4202 = vadd.f32 0.0, %v4201
  %v4203 = vpop.f32.mrb[0].mxu0
  %v4204 = vpop.f32.mrb[0].mxu0
  %v4205 = vpop.f32.mrb[0].mxu0
  %4206 = vdwg.mxu0
  %v4207 = vadd.f32 %v3950, %v4194
  %v4208 = vadd.f32 %v3951, %v4197
  %v4209 = vadd.f32 %v3952, %v4202
  %v4210 = vpack.c.bf16 %v4208, %v4207
  %v4211 = vpack.c.bf16 %v4209, %v4209
  %v4212 = vld [vmem:[%s22] sm:$0xf]
  %v4213 = vld [vmem:[%s22 + $0x4] sm:$0xf]
  %v4214 = vld [vmem:[%s22 + $0x8] sm:$0xf]
  %v4215 = vld [vmem:[%s22 + $0xc] sm:$0xf]
  %v4220 = vunpack.c.l.b16 %v4212
  %v4221 = vunpack.c.l.b16 %v4213
  %v4222 = vunpack.c.l.b16 %v4214
  %v4223 = vunpack.c.l.b16 %v4215
  %v4224 = vpack.c.b16 %v4221, %v4220
  %v4225 = vpack.c.b16 %v4223, %v4222
  %v4229 = vsel %vm1482, %v4210, 0
  %v4232 = vsel %vm1482, %v4211, 0
  %4234 = vmatprep.subr.bf16.mxu0 0
  %4235 = vmatpush1.bf16.msra.mxu0 %v4224
  %4236 = vmatprep.subr.bf16.mxu0 0
  %4237 = vmatpush1.bf16.msra.mxu0 %v4225
  %4238 = vmatprep.subr.bf16.mxu0 0
  %4239 = vmatpush1.bf16.msra.mxu0 0
  %4240 = vmatprep.subr.bf16.mxu0 0
  %4241 = vmatpush1.bf16.msra.mxu0 0
  %4242 = vmatprep.subr.bf16.mxu0 0
  %4243 = vmatpush1.bf16.msra.mxu0 0
  %4244 = vmatprep.subr.bf16.mxu0 0
  %4245 = vmatpush1.bf16.msra.mxu0 0
  %4246 = vmatprep.subr.bf16.mxu0 0
  %4247 = vmatpush1.bf16.msra.mxu0 0
  %4248 = vmatprep.subr.bf16.mxu0 0
  %4249 = vmatpush1.bf16.msra.mxu0 0
  %4250 = vmatprep.subr.bf16.mxu0 0
  %4251 = vmatpush1.bf16.msra.mxu0 0
  %4252 = vmatprep.subr.bf16.mxu0 0
  %4253 = vmatpush1.bf16.msra.mxu0 0
  %4254 = vmatprep.subr.bf16.mxu0 0
  %4255 = vmatpush1.bf16.msra.mxu0 0
  %4256 = vmatprep.subr.bf16.mxu0 0
  %4257 = vmatpush1.bf16.msra.mxu0 0
  %4258 = vmatprep.subr.bf16.mxu0 0
  %4259 = vmatpush1.bf16.msra.mxu0 0
  %4260 = vmatprep.subr.bf16.mxu0 0
  %4261 = vmatpush1.bf16.msra.mxu0 0
  %4262 = vmatprep.subr.bf16.mxu0 0
  %4263 = vmatpush1.bf16.msra.mxu0 0
  %4264 = vmatprep.subr.bf16.mxu0 0
  %4265 = vmatpush1.bf16.msra.mxu0 0
  %4266 = vmatprep.mubr.bf16.mxu0 0
  %4267 = vmatmul.mubr.bf16.gmra.mrb[0].mxu0 %v4229
  %v4268 = vpop.f32.mrb[0].mxu0
  %v4269 = vadd.f32 0.0, %v4268
  %v4270 = vpop.f32.mrb[0].mxu0
  %v4271 = vpop.f32.mrb[0].mxu0
  %v4272 = vadd.f32 0.0, %v4271
  %v4273 = vpop.f32.mrb[0].mxu0
  %4274 = vmatprep.mubr.bf16.mxu0 0
  %4275 = vmatmul.mubr.bf16.gmra.mrb[0].mxu0 %v4232
  %v4276 = vpop.f32.mrb[0].mxu0
  %v4277 = vadd.f32 0.0, %v4276
  %v4278 = vpop.f32.mrb[0].mxu0
  %v4279 = vpop.f32.mrb[0].mxu0
  %v4280 = vpop.f32.mrb[0].mxu0
  %4281 = vdwg.mxu0
  %4282 = vst.msk [vmem:[%s23] sm:$0xff] %vm78, %v4269
  %4283 = vst.msk [vmem:[%s23 + $0x8] sm:$0xff] %vm78, %v4272
  %vm4284 = vcmask 517120
  %4285 = vst.msk [vmem:[%s23 + $0x10] sm:$0x3] %vm4284, %v4277
  %v4286 = vsel %vm78, %v4269, -inf
  %4287 = vmax.xlane.f32.xlu0 %v4286
  %v4288 = vpop.xlane.xlu0 %4287
  %v4289 = vsel %vm78, %v4272, -inf
  %4290 = vmax.xlane.f32.xlu0 %v4289
  %v4291 = vpop.xlane.xlu0 %4290
  %v4292 = vsel %vm4284, %v4277, -inf
  %4293 = vmax.xlane.f32.xlu0 %v4292
  %v4294 = vpop.xlane.xlu0 %4293
  %v4295 = vsub.f32 %v4269, %v4288
  %v4296 = vsub.f32 %v4272, %v4291
  %v4297 = vsub.f32 %v4277, %v4294
  %v4298 = vmul.f32 %v4295, 1.442695
  %v4299 = vpow.pop %v4298
  %v4300 = vmul.f32 %v4296, 1.442695
  %v4301 = vpow.pop %v4300
  %v4302 = vmul.f32 %v4297, 1.442695
  %v4303 = vpow.pop %v4302
  %v4304 = vsel %vm78, %v4299, 0.0
  %4305 = vadd.xlane.f32.xlu0 %v4304
  %v4306 = vpop.xlane.xlu0 %4305
  %v4307 = vsel %vm78, %v4301, 0.0
  %4308 = vadd.xlane.f32.xlu0 %v4307
  %v4309 = vpop.xlane.xlu0 %4308
  %v4310 = vsel %vm4284, %v4303, 0.0
  %4311 = vadd.xlane.f32.xlu0 %v4310
  %v4312 = vpop.xlane.xlu0 %4311
  %v4313 = vlog2.pop %v4306
  %v4314 = vmul.f32 %v4313, 0.6931472
  %v4315 = vlog2.pop %v4309
  %v4316 = vmul.f32 %v4315, 0.6931472
  %v4317 = vlog2.pop %v4312
  %v4318 = vmul.f32 %v4317, 0.6931472
  %v4319 = vadd.f32 %v4314, %v4288
  %v4320 = vadd.f32 %v4316, %v4291
  %v4321 = vadd.f32 %v4318, %v4294
  %v4322 = vld [vmem:[%s2] sm:$0xff]
  %v4323 = vld [vmem:[%s2 + $0x8] sm:$0xff]
  %v4324 = vld [vmem:[%s2 + $0x10] sm:$0x3]
  %v4325 = vmul.f32 %v4269, %v4322
  %v4326 = vmul.f32 %v4272, %v4323
  %v4327 = vmul.f32 %v4277, %v4324
  %v4328 = vsel %vm78, %v4325, 0.0
  %4329 = vadd.xlane.f32.xlu0 %v4328
  %v4330 = vpop.xlane.xlu0 %4329
  %v4331 = vsel %vm78, %v4326, 0.0
  %4332 = vadd.xlane.f32.xlu0 %v4331
  %v4333 = vpop.xlane.xlu0 %4332
  %v4334 = vsel %vm4284, %v4327, 0.0
  %4335 = vadd.xlane.f32.xlu0 %v4334
  %v4336 = vpop.xlane.xlu0 %4335
  %v4337 = vsel %vm78, %v4322, 0.0
  %4338 = vadd.xlane.f32.xlu0 %v4337
  %v4339 = vpop.xlane.xlu0 %4338
  %v4340 = vsel %vm78, %v4323, 0.0
  %4341 = vadd.xlane.f32.xlu0 %v4340
  %v4342 = vpop.xlane.xlu0 %4341
  %v4343 = vsel %vm4284, %v4324, 0.0
  %4344 = vadd.xlane.f32.xlu0 %v4343
  %v4345 = vpop.xlane.xlu0 %4344
  %v4346 = vmul.f32 %v4339, %v4319
  %v4347 = vmul.f32 %v4342, %v4320
  %v4348 = vmul.f32 %v4345, %v4321
  %v4349 = vsub.f32 %v4346, %v4330
  %v4350 = vsub.f32 %v4347, %v4333
  %v4351 = vsub.f32 %v4348, %v4336
  %v4352 = vadd.f32 %v4349, %v4350
  %v4353 = vsel %vm1367, %v4351, 0.0
  %v4354 = vadd.f32 %v4352, %v4353
  %v4355 = vrot.slane %v4354, 4
  %v4356 = vadd.f32 %v4354, %v4355
  %v4357 = vrot.slane %v4356, 2
  %v4358 = vadd.f32 %v4356, %v4357
  %v4359 = vrot.slane %v4358, 1
  %v4360 = vadd.f32 %v4358, %v4359
  %v4361 = vmul.f32 %v4360, 0.071428575
  %vm4362 = vcmask 516096
  %4363 = vst.msk [vmem:[%s23 + $0x12] sm:$0x1] %vm4362, %v4361
  // Predicated region
  $region94: #{memory_transformer_forward.1} parent=0 // pred_check
    _
  $region95: #{memory_transformer_forward.1} parent=0 // pred_check_branch
    %4365 = sbr.rel (0) target = $region97
  $region96: #{memory_transformer_forward.1} parent=0 // pred_region
    _
  $region97: #{memory_transformer_forward.1} parent=0 // pred_fallthru
    _
  // Predicated region
  $region98: #{memory_transformer_forward.1} parent=0 // pred_check
    _
  $region99: #{memory_transformer_forward.1} parent=0 // pred_check_branch
    %4367 = sbr.rel (0) target = $region101
  $region100: #{memory_transformer_forward.1} parent=0 // pred_region
    _
  $region101: #{memory_transformer_forward.1} parent=0 // pred_fallthru
    _

</llo_original>
